<compile_context>
chip_gen: v7x
topology: tpu7x:2x2x1
jax: 0.10.0
libtpu: 0.0.40
codegen_flags: <defaults>
</compile_context>

<pallas_src>
import math

import jax
import jax.numpy as jnp
from jax.experimental import pallas as pl
from jax.experimental.pallas import tpu as pltpu

LATENT_DIM = 100
LATENT_PAD = 128          # zero-padded K for the first matmul
IMG_SHAPE = (1, 28, 28)
IMG_FLAT = 1 * 28 * 28    # 784
IMG_FLAT_PAD = 896        # 7 * 128, lane-dense N for the last matmul

BN_EPS = 0.8
LRELU_SLOPE = 0.2

# PyTorch layer dims: (fan_in, fan_out, normalize)
TORCH_LAYER_DIMS = [
    (LATENT_DIM, 128, False),
    (128, 256, True),
    (256, 512, True),
    (512, 1024, True),
    (1024, IMG_FLAT, False),
]

# ---- packed small-parameter slab layout (all offsets are multiples of 128) --
_PARAM_SIZES = [
    ("b1", 128),
    ("b2", 256), ("g2", 256), ("bt2", 256),
    ("b3", 512), ("g3", 512), ("bt3", 512),
    ("b4", 1024), ("g4", 1024), ("bt4", 1024),
    ("b5", IMG_FLAT_PAD),
]
PARAM_OFFSETS = {}
_off = 0
for _name, _n in _PARAM_SIZES:
    PARAM_OFFSETS[_name] = _off
    _off += _n
PARAM_SLAB_LEN = _off  # 6400

_BN_LAYERS = (
    (256, "b2", "g2", "bt2"),
    (512, "b3", "g3", "bt3"),
    (1024, "b4", "g4", "bt4"),
)

_WEIGHT_SHAPES = (
    (LATENT_PAD, 128),
    (128, 256),
    (256, 512),
    (512, 1024),
    (1024, IMG_FLAT_PAD),
)


def _leaky_relu(y):
    return jnp.where(y > 0, y, LRELU_SLOPE * y)


def _bn_leaky(y, gamma, beta):
    """Train-mode BatchNorm1d (biased batch stats) folded into one scale/shift,
    followed by LeakyReLU.  One-pass stats: var = E[y^2] - mean^2 (f32)."""
    mean = jnp.mean(y, axis=0, keepdims=True)
    mean_sq = jnp.mean(y * y, axis=0, keepdims=True)
    var = mean_sq - mean * mean
    scale = gamma * jax.lax.rsqrt(var + BN_EPS)
    shift = beta - mean * scale
    y = y * scale + shift
    return _leaky_relu(y)


def _generator_kernel(z_ref, p_ref,
                      w1_hbm, w2_hbm, w3_hbm, w4_hbm, w5_hbm,
                      o_ref,
                      w1_v, w2_v, w3_v, w4_v, w5_v, sem):
    """Fully fused 5-layer MLP.  Weights streamed HBM->VMEM with manual async
    copies overlapped with compute; small params read from one packed slab."""
    weights_hbm = (w1_hbm, w2_hbm, w3_hbm, w4_hbm, w5_hbm)
    weights_vmem = (w1_v, w2_v, w3_v, w4_v, w5_v)

    # Kick off all weight DMAs immediately; wait per-layer right before use.
    copies = []
    for i, (src, dst) in enumerate(zip(weights_hbm, weights_vmem)):
        cp = pltpu.make_async_copy(src, dst, sem.at[i])
        cp.start()
        copies.append(cp)

    def param(name, n):
        return p_ref[:, pl.ds(PARAM_OFFSETS[name], n)]

    # Layer 1: Linear -> LeakyReLU (no BN).  z is bf16 (B, 128), zero-padded K.
    copies[0].wait()
    y = jnp.dot(z_ref[...], w1_v[...],
                preferred_element_type=jnp.float32) + param("b1", 128)
    y = _leaky_relu(y)

    # Layers 2-4: Linear -> BN -> LeakyReLU.
    for li, (n, bk, gk, btk) in enumerate(_BN_LAYERS):
        copies[li + 1].wait()
        w_v = weights_vmem[li + 1]
        y = jnp.dot(y.astype(jnp.bfloat16), w_v[...],
                    preferred_element_type=jnp.float32) + param(bk, n)
        y = _bn_leaky(y, param(gk, n), param(btk, n))

    # Layer 5: Linear -> Tanh (padded W/b columns are zero; dropped on store).
    copies[4].wait()
    y = jnp.dot(y.astype(jnp.bfloat16), w5_v[...],
                preferred_element_type=jnp.float32) + param("b5", IMG_FLAT_PAD)
    y = jnp.tanh(y)
    o_ref[...] = y[:, :IMG_FLAT].astype(o_ref.dtype)


def _pick_vmem_limit_bytes():
    """Generation-aware VMEM budget hint (safe on v7x's 64 MiB)."""
    cap = None
    try:
        info = pltpu.get_tpu_info()
        cap = getattr(info, "vmem_capacity_bytes", None)
    except Exception:
        cap = None
    if not cap:
        cap = 64 * 1024 * 1024  # v7x-safe fallback
    return int(min(cap * 3 // 4, 96 * 1024 * 1024))


@jax.jit
def generator_forward(z, packed):
    """z: (B, latent_dim) f32 -> img: (B, 1, 28, 28) f32 (NCHW)."""
    slab, w1, w2, w3, w4, w5 = packed
    batch = z.shape[0]
    # Zero-pad latent 100 -> 128 and cast to bf16 for the bf16 MXU path.
    z_pad = jnp.pad(z.astype(jnp.bfloat16),
                    ((0, 0), (0, LATENT_PAD - LATENT_DIM)))

    vmem = pl.BlockSpec(memory_space=pltpu.MemorySpace.VMEM)
    hbm = pl.BlockSpec(memory_space=pl.ANY)

    out = pl.pallas_call(
        _generator_kernel,
        out_shape=jax.ShapeDtypeStruct((batch, IMG_FLAT), jnp.float32),
        in_specs=[vmem, vmem, hbm, hbm, hbm, hbm, hbm],
        out_specs=vmem,
        scratch_shapes=[
            pltpu.VMEM(_WEIGHT_SHAPES[0], jnp.bfloat16),
            pltpu.VMEM(_WEIGHT_SHAPES[1], jnp.bfloat16),
            pltpu.VMEM(_WEIGHT_SHAPES[2], jnp.bfloat16),
            pltpu.VMEM(_WEIGHT_SHAPES[3], jnp.bfloat16),
            pltpu.VMEM(_WEIGHT_SHAPES[4], jnp.bfloat16),
            pltpu.SemaphoreType.DMA((5,)),
        ],
        compiler_params=pltpu.CompilerParams(
            vmem_limit_bytes=_pick_vmem_limit_bytes()),
    )(z_pad, slab, w1, w2, w3, w4, w5)

    return out.reshape(batch, *IMG_SHAPE)


def init_generator_params(key):
    """Deterministic parameter init (PyTorch layout: W is (in, out), y = xW + b)."""
    params = []
    for (fan_in, fan_out, normalize) in TORCH_LAYER_DIMS:
        key, kw, kb = jax.random.split(key, 3)
        bound = 1.0 / math.sqrt(fan_in)
        layer = {
            "w": jax.random.uniform(kw, (fan_in, fan_out), jnp.float32,
                                    -bound, bound),
            "b": jax.random.uniform(kb, (1, fan_out), jnp.float32,
                                    -bound, bound),
        }
        if normalize:
            layer["gamma"] = jnp.ones((1, fan_out), jnp.float32)
            layer["beta"] = jnp.zeros((1, fan_out), jnp.float32)
        params.append(layer)
    return params


def pack_generator_params(params):
    """Pad + cast weights to bf16 and pack all small per-feature params into
    one (1, 6400) f32 slab consumed by the fused kernel."""
    l1, l2, l3, l4, l5 = params

    # Weights (bf16).  Layer 1: pad K 100 -> 128 with zero rows (no-op on z).
    w1 = jnp.pad(l1["w"], ((0, LATENT_PAD - LATENT_DIM), (0, 0))
                 ).astype(jnp.bfloat16)
    w2 = l2["w"].astype(jnp.bfloat16)
    w3 = l3["w"].astype(jnp.bfloat16)
    w4 = l4["w"].astype(jnp.bfloat16)
    # Layer 5: pad N 784 -> 896 with zero cols (dropped inside the kernel).
    w5 = jnp.pad(l5["w"], ((0, 0), (0, IMG_FLAT_PAD - IMG_FLAT))
                 ).astype(jnp.bfloat16)

    b5_pad = jnp.pad(l5["b"], ((0, 0), (0, IMG_FLAT_PAD - IMG_FLAT)))

    pieces = {
        "b1": l1["b"],
        "b2": l2["b"], "g2": l2["gamma"], "bt2": l2["beta"],
        "b3": l3["b"], "g3": l3["gamma"], "bt3": l3["beta"],
        "b4": l4["b"], "g4": l4["gamma"], "bt4": l4["beta"],
        "b5": b5_pad,
    }
    slab = jnp.concatenate(
        [pieces[name].astype(jnp.float32) for name, _ in _PARAM_SIZES], axis=1)
    assert slab.shape == (1, PARAM_SLAB_LEN), slab.shape

    return (slab, w1, w2, w3, w4, w5)


def _reference_forward(z, packed):
    """Pure-JAX reference with identical numerics (bf16 weights, f32 epilogue,
    fused one-pass BatchNorm)."""
    slab, w1, w2, w3, w4, w5 = packed

    def param(name, n):
        off = PARAM_OFFSETS[name]
        return slab[:, off:off + n]

    x = jnp.pad(z.astype(jnp.bfloat16), ((0, 0), (0, LATENT_PAD - LATENT_DIM)))
    y = jnp.dot(x, w1, preferred_element_type=jnp.float32) + param("b1", 128)
    y = _leaky_relu(y)
    for (w, (n, bk, gk, btk)) in zip((w2, w3, w4), _BN_LAYERS):
        y = jnp.dot(y.astype(jnp.bfloat16), w,
                    preferred_element_type=jnp.float32) + param(bk, n)
        y = _bn_leaky(y, param(gk, n), param(btk, n))
    y = jnp.dot(y.astype(jnp.bfloat16), w5,
                preferred_element_type=jnp.float32) + param("b5", IMG_FLAT_PAD)
    y = jnp.tanh(y)
    return y[:, :IMG_FLAT].reshape(z.shape[0], *IMG_SHAPE)


if __name__ == "__main__":
    key = jax.random.PRNGKey(0)
    key, zkey = jax.random.split(key)

    batch = 8  # real batch; never zero-padded (train-mode BN stats must be exact)
    z = jax.random.normal(zkey, (batch, LATENT_DIM), dtype=jnp.float32)

    params = init_generator_params(key)
    packed = pack_generator_params(params)

    img = generator_forward(z, packed)
    img = jax.block_until_ready(img)

    assert img.shape == (batch, *IMG_SHAPE), img.shape
    assert img.dtype == jnp.float32
    # Tanh output must be in [-1, 1].
    assert bool(jnp.all(jnp.abs(img) <= 1.0 + 1e-6))

    # Correctness against a pure-JAX reference using the same numerics.
    ref = jax.block_until_ready(_reference_forward(z, packed))
    max_diff = float(jnp.max(jnp.abs(img - ref)))
    assert max_diff < 5e-2, f"max diff vs reference: {max_diff}"

    print("KERNEL_OK")
</pallas_src>

<mosaic_0001>
module attributes {stable_mosaic.version = 11 : i64} {
  func.func @_generator_kernel(%arg0: memref<8x128xbf16, #tpu.memory_space<vmem>>, %arg1: memref<1x6400xf32, #tpu.memory_space<vmem>>, %arg2: memref<128x128xbf16, #tpu.memory_space<any>>, %arg3: memref<128x256xbf16, #tpu.memory_space<any>>, %arg4: memref<256x512xbf16, #tpu.memory_space<any>>, %arg5: memref<512x1024xbf16, #tpu.memory_space<any>>, %arg6: memref<1024x896xbf16, #tpu.memory_space<any>>, %arg7: memref<8x784xf32, #tpu.memory_space<vmem>>, %arg8: memref<128x128xbf16, #tpu.memory_space<vmem>>, %arg9: memref<128x256xbf16, #tpu.memory_space<vmem>>, %arg10: memref<256x512xbf16, #tpu.memory_space<vmem>>, %arg11: memref<512x1024xbf16, #tpu.memory_space<vmem>>, %arg12: memref<1024x896xbf16, #tpu.memory_space<vmem>>, %arg13: memref<5x!tpu.dma_semaphore, #tpu.memory_space<semaphore_mem>>) attributes {dimension_semantics = [], scalar_prefetch = 0 : i64, scratch_operands = 6 : i64, tpu.core_type = #tpu.core_type<tc>} {
    %c0_i32 = arith.constant 0 : i32
    %0 = tpu.memref_slice %arg13[%c0_i32] : memref<5x!tpu.dma_semaphore, #tpu.memory_space<semaphore_mem>> -> memref<1x!tpu.dma_semaphore, #tpu.memory_space<semaphore_mem>>
    %1 = tpu.memref_squeeze %0 : memref<1x!tpu.dma_semaphore, #tpu.memory_space<semaphore_mem>> -> memref<!tpu.dma_semaphore, #tpu.memory_space<semaphore_mem>>
    tpu.enqueue_dma source(%arg2 : memref<128x128xbf16, #tpu.memory_space<any>>) target(%arg8 : memref<128x128xbf16, #tpu.memory_space<vmem>>) target_semaphore(%1 : memref<!tpu.dma_semaphore, #tpu.memory_space<semaphore_mem>>)
    %c1_i32 = arith.constant 1 : i32
    %2 = tpu.memref_slice %arg13[%c1_i32] : memref<5x!tpu.dma_semaphore, #tpu.memory_space<semaphore_mem>> -> memref<1x!tpu.dma_semaphore, #tpu.memory_space<semaphore_mem>>
    %3 = tpu.memref_squeeze %2 : memref<1x!tpu.dma_semaphore, #tpu.memory_space<semaphore_mem>> -> memref<!tpu.dma_semaphore, #tpu.memory_space<semaphore_mem>>
    tpu.enqueue_dma source(%arg3 : memref<128x256xbf16, #tpu.memory_space<any>>) target(%arg9 : memref<128x256xbf16, #tpu.memory_space<vmem>>) target_semaphore(%3 : memref<!tpu.dma_semaphore, #tpu.memory_space<semaphore_mem>>)
    %c2_i32 = arith.constant 2 : i32
    %4 = tpu.memref_slice %arg13[%c2_i32] : memref<5x!tpu.dma_semaphore, #tpu.memory_space<semaphore_mem>> -> memref<1x!tpu.dma_semaphore, #tpu.memory_space<semaphore_mem>>
    %5 = tpu.memref_squeeze %4 : memref<1x!tpu.dma_semaphore, #tpu.memory_space<semaphore_mem>> -> memref<!tpu.dma_semaphore, #tpu.memory_space<semaphore_mem>>
    tpu.enqueue_dma source(%arg4 : memref<256x512xbf16, #tpu.memory_space<any>>) target(%arg10 : memref<256x512xbf16, #tpu.memory_space<vmem>>) target_semaphore(%5 : memref<!tpu.dma_semaphore, #tpu.memory_space<semaphore_mem>>)
    %c3_i32 = arith.constant 3 : i32
    %6 = tpu.memref_slice %arg13[%c3_i32] : memref<5x!tpu.dma_semaphore, #tpu.memory_space<semaphore_mem>> -> memref<1x!tpu.dma_semaphore, #tpu.memory_space<semaphore_mem>>
    %7 = tpu.memref_squeeze %6 : memref<1x!tpu.dma_semaphore, #tpu.memory_space<semaphore_mem>> -> memref<!tpu.dma_semaphore, #tpu.memory_space<semaphore_mem>>
    tpu.enqueue_dma source(%arg5 : memref<512x1024xbf16, #tpu.memory_space<any>>) target(%arg11 : memref<512x1024xbf16, #tpu.memory_space<vmem>>) target_semaphore(%7 : memref<!tpu.dma_semaphore, #tpu.memory_space<semaphore_mem>>)
    %c4_i32 = arith.constant 4 : i32
    %8 = tpu.memref_slice %arg13[%c4_i32] : memref<5x!tpu.dma_semaphore, #tpu.memory_space<semaphore_mem>> -> memref<1x!tpu.dma_semaphore, #tpu.memory_space<semaphore_mem>>
    %9 = tpu.memref_squeeze %8 : memref<1x!tpu.dma_semaphore, #tpu.memory_space<semaphore_mem>> -> memref<!tpu.dma_semaphore, #tpu.memory_space<semaphore_mem>>
    tpu.enqueue_dma source(%arg6 : memref<1024x896xbf16, #tpu.memory_space<any>>) target(%arg12 : memref<1024x896xbf16, #tpu.memory_space<vmem>>) target_semaphore(%9 : memref<!tpu.dma_semaphore, #tpu.memory_space<semaphore_mem>>)
    %c0_i32_0 = arith.constant 0 : i32
    %10 = tpu.memref_slice %arg13[%c0_i32_0] : memref<5x!tpu.dma_semaphore, #tpu.memory_space<semaphore_mem>> -> memref<1x!tpu.dma_semaphore, #tpu.memory_space<semaphore_mem>>
    %11 = tpu.memref_squeeze %10 : memref<1x!tpu.dma_semaphore, #tpu.memory_space<semaphore_mem>> -> memref<!tpu.dma_semaphore, #tpu.memory_space<semaphore_mem>>
    tpu.wait_dma2 semaphore(%11 : memref<!tpu.dma_semaphore, #tpu.memory_space<semaphore_mem>>) src(%arg2 : memref<128x128xbf16, #tpu.memory_space<any>>) dst(%arg8 : memref<128x128xbf16, #tpu.memory_space<vmem>>)
    %c0 = arith.constant 0 : index
    %c0_1 = arith.constant 0 : index
    %12 = vector.load %arg0[%c0, %c0_1] : memref<8x128xbf16, #tpu.memory_space<vmem>>, vector<8x128xbf16>
    %c0_2 = arith.constant 0 : index
    %c0_3 = arith.constant 0 : index
    %13 = vector.load %arg8[%c0_2, %c0_3] : memref<128x128xbf16, #tpu.memory_space<vmem>>, vector<128x128xbf16>
    %cst = arith.constant dense<0.000000e+00> : vector<8x128xf32>
    %14 = tpu.matmul %12, %13, %cst {dimension_numbers = #tpu.dot_dimension_numbers<[1], [0], [0], [1], [0, 0, 1, 1], [], []>} : vector<8x128xbf16>, vector<128x128xbf16>, vector<8x128xf32> -> vector<8x128xf32>
    %c0_4 = arith.constant 0 : index
    %c0_5 = arith.constant 0 : index
    %15 = vector.load %arg1[%c0_4, %c0_5] : memref<1x6400xf32, #tpu.memory_space<vmem>>, vector<1x128xf32>
    %16 = vector.broadcast %15 : vector<1x128xf32> to vector<8x128xf32>
    %17 = arith.addf %14, %16 : vector<8x128xf32>
    %cst_6 = arith.constant 0.000000e+00 : f32
    %18 = vector.broadcast %cst_6 : f32 to vector<8x128xf32>
    %19 = arith.cmpf ogt, %17, %18 : vector<8x128xf32>
    %cst_7 = arith.constant 2.000000e-01 : f32
    %20 = vector.broadcast %cst_7 : f32 to vector<8x128xf32>
    %21 = arith.mulf %20, %17 : vector<8x128xf32>
    %22 = arith.select %19, %17, %21 : vector<8x128xi1>, vector<8x128xf32>
    %c1_i32_8 = arith.constant 1 : i32
    %23 = tpu.memref_slice %arg13[%c1_i32_8] : memref<5x!tpu.dma_semaphore, #tpu.memory_space<semaphore_mem>> -> memref<1x!tpu.dma_semaphore, #tpu.memory_space<semaphore_mem>>
    %24 = tpu.memref_squeeze %23 : memref<1x!tpu.dma_semaphore, #tpu.memory_space<semaphore_mem>> -> memref<!tpu.dma_semaphore, #tpu.memory_space<semaphore_mem>>
    tpu.wait_dma2 semaphore(%24 : memref<!tpu.dma_semaphore, #tpu.memory_space<semaphore_mem>>) src(%arg3 : memref<128x256xbf16, #tpu.memory_space<any>>) dst(%arg9 : memref<128x256xbf16, #tpu.memory_space<vmem>>)
    %25 = arith.truncf %22 : vector<8x128xf32> to vector<8x128xbf16>
    %c0_9 = arith.constant 0 : index
    %c0_10 = arith.constant 0 : index
    %26 = vector.load %arg9[%c0_9, %c0_10] : memref<128x256xbf16, #tpu.memory_space<vmem>>, vector<128x256xbf16>
    %cst_11 = arith.constant dense<0.000000e+00> : vector<8x256xf32>
    %27 = tpu.matmul %25, %26, %cst_11 {dimension_numbers = #tpu.dot_dimension_numbers<[1], [0], [0], [1], [0, 0, 1, 1], [], []>} : vector<8x128xbf16>, vector<128x256xbf16>, vector<8x256xf32> -> vector<8x256xf32>
    %c0_12 = arith.constant 0 : index
    %c128 = arith.constant 128 : index
    %28 = vector.load %arg1[%c0_12, %c128] : memref<1x6400xf32, #tpu.memory_space<vmem>>, vector<1x256xf32>
    %29 = vector.broadcast %28 : vector<1x256xf32> to vector<8x256xf32>
    %30 = arith.addf %27, %29 : vector<8x256xf32>
    %c0_13 = arith.constant 0 : index
    %c384 = arith.constant 384 : index
    %31 = vector.load %arg1[%c0_13, %c384] : memref<1x6400xf32, #tpu.memory_space<vmem>>, vector<1x256xf32>
    %c0_14 = arith.constant 0 : index
    %c640 = arith.constant 640 : index
    %32 = vector.load %arg1[%c0_14, %c640] : memref<1x6400xf32, #tpu.memory_space<vmem>>, vector<1x256xf32>
    %cst_15 = arith.constant dense<0.000000e+00> : vector<256xf32>
    %33 = vector.multi_reduction <add>, %30, %cst_15 [0] : vector<8x256xf32> to vector<256xf32>
    %34 = vector.shape_cast %33 : vector<256xf32> to vector<1x256xf32>
    %cst_16 = arith.constant 8.000000e+00 : f32
    %35 = vector.broadcast %cst_16 : f32 to vector<1x256xf32>
    %36 = arith.divf %34, %35 : vector<1x256xf32>
    %37 = arith.mulf %30, %30 : vector<8x256xf32>
    %cst_17 = arith.constant dense<0.000000e+00> : vector<256xf32>
    %38 = vector.multi_reduction <add>, %37, %cst_17 [0] : vector<8x256xf32> to vector<256xf32>
    %39 = vector.shape_cast %38 : vector<256xf32> to vector<1x256xf32>
    %cst_18 = arith.constant 8.000000e+00 : f32
    %40 = vector.broadcast %cst_18 : f32 to vector<1x256xf32>
    %41 = arith.divf %39, %40 : vector<1x256xf32>
    %42 = arith.mulf %36, %36 : vector<1x256xf32>
    %43 = arith.subf %41, %42 : vector<1x256xf32>
    %cst_19 = arith.constant 8.000000e-01 : f32
    %44 = vector.broadcast %cst_19 : f32 to vector<1x256xf32>
    %45 = arith.addf %43, %44 : vector<1x256xf32>
    %46 = math.rsqrt %45 : vector<1x256xf32>
    %47 = arith.mulf %31, %46 : vector<1x256xf32>
    %48 = arith.mulf %36, %47 : vector<1x256xf32>
    %49 = arith.subf %32, %48 : vector<1x256xf32>
    %50 = vector.broadcast %47 : vector<1x256xf32> to vector<8x256xf32>
    %51 = arith.mulf %30, %50 : vector<8x256xf32>
    %52 = vector.broadcast %49 : vector<1x256xf32> to vector<8x256xf32>
    %53 = arith.addf %51, %52 : vector<8x256xf32>
    %cst_20 = arith.constant 0.000000e+00 : f32
    %54 = vector.broadcast %cst_20 : f32 to vector<8x256xf32>
    %55 = arith.cmpf ogt, %53, %54 : vector<8x256xf32>
    %cst_21 = arith.constant 2.000000e-01 : f32
    %56 = vector.broadcast %cst_21 : f32 to vector<8x256xf32>
    %57 = arith.mulf %56, %53 : vector<8x256xf32>
    %58 = arith.select %55, %53, %57 : vector<8x256xi1>, vector<8x256xf32>
    %c2_i32_22 = arith.constant 2 : i32
    %59 = tpu.memref_slice %arg13[%c2_i32_22] : memref<5x!tpu.dma_semaphore, #tpu.memory_space<semaphore_mem>> -> memref<1x!tpu.dma_semaphore, #tpu.memory_space<semaphore_mem>>
    %60 = tpu.memref_squeeze %59 : memref<1x!tpu.dma_semaphore, #tpu.memory_space<semaphore_mem>> -> memref<!tpu.dma_semaphore, #tpu.memory_space<semaphore_mem>>
    tpu.wait_dma2 semaphore(%60 : memref<!tpu.dma_semaphore, #tpu.memory_space<semaphore_mem>>) src(%arg4 : memref<256x512xbf16, #tpu.memory_space<any>>) dst(%arg10 : memref<256x512xbf16, #tpu.memory_space<vmem>>)
    %61 = arith.truncf %58 : vector<8x256xf32> to vector<8x256xbf16>
    %c0_23 = arith.constant 0 : index
    %c0_24 = arith.constant 0 : index
    %62 = vector.load %arg10[%c0_23, %c0_24] : memref<256x512xbf16, #tpu.memory_space<vmem>>, vector<256x512xbf16>
    %cst_25 = arith.constant dense<0.000000e+00> : vector<8x512xf32>
    %63 = tpu.matmul %61, %62, %cst_25 {dimension_numbers = #tpu.dot_dimension_numbers<[1], [0], [0], [1], [0, 0, 1, 1], [], []>} : vector<8x256xbf16>, vector<256x512xbf16>, vector<8x512xf32> -> vector<8x512xf32>
    %c0_26 = arith.constant 0 : index
    %c896 = arith.constant 896 : index
    %64 = vector.load %arg1[%c0_26, %c896] : memref<1x6400xf32, #tpu.memory_space<vmem>>, vector<1x512xf32>
    %65 = vector.broadcast %64 : vector<1x512xf32> to vector<8x512xf32>
    %66 = arith.addf %63, %65 : vector<8x512xf32>
    %c0_27 = arith.constant 0 : index
    %c1408 = arith.constant 1408 : index
    %67 = vector.load %arg1[%c0_27, %c1408] : memref<1x6400xf32, #tpu.memory_space<vmem>>, vector<1x512xf32>
    %c0_28 = arith.constant 0 : index
    %c1920 = arith.constant 1920 : index
    %68 = vector.load %arg1[%c0_28, %c1920] : memref<1x6400xf32, #tpu.memory_space<vmem>>, vector<1x512xf32>
    %cst_29 = arith.constant dense<0.000000e+00> : vector<512xf32>
    %69 = vector.multi_reduction <add>, %66, %cst_29 [0] : vector<8x512xf32> to vector<512xf32>
    %70 = vector.shape_cast %69 : vector<512xf32> to vector<1x512xf32>
    %cst_30 = arith.constant 8.000000e+00 : f32
    %71 = vector.broadcast %cst_30 : f32 to vector<1x512xf32>
    %72 = arith.divf %70, %71 : vector<1x512xf32>
    %73 = arith.mulf %66, %66 : vector<8x512xf32>
    %cst_31 = arith.constant dense<0.000000e+00> : vector<512xf32>
    %74 = vector.multi_reduction <add>, %73, %cst_31 [0] : vector<8x512xf32> to vector<512xf32>
    %75 = vector.shape_cast %74 : vector<512xf32> to vector<1x512xf32>
    %cst_32 = arith.constant 8.000000e+00 : f32
    %76 = vector.broadcast %cst_32 : f32 to vector<1x512xf32>
    %77 = arith.divf %75, %76 : vector<1x512xf32>
    %78 = arith.mulf %72, %72 : vector<1x512xf32>
    %79 = arith.subf %77, %78 : vector<1x512xf32>
    %cst_33 = arith.constant 8.000000e-01 : f32
    %80 = vector.broadcast %cst_33 : f32 to vector<1x512xf32>
    %81 = arith.addf %79, %80 : vector<1x512xf32>
    %82 = math.rsqrt %81 : vector<1x512xf32>
    %83 = arith.mulf %67, %82 : vector<1x512xf32>
    %84 = arith.mulf %72, %83 : vector<1x512xf32>
    %85 = arith.subf %68, %84 : vector<1x512xf32>
    %86 = vector.broadcast %83 : vector<1x512xf32> to vector<8x512xf32>
    %87 = arith.mulf %66, %86 : vector<8x512xf32>
    %88 = vector.broadcast %85 : vector<1x512xf32> to vector<8x512xf32>
    %89 = arith.addf %87, %88 : vector<8x512xf32>
    %cst_34 = arith.constant 0.000000e+00 : f32
    %90 = vector.broadcast %cst_34 : f32 to vector<8x512xf32>
    %91 = arith.cmpf ogt, %89, %90 : vector<8x512xf32>
    %cst_35 = arith.constant 2.000000e-01 : f32
    %92 = vector.broadcast %cst_35 : f32 to vector<8x512xf32>
    %93 = arith.mulf %92, %89 : vector<8x512xf32>
    %94 = arith.select %91, %89, %93 : vector<8x512xi1>, vector<8x512xf32>
    %c3_i32_36 = arith.constant 3 : i32
    %95 = tpu.memref_slice %arg13[%c3_i32_36] : memref<5x!tpu.dma_semaphore, #tpu.memory_space<semaphore_mem>> -> memref<1x!tpu.dma_semaphore, #tpu.memory_space<semaphore_mem>>
    %96 = tpu.memref_squeeze %95 : memref<1x!tpu.dma_semaphore, #tpu.memory_space<semaphore_mem>> -> memref<!tpu.dma_semaphore, #tpu.memory_space<semaphore_mem>>
    tpu.wait_dma2 semaphore(%96 : memref<!tpu.dma_semaphore, #tpu.memory_space<semaphore_mem>>) src(%arg5 : memref<512x1024xbf16, #tpu.memory_space<any>>) dst(%arg11 : memref<512x1024xbf16, #tpu.memory_space<vmem>>)
    %97 = arith.truncf %94 : vector<8x512xf32> to vector<8x512xbf16>
    %c0_37 = arith.constant 0 : index
    %c0_38 = arith.constant 0 : index
    %98 = vector.load %arg11[%c0_37, %c0_38] : memref<512x1024xbf16, #tpu.memory_space<vmem>>, vector<512x1024xbf16>
    %cst_39 = arith.constant dense<0.000000e+00> : vector<8x1024xf32>
    %99 = tpu.matmul %97, %98, %cst_39 {dimension_numbers = #tpu.dot_dimension_numbers<[1], [0], [0], [1], [0, 0, 1, 1], [], []>} : vector<8x512xbf16>, vector<512x1024xbf16>, vector<8x1024xf32> -> vector<8x1024xf32>
    %c0_40 = arith.constant 0 : index
    %c2432 = arith.constant 2432 : index
    %100 = vector.load %arg1[%c0_40, %c2432] : memref<1x6400xf32, #tpu.memory_space<vmem>>, vector<1x1024xf32>
    %101 = vector.broadcast %100 : vector<1x1024xf32> to vector<8x1024xf32>
    %102 = arith.addf %99, %101 : vector<8x1024xf32>
    %c0_41 = arith.constant 0 : index
    %c3456 = arith.constant 3456 : index
    %103 = vector.load %arg1[%c0_41, %c3456] : memref<1x6400xf32, #tpu.memory_space<vmem>>, vector<1x1024xf32>
    %c0_42 = arith.constant 0 : index
    %c4480 = arith.constant 4480 : index
    %104 = vector.load %arg1[%c0_42, %c4480] : memref<1x6400xf32, #tpu.memory_space<vmem>>, vector<1x1024xf32>
    %cst_43 = arith.constant dense<0.000000e+00> : vector<1024xf32>
    %105 = vector.multi_reduction <add>, %102, %cst_43 [0] : vector<8x1024xf32> to vector<1024xf32>
    %106 = vector.shape_cast %105 : vector<1024xf32> to vector<1x1024xf32>
    %cst_44 = arith.constant 8.000000e+00 : f32
    %107 = vector.broadcast %cst_44 : f32 to vector<1x1024xf32>
    %108 = arith.divf %106, %107 : vector<1x1024xf32>
    %109 = arith.mulf %102, %102 : vector<8x1024xf32>
    %cst_45 = arith.constant dense<0.000000e+00> : vector<1024xf32>
    %110 = vector.multi_reduction <add>, %109, %cst_45 [0] : vector<8x1024xf32> to vector<1024xf32>
    %111 = vector.shape_cast %110 : vector<1024xf32> to vector<1x1024xf32>
    %cst_46 = arith.constant 8.000000e+00 : f32
    %112 = vector.broadcast %cst_46 : f32 to vector<1x1024xf32>
    %113 = arith.divf %111, %112 : vector<1x1024xf32>
    %114 = arith.mulf %108, %108 : vector<1x1024xf32>
    %115 = arith.subf %113, %114 : vector<1x1024xf32>
    %cst_47 = arith.constant 8.000000e-01 : f32
    %116 = vector.broadcast %cst_47 : f32 to vector<1x1024xf32>
    %117 = arith.addf %115, %116 : vector<1x1024xf32>
    %118 = math.rsqrt %117 : vector<1x1024xf32>
    %119 = arith.mulf %103, %118 : vector<1x1024xf32>
    %120 = arith.mulf %108, %119 : vector<1x1024xf32>
    %121 = arith.subf %104, %120 : vector<1x1024xf32>
    %122 = vector.broadcast %119 : vector<1x1024xf32> to vector<8x1024xf32>
    %123 = arith.mulf %102, %122 : vector<8x1024xf32>
    %124 = vector.broadcast %121 : vector<1x1024xf32> to vector<8x1024xf32>
    %125 = arith.addf %123, %124 : vector<8x1024xf32>
    %cst_48 = arith.constant 0.000000e+00 : f32
    %126 = vector.broadcast %cst_48 : f32 to vector<8x1024xf32>
    %127 = arith.cmpf ogt, %125, %126 : vector<8x1024xf32>
    %cst_49 = arith.constant 2.000000e-01 : f32
    %128 = vector.broadcast %cst_49 : f32 to vector<8x1024xf32>
    %129 = arith.mulf %128, %125 : vector<8x1024xf32>
    %130 = arith.select %127, %125, %129 : vector<8x1024xi1>, vector<8x1024xf32>
    %c4_i32_50 = arith.constant 4 : i32
    %131 = tpu.memref_slice %arg13[%c4_i32_50] : memref<5x!tpu.dma_semaphore, #tpu.memory_space<semaphore_mem>> -> memref<1x!tpu.dma_semaphore, #tpu.memory_space<semaphore_mem>>
    %132 = tpu.memref_squeeze %131 : memref<1x!tpu.dma_semaphore, #tpu.memory_space<semaphore_mem>> -> memref<!tpu.dma_semaphore, #tpu.memory_space<semaphore_mem>>
    tpu.wait_dma2 semaphore(%132 : memref<!tpu.dma_semaphore, #tpu.memory_space<semaphore_mem>>) src(%arg6 : memref<1024x896xbf16, #tpu.memory_space<any>>) dst(%arg12 : memref<1024x896xbf16, #tpu.memory_space<vmem>>)
    %133 = arith.truncf %130 : vector<8x1024xf32> to vector<8x1024xbf16>
    %c0_51 = arith.constant 0 : index
    %c0_52 = arith.constant 0 : index
    %134 = vector.load %arg12[%c0_51, %c0_52] : memref<1024x896xbf16, #tpu.memory_space<vmem>>, vector<1024x896xbf16>
    %cst_53 = arith.constant dense<0.000000e+00> : vector<8x896xf32>
    %135 = tpu.matmul %133, %134, %cst_53 {dimension_numbers = #tpu.dot_dimension_numbers<[1], [0], [0], [1], [0, 0, 1, 1], [], []>} : vector<8x1024xbf16>, vector<1024x896xbf16>, vector<8x896xf32> -> vector<8x896xf32>
    %c0_54 = arith.constant 0 : index
    %c5504 = arith.constant 5504 : index
    %136 = vector.load %arg1[%c0_54, %c5504] : memref<1x6400xf32, #tpu.memory_space<vmem>>, vector<1x896xf32>
    %137 = vector.broadcast %136 : vector<1x896xf32> to vector<8x896xf32>
    %138 = arith.addf %135, %137 : vector<8x896xf32>
    %139 = math.tanh %138 : vector<8x896xf32>
    %140 = vector.extract_strided_slice %139 {offsets = [0, 0], sizes = [8, 784], strides = [1, 1]} : vector<8x896xf32> to vector<8x784xf32>
    %c0_55 = arith.constant 0 : index
    %c0_56 = arith.constant 0 : index
    %141 = vector.load %arg7[%c0_55, %c0_56] : memref<8x784xf32, #tpu.memory_space<vmem>>, vector<8x784xf32>
    tpu.vector_store %arg7[%c0_55, %c0_56], %140 {strides = array<i32>} : memref<8x784xf32, #tpu.memory_space<vmem>>, vector<8x784xf32>,
    return
  }
}

</mosaic_0001>

<llo_original>
// kernel: generator_forward.1
$region0: #{generator_forward.1}
  #allocation0 [shape = 'u32[]', space=smem, size = 0x4, offset = 0x4, fixed_abs, tag = 'smem constant byte address 0x4 - core index']
  #allocation1 [shape = 'u32[144,128]{1,0:T(1,128)}', space=vmem, size = 0x12000, scoped, tag = 'internal scratch']
  #allocation2 [shape = 'bf16[128,128]{1,0:T(16,128)(2,1)}', space=vmem, size = 0x8000, scoped, tag = 'scratch operand']
  #allocation3 [shape = 'bf16[128,256]{1,0:T(16,128)(2,1)}', space=vmem, size = 0x10000, scoped, tag = 'scratch operand']
  #allocation4 [shape = 'bf16[256,512]{1,0:T(16,128)(2,1)}', space=vmem, size = 0x40000, scoped, tag = 'scratch operand']
  #allocation5 [shape = 'bf16[512,1024]{1,0:T(16,128)(2,1)}', space=vmem, size = 0x100000, scoped, tag = 'scratch operand']
  #allocation6 [shape = 'bf16[1024,896]{1,0:T(16,128)(2,1)}', space=vmem, size = 0x1c0000, scoped, tag = 'scratch operand']
  #allocation7 [shape = 's32[5]{0}', space=sflag, size = 0x14, scoped, tag = 'scratch operand']
  #allocation10 [shape = 's32[]', space=sflag, size = 0x4, offset = 0, fixed_abs, tag = 'sflag constant byte address 0x0 - dummy sync flag']
  #allocation11 [shape = 's32[]', space=sflag, size = 0x4, offset = 0, fixed_abs, tag = 'sflag constant byte address 0x0 - dummy sync flag']
  #allocation12 [shape = 'u32[]', space=smem, size = 0x4, offset = 0x44, fixed_abs, tag = 'smem constant byte address 0x44 - assertion arg 0']
  #allocation13 [shape = 'u32[]', space=smem, size = 0x4, offset = 0x48, fixed_abs, tag = 'smem constant byte address 0x48 - assertion arg 1']
  #allocation14 [shape = 's32[]', space=sflag, size = 0x4, offset = 0, fixed_abs, tag = 'sflag constant byte address 0x0 - dummy sync flag']
  #allocation16 [shape = 's32[]', space=sflag, size = 0x4, offset = 0, fixed_abs, tag = 'sflag constant byte address 0x0 - dummy sync flag']
  #allocation18 [shape = 's32[]', space=sflag, size = 0x4, offset = 0, fixed_abs, tag = 'sflag constant byte address 0x0 - dummy sync flag']
  #allocation20 [shape = 's32[]', space=sflag, size = 0x4, offset = 0, fixed_abs, tag = 'sflag constant byte address 0x0 - dummy sync flag']
  %s0 = inlined_call_operand.vmem [shape: bf16[8,128], index: 0, kind: input, shape index: {}]
  %s1 = inlined_call_operand.hbm [shape: f32[1,6400], index: 1, kind: input, shape index: {}]
  %s2 = inlined_call_operand.hbm [shape: bf16[128,128], index: 2, kind: input, shape index: {}]
  %s3 = inlined_call_operand.hbm [shape: bf16[128,256], index: 3, kind: input, shape index: {}]
  %s4 = inlined_call_operand.hbm [shape: bf16[256,512], index: 4, kind: input, shape index: {}]
  %s5 = inlined_call_operand.hbm [shape: bf16[512,1024], index: 5, kind: input, shape index: {}]
  %s6 = inlined_call_operand.hbm [shape: bf16[1024,896], index: 6, kind: input, shape index: {}]
  %s7 = inlined_call_operand.vmem [shape: f32[8,784], index: 7, kind: output, shape index: {}]
  %s8 = sld [smem:[#allocation0]]
  $region26: #{generator_forward.1} parent=0
    _
  %s10 = ssub.s32 1, %s8
  %s11 = scalar_select 0, %s10, %s8
  $region1: #{generator_forward.1} parent=0
    #allocation8 [shape = 'u8[25600]{0}', space=vmem, size = 0x6400, scoped, tag = 'input window, operand 1, single buffered']
    #allocation9 [shape = 's32[1]{0}', space=sflag, size = 0x4, scoped, tag = 'scoped memory for generator_forward.1']
    #allocation15 [shape = 'u32[9]{0}', space=smem, size = 0x24, scoped, tag = 'DMA stride descriptor']
    #allocation17 [shape = 'u32[9]{0}', space=smem, size = 0x24, scoped, tag = 'DMA stride descriptor']
    #allocation19 [shape = 'u32[9]{0}', space=smem, size = 0x24, scoped, tag = 'DMA stride descriptor']
    #allocation21 [shape = 'u32[9]{0}', space=smem, size = 0x24, scoped, tag = 'DMA stride descriptor']
    %12 = vsyncpa [#allocation9], 0
    // Predicated region
    $region2: #{generator_forward.1} parent=1 // pred_check
      _
    $region3: #{generator_forward.1} parent=1 // pred_check_branch
      %14 = sbr.rel (0) target = $region5
    $region4: #{generator_forward.1} parent=1 // pred_region
      _
    $region5: #{generator_forward.1} parent=1 // pred_fallthru
      _
    // Predicated region
    $region6: #{generator_forward.1} parent=1 // pred_check
      _
    $region7: #{generator_forward.1} parent=1 // pred_check_branch
      %16 = sbr.rel (0) target = $region9
    $region8: #{generator_forward.1} parent=1 // pred_region
      %s18 = ssub.s32 800, 800
      %19 = vsyncadd [#allocation9], %s18
      %s21 = sshll.u32 [#allocation8], 4
      %s22 = int_to_ptr.vmem [resolvable:$true] %s21
      %24 = dma.hbm_to_vmem [thread:$0]  %s1, 800, %s22, [#allocation9]
    $region9: #{generator_forward.1} parent=1 // pred_fallthru
      _
    // Predicated region
    $region10: #{generator_forward.1} parent=1 // pred_check
      _
    $region11: #{generator_forward.1} parent=1 // pred_check_branch
      %26 = sbr.rel (0) target = $region13
    $region12: #{generator_forward.1} parent=1 // pred_region
      %27 = dma.done [#allocation9], 800
    $region13: #{generator_forward.1} parent=1 // pred_fallthru
      _
    // Predicated region
    $region14: #{generator_forward.1} parent=1 // pred_check
      _
    $region15: #{generator_forward.1} parent=1 // pred_check_branch
      %30 = sbr.rel target = $region17
    $region16: #{generator_forward.1} parent=1 // pred_region
      %31 = sst [smem:[#allocation12]] [#allocation11]
      %32 = sst [smem:[#allocation13]] [#allocation10]
    $region17: #{generator_forward.1} parent=1 // pred_fallthru
      _
    %34 = shalt.err (0)
    %s36 = sshll.u32 [#allocation2], 4
    %s37 = int_to_ptr.vmem [resolvable:$true] %s36
    %39 = dma.hbm_to_vmem [thread:$0]  %s2, 1024, %s37, [#allocation7]
    %s40 = scalar_lea.sflag [#allocation7], 1
    %s42 = sshll.u32 1, 14
    %s43 = sxor.u32 4294967295, %s42
    %s45 = sld [smem:[#allocation0]]
    %s46 = sadd.s32 2, %s45
    %s48 = sshll.u32 7, 26
    %s49 = sxor.u32 4294967295, %s48
    %s50 = sand.u32 0, %s49
    %s51 = sshll.u32 %s46, 26
    %s52 = sor.u32 %s50, %s51
    %s53 = sshll.u32 [#allocation3], 4
    %s54 = int_to_ptr.vmem [resolvable:$true] %s53
    %57 = sst [smem:[#allocation15]] 256
    %s58 = scalar_lea.smem [#allocation15], 1
    %59 = sst [smem:[%s58]] 256
    %s60 = scalar_lea.smem [#allocation15], 2
    %61 = sst [smem:[%s60]] 2
    %s62 = scalar_lea.smem [#allocation15], 3
    %63 = sst [smem:[%s62]] 64
    %s64 = scalar_lea.smem [#allocation15], 4
    %65 = sst [smem:[%s64]] 128
    %s66 = scalar_lea.smem [#allocation15], 5
    %67 = sst [smem:[%s66]] 2
    %s68 = scalar_lea.smem [#allocation15], 6
    %69 = sst [smem:[%s68]] 128
    %s70 = scalar_lea.smem [#allocation15], 7
    %71 = sst [smem:[%s70]] 64
    %s72 = scalar_lea.smem [#allocation15], 8
    %73 = sst [smem:[%s72]] 4
    %75 = dma.general %s3, 2048, %s54, %s40, [#allocation14], [#allocation15], %s52, 0
    %s76 = scalar_lea.sflag [#allocation7], 2
    %s78 = sshll.u32 1, 14
    %s79 = sxor.u32 4294967295, %s78
    %s81 = sadd.s32 2, %s45
    %s83 = sshll.u32 7, 26
    %s84 = sxor.u32 4294967295, %s83
    %s85 = sand.u32 0, %s84
    %s86 = sshll.u32 %s81, 26
    %s87 = sor.u32 %s85, %s86
    %s88 = sshll.u32 [#allocation4], 4
    %s89 = int_to_ptr.vmem [resolvable:$true] %s88
    %92 = sst [smem:[#allocation17]] 512
    %s93 = scalar_lea.smem [#allocation17], 1
    %94 = sst [smem:[%s93]] 512
    %s95 = scalar_lea.smem [#allocation17], 2
    %96 = sst [smem:[%s95]] 4
    %s97 = scalar_lea.smem [#allocation17], 3
    %98 = sst [smem:[%s97]] 64
    %s99 = scalar_lea.smem [#allocation17], 4
    %100 = sst [smem:[%s99]] 128
    %s101 = scalar_lea.smem [#allocation17], 5
    %102 = sst [smem:[%s101]] 2
    %s103 = scalar_lea.smem [#allocation17], 6
    %104 = sst [smem:[%s103]] 256
    %s105 = scalar_lea.smem [#allocation17], 7
    %106 = sst [smem:[%s105]] 64
    %s107 = scalar_lea.smem [#allocation17], 8
    %108 = sst [smem:[%s107]] 4
    %110 = dma.general %s4, 8192, %s89, %s76, [#allocation16], [#allocation17], %s87, 0
    %s111 = scalar_lea.sflag [#allocation7], 3
    %s113 = sshll.u32 1, 14
    %s114 = sxor.u32 4294967295, %s113
    %s116 = sadd.s32 2, %s45
    %s118 = sshll.u32 7, 26
    %s119 = sxor.u32 4294967295, %s118
    %s120 = sand.u32 0, %s119
    %s121 = sshll.u32 %s116, 26
    %s122 = sor.u32 %s120, %s121
    %s123 = sshll.u32 [#allocation5], 4
    %s124 = int_to_ptr.vmem [resolvable:$true] %s123
    %127 = sst [smem:[#allocation19]] 1024
    %s128 = scalar_lea.smem [#allocation19], 1
    %129 = sst [smem:[%s128]] 1024
    %s130 = scalar_lea.smem [#allocation19], 2
    %131 = sst [smem:[%s130]] 8
    %s132 = scalar_lea.smem [#allocation19], 3
    %133 = sst [smem:[%s132]] 64
    %s134 = scalar_lea.smem [#allocation19], 4
    %135 = sst [smem:[%s134]] 128
    %s136 = scalar_lea.smem [#allocation19], 5
    %137 = sst [smem:[%s136]] 2
    %s138 = scalar_lea.smem [#allocation19], 6
    %139 = sst [smem:[%s138]] 512
    %s140 = scalar_lea.smem [#allocation19], 7
    %141 = sst [smem:[%s140]] 64
    %s142 = scalar_lea.smem [#allocation19], 8
    %143 = sst [smem:[%s142]] 4
    %145 = dma.general %s5, 32768, %s124, %s111, [#allocation18], [#allocation19], %s122, 0
    %s146 = scalar_lea.sflag [#allocation7], 4
    %s148 = sshll.u32 1, 14
    %s149 = sxor.u32 4294967295, %s148
    %s151 = sadd.s32 2, %s45
    %s153 = sshll.u32 7, 26
    %s154 = sxor.u32 4294967295, %s153
    %s155 = sand.u32 0, %s154
    %s156 = sshll.u32 %s151, 26
    %s157 = sor.u32 %s155, %s156
    %s158 = sshll.u32 [#allocation6], 4
    %s159 = int_to_ptr.vmem [resolvable:$true] %s158
    %162 = sst [smem:[#allocation21]] 896
    %s163 = scalar_lea.smem [#allocation21], 1
    %164 = sst [smem:[%s163]] 896
    %s165 = scalar_lea.smem [#allocation21], 2
    %166 = sst [smem:[%s165]] 7
    %s167 = scalar_lea.smem [#allocation21], 3
    %168 = sst [smem:[%s167]] 64
    %s169 = scalar_lea.smem [#allocation21], 4
    %170 = sst [smem:[%s169]] 128
    %s171 = scalar_lea.smem [#allocation21], 5
    %172 = sst [smem:[%s171]] 2
    %s173 = scalar_lea.smem [#allocation21], 6
    %174 = sst [smem:[%s173]] 448
    %s175 = scalar_lea.smem [#allocation21], 7
    %176 = sst [smem:[%s175]] 64
    %s177 = scalar_lea.smem [#allocation21], 8
    %178 = sst [smem:[%s177]] 4
    %180 = dma.general %s6, 57344, %s159, %s146, [#allocation20], [#allocation21], %s157, 0
    %s181 = smul.u32 4, 16
    %s182 = smul.u32 %s181, 1
    %s183 = sshll.u32 %s182, 4
    %184 = dma.done [#allocation7], %s183
    %v185 = vld [vmem:[%s0] sm:$0xf]
    %v186 = vld [vmem:[#allocation2] sm:$0xff]
    %v187 = vld [vmem:[#allocation2 + $0x8] sm:$0xff]
    %v188 = vld [vmem:[#allocation2 + $0x10] sm:$0xff]
    %v189 = vld [vmem:[#allocation2 + $0x18] sm:$0xff]
    %v190 = vld [vmem:[#allocation2 + $0x20] sm:$0xff]
    %v191 = vld [vmem:[#allocation2 + $0x28] sm:$0xff]
    %v192 = vld [vmem:[#allocation2 + $0x30] sm:$0xff]
    %v193 = vld [vmem:[#allocation2 + $0x38] sm:$0xff]
    %v194 = vld [vmem:[#allocation8] sm:$0x1]
    %v196 = vlaneseq
    %v197 = vshrl.u32 %v196, 7
    %v198 = vsub.s32 0, %v197
    %v199 = vrot.slane %v194, %v198
    %201 = vmatprep.subr.bf16.mxu0 0
    %202 = vmatpush1.bf16.msra.mxu0 %v186
    %203 = vmatprep.subr.bf16.mxu0 0
    %204 = vmatpush1.bf16.msra.mxu0 %v187
    %205 = vmatprep.subr.bf16.mxu0 0
    %206 = vmatpush1.bf16.msra.mxu0 %v188
    %207 = vmatprep.subr.bf16.mxu0 0
    %208 = vmatpush1.bf16.msra.mxu0 %v189
    %209 = vmatprep.subr.bf16.mxu0 0
    %210 = vmatpush1.bf16.msra.mxu0 %v190
    %211 = vmatprep.subr.bf16.mxu0 0
    %212 = vmatpush1.bf16.msra.mxu0 %v191
    %213 = vmatprep.subr.bf16.mxu0 0
    %214 = vmatpush1.bf16.msra.mxu0 %v192
    %215 = vmatprep.subr.bf16.mxu0 0
    %216 = vmatpush1.bf16.msra.mxu0 %v193
    %217 = vmatprep.subr.bf16.mxu0 0
    %218 = vmatpush1.bf16.msra.mxu0 0
    %219 = vmatprep.subr.bf16.mxu0 0
    %220 = vmatpush1.bf16.msra.mxu0 0
    %221 = vmatprep.subr.bf16.mxu0 0
    %222 = vmatpush1.bf16.msra.mxu0 0
    %223 = vmatprep.subr.bf16.mxu0 0
    %224 = vmatpush1.bf16.msra.mxu0 0
    %225 = vmatprep.subr.bf16.mxu0 0
    %226 = vmatpush1.bf16.msra.mxu0 0
    %227 = vmatprep.subr.bf16.mxu0 0
    %228 = vmatpush1.bf16.msra.mxu0 0
    %229 = vmatprep.subr.bf16.mxu0 0
    %230 = vmatpush1.bf16.msra.mxu0 0
    %231 = vmatprep.subr.bf16.mxu0 0
    %232 = vmatpush1.bf16.msra.mxu0 0
    %233 = vmatprep.mubr.bf16.mxu0 0
    %234 = vmatmul.mubr.bf16.gmra.mrb[0].mxu0 %v185
    %v235 = vpop.f32.mrb[0].mxu0
    %v236 = vadd.f32 %v199, %v235
    %v237 = vpop.f32.mrb[0].mxu0
    %v238 = vpop.f32.mrb[0].mxu0
    %v239 = vpop.f32.mrb[0].mxu0
    %240 = vdwg.mxu0
    %vm241 = vcmp.gt.f32.partialorder %v236, 0.0
    %v242 = vmul.f32 %v236, 0.2
    %v243 = vsel %vm241, %v236, %v242
    %s244 = smul.u32 %s181, 2
    %s245 = sshll.u32 %s244, 4
    %246 = dma.done %s40, %s245
    %v247 = vpack.c.bf16 %v243, %v243
    %v248 = vld [vmem:[#allocation3] sm:$0xff]
    %v249 = vld [vmem:[#allocation3 + $0x8] sm:$0xff]
    %v250 = vld [vmem:[#allocation3 + $0x10] sm:$0xff]
    %v251 = vld [vmem:[#allocation3 + $0x18] sm:$0xff]
    %v252 = vld [vmem:[#allocation3 + $0x20] sm:$0xff]
    %v253 = vld [vmem:[#allocation3 + $0x28] sm:$0xff]
    %v254 = vld [vmem:[#allocation3 + $0x30] sm:$0xff]
    %v255 = vld [vmem:[#allocation3 + $0x38] sm:$0xff]
    %v256 = vld [vmem:[#allocation3 + $0x40] sm:$0xff]
    %v257 = vld [vmem:[#allocation3 + $0x48] sm:$0xff]
    %v258 = vld [vmem:[#allocation3 + $0x50] sm:$0xff]
    %v259 = vld [vmem:[#allocation3 + $0x58] sm:$0xff]
    %v260 = vld [vmem:[#allocation3 + $0x60] sm:$0xff]
    %v261 = vld [vmem:[#allocation3 + $0x68] sm:$0xff]
    %v262 = vld [vmem:[#allocation3 + $0x70] sm:$0xff]
    %v263 = vld [vmem:[#allocation3 + $0x78] sm:$0xff]
    %v264 = vld [vmem:[#allocation8 + $0x1] sm:$0x3]
    %v266 = vlaneseq
    %v267 = vshrl.u32 %v266, 7
    %v268 = vsub.s32 0, %v267
    %v269 = vrot.slane %v264, %v268
    %v270 = vlaneseq
    %v271 = vshrl.u32 %v270, 7
    %v272 = vsub.s32 1, %v271
    %v273 = vrot.slane %v264, %v272
    %276 = vmatprep.subr.bf16.mxu0 %v249
    %277 = vmatpush1.bf16.msra.mxu0 %v248
    %278 = vmatprep.subr.bf16.mxu0 %v251
    %279 = vmatpush1.bf16.msra.mxu0 %v250
    %280 = vmatprep.subr.bf16.mxu0 %v253
    %281 = vmatpush1.bf16.msra.mxu0 %v252
    %282 = vmatprep.subr.bf16.mxu0 %v255
    %283 = vmatpush1.bf16.msra.mxu0 %v254
    %284 = vmatprep.subr.bf16.mxu0 %v257
    %285 = vmatpush1.bf16.msra.mxu0 %v256
    %286 = vmatprep.subr.bf16.mxu0 %v259
    %287 = vmatpush1.bf16.msra.mxu0 %v258
    %288 = vmatprep.subr.bf16.mxu0 %v261
    %289 = vmatpush1.bf16.msra.mxu0 %v260
    %290 = vmatprep.subr.bf16.mxu0 %v263
    %291 = vmatpush1.bf16.msra.mxu0 %v262
    %292 = vmatprep.subr.bf16.mxu0 0
    %293 = vmatpush1.bf16.msra.mxu0 0
    %294 = vmatprep.subr.bf16.mxu0 0
    %295 = vmatpush1.bf16.msra.mxu0 0
    %296 = vmatprep.subr.bf16.mxu0 0
    %297 = vmatpush1.bf16.msra.mxu0 0
    %298 = vmatprep.subr.bf16.mxu0 0
    %299 = vmatpush1.bf16.msra.mxu0 0
    %300 = vmatprep.subr.bf16.mxu0 0
    %301 = vmatpush1.bf16.msra.mxu0 0
    %302 = vmatprep.subr.bf16.mxu0 0
    %303 = vmatpush1.bf16.msra.mxu0 0
    %304 = vmatprep.subr.bf16.mxu0 0
    %305 = vmatpush1.bf16.msra.mxu0 0
    %306 = vmatprep.subr.bf16.mxu0 0
    %307 = vmatpush1.bf16.msra.mxu0 0
    %308 = vmatprep.mubr.bf16.mxu0 0
    %309 = vmatmul.mubr.bf16.gmra.mrb[0].mxu0 %v247
    %v310 = vpop.f32.mrb[0].mxu0
    %v311 = vadd.f32 %v269, %v310
    %v312 = vpop.f32.mrb[0].mxu0
    %v313 = vadd.f32 %v273, %v312
    %v314 = vpop.f32.mrb[0].mxu0
    %v315 = vpop.f32.mrb[0].mxu0
    %316 = vdwg.mxu0
    %v317 = vld [vmem:[#allocation8 + $0x3] sm:$0x3]
    %v318 = vld [vmem:[#allocation8 + $0x5] sm:$0x3]
    %v319 = vrot.slane %v311, 4
    %v320 = vadd.f32 %v311, %v319
    %v321 = vrot.slane %v320, 2
    %v322 = vadd.f32 %v320, %v321
    %v323 = vrot.slane %v322, 1
    %v324 = vadd.f32 %v322, %v323
    %v325 = vrot.slane %v313, 4
    %v326 = vadd.f32 %v313, %v325
    %v327 = vrot.slane %v326, 2
    %v328 = vadd.f32 %v326, %v327
    %v329 = vrot.slane %v328, 1
    %v330 = vadd.f32 %v328, %v329
    %v331 = vrcp.pop 8.0
    %v332 = vmul.f32 %v324, %v331
    %v333 = vmul.f32 %v330, %v331
    %v334 = vmul.f32 %v311, %v311
    %v335 = vmul.f32 %v313, %v313
    %v336 = vrot.slane %v334, 4
    %v337 = vadd.f32 %v334, %v336
    %v338 = vrot.slane %v337, 2
    %v339 = vadd.f32 %v337, %v338
    %v340 = vrot.slane %v339, 1
    %v341 = vadd.f32 %v339, %v340
    %v342 = vrot.slane %v335, 4
    %v343 = vadd.f32 %v335, %v342
    %v344 = vrot.slane %v343, 2
    %v345 = vadd.f32 %v343, %v344
    %v346 = vrot.slane %v345, 1
    %v347 = vadd.f32 %v345, %v346
    %v348 = vmul.f32 %v341, %v331
    %v349 = vmul.f32 %v347, %v331
    %v350 = vmul.f32 %v332, %v332
    %v351 = vmul.f32 %v333, %v333
    %v352 = vsub.f32 %v348, %v350
    %v353 = vsub.f32 %v349, %v351
    %v354 = vadd.f32 %v352, 0.8
    %v355 = vadd.f32 %v353, 0.8
    %v356 = vrsqrt.pop %v354
    %v357 = vrsqrt.pop %v355
    %v360 = vcombine.low %v356, %v357
    %v362 = vunpack.c.l.s4 1966171168
    %v363 = vunpack.c.0.s8 %v362
    %v364 = vlaneseq
    %v365 = vshrl.u32 %v364, 7
    %v366 = vsub.s32 %v363, %v365
    %v367 = vrot.slane %v360, %v366
    %v369 = vunpack.c.l.s4 1966171168
    %v370 = vunpack.c.0.s8 %v369
    %v371 = vlaneseq
    %v372 = vshrl.u32 %v371, 7
    %v373 = vsub.s32 %v370, %v372
    %v374 = vrot.slane %v367, %v373
    %v376 = vmul.f32 %v317, %v374
    %v378 = vlaneseq
    %v379 = vshrl.u32 %v378, 7
    %v380 = vsub.s32 0, %v379
    %v381 = vrot.slane %v376, %v380
    %v382 = vlaneseq
    %v383 = vshrl.u32 %v382, 7
    %v384 = vsub.s32 1, %v383
    %v385 = vrot.slane %v376, %v384
    %v388 = vmul.f32 %v332, %v381
    %v389 = vmul.f32 %v333, %v385
    %v392 = vcombine.low %v388, %v389
    %v394 = vunpack.c.l.s4 1966171168
    %v395 = vunpack.c.0.s8 %v394
    %v396 = vlaneseq
    %v397 = vshrl.u32 %v396, 7
    %v398 = vsub.s32 %v395, %v397
    %v399 = vrot.slane %v392, %v398
    %v401 = vunpack.c.l.s4 1966171168
    %v402 = vunpack.c.0.s8 %v401
    %v403 = vlaneseq
    %v404 = vshrl.u32 %v403, 7
    %v405 = vsub.s32 %v402, %v404
    %v406 = vrot.slane %v399, %v405
    %v408 = vsub.f32 %v318, %v406
    %v409 = vmul.f32 %v311, %v381
    %v410 = vmul.f32 %v313, %v385
    %v412 = vlaneseq
    %v413 = vshrl.u32 %v412, 7
    %v414 = vsub.s32 0, %v413
    %v415 = vrot.slane %v408, %v414
    %v416 = vlaneseq
    %v417 = vshrl.u32 %v416, 7
    %v418 = vsub.s32 1, %v417
    %v419 = vrot.slane %v408, %v418
    %v422 = vadd.f32 %v409, %v415
    %v423 = vadd.f32 %v410, %v419
    %vm424 = vcmp.gt.f32.partialorder %v422, 0.0
    %vm425 = vcmp.gt.f32.partialorder %v423, 0.0
    %v426 = vmul.f32 %v422, 0.2
    %v427 = vmul.f32 %v423, 0.2
    %v428 = vsel %vm424, %v422, %v426
    %v429 = vsel %vm425, %v423, %v427
    %s430 = smul.u32 4, 32
    %s431 = smul.u32 %s430, 4
    %s432 = sshll.u32 %s431, 4
    %433 = dma.done %s76, %s432
    %v434 = vpack.c.bf16 %v428, %v428
    %v435 = vpack.c.bf16 %v429, %v429
    %v436 = vld [vmem:[#allocation4] sm:$0xff]
    %v437 = vld [vmem:[#allocation4 + $0x8] sm:$0xff]
    %v438 = vld [vmem:[#allocation4 + $0x10] sm:$0xff]
    %v439 = vld [vmem:[#allocation4 + $0x18] sm:$0xff]
    %v440 = vld [vmem:[#allocation4 + $0x20] sm:$0xff]
    %v441 = vld [vmem:[#allocation4 + $0x28] sm:$0xff]
    %v442 = vld [vmem:[#allocation4 + $0x30] sm:$0xff]
    %v443 = vld [vmem:[#allocation4 + $0x38] sm:$0xff]
    %v444 = vld [vmem:[#allocation4 + $0x40] sm:$0xff]
    %v445 = vld [vmem:[#allocation4 + $0x48] sm:$0xff]
    %v446 = vld [vmem:[#allocation4 + $0x50] sm:$0xff]
    %v447 = vld [vmem:[#allocation4 + $0x58] sm:$0xff]
    %v448 = vld [vmem:[#allocation4 + $0x60] sm:$0xff]
    %v449 = vld [vmem:[#allocation4 + $0x68] sm:$0xff]
    %v450 = vld [vmem:[#allocation4 + $0x70] sm:$0xff]
    %v451 = vld [vmem:[#allocation4 + $0x78] sm:$0xff]
    %v452 = vld [vmem:[#allocation4 + $0x80] sm:$0xff]
    %v453 = vld [vmem:[#allocation4 + $0x88] sm:$0xff]
    %v454 = vld [vmem:[#allocation4 + $0x90] sm:$0xff]
    %v455 = vld [vmem:[#allocation4 + $0x98] sm:$0xff]
    %v456 = vld [vmem:[#allocation4 + $0xa0] sm:$0xff]
    %v457 = vld [vmem:[#allocation4 + $0xa8] sm:$0xff]
    %v458 = vld [vmem:[#allocation4 + $0xb0] sm:$0xff]
    %v459 = vld [vmem:[#allocation4 + $0xb8] sm:$0xff]
    %v460 = vld [vmem:[#allocation4 + $0xc0] sm:$0xff]
    %v461 = vld [vmem:[#allocation4 + $0xc8] sm:$0xff]
    %v462 = vld [vmem:[#allocation4 + $0xd0] sm:$0xff]
    %v463 = vld [vmem:[#allocation4 + $0xd8] sm:$0xff]
    %v464 = vld [vmem:[#allocation4 + $0xe0] sm:$0xff]
    %v465 = vld [vmem:[#allocation4 + $0xe8] sm:$0xff]
    %v466 = vld [vmem:[#allocation4 + $0xf0] sm:$0xff]
    %v467 = vld [vmem:[#allocation4 + $0xf8] sm:$0xff]
    %v468 = vld [vmem:[#allocation4 + $0x100] sm:$0xff]
    %v469 = vld [vmem:[#allocation4 + $0x108] sm:$0xff]
    %v470 = vld [vmem:[#allocation4 + $0x110] sm:$0xff]
    %v471 = vld [vmem:[#allocation4 + $0x118] sm:$0xff]
    %v472 = vld [vmem:[#allocation4 + $0x120] sm:$0xff]
    %v473 = vld [vmem:[#allocation4 + $0x128] sm:$0xff]
    %v474 = vld [vmem:[#allocation4 + $0x130] sm:$0xff]
    %v475 = vld [vmem:[#allocation4 + $0x138] sm:$0xff]
    %v476 = vld [vmem:[#allocation4 + $0x140] sm:$0xff]
    %v477 = vld [vmem:[#allocation4 + $0x148] sm:$0xff]
    %v478 = vld [vmem:[#allocation4 + $0x150] sm:$0xff]
    %v479 = vld [vmem:[#allocation4 + $0x158] sm:$0xff]
    %v480 = vld [vmem:[#allocation4 + $0x160] sm:$0xff]
    %v481 = vld [vmem:[#allocation4 + $0x168] sm:$0xff]
    %v482 = vld [vmem:[#allocation4 + $0x170] sm:$0xff]
    %v483 = vld [vmem:[#allocation4 + $0x178] sm:$0xff]
    %v484 = vld [vmem:[#allocation4 + $0x180] sm:$0xff]
    %v485 = vld [vmem:[#allocation4 + $0x188] sm:$0xff]
    %v486 = vld [vmem:[#allocation4 + $0x190] sm:$0xff]
    %v487 = vld [vmem:[#allocation4 + $0x198] sm:$0xff]
    %v488 = vld [vmem:[#allocation4 + $0x1a0] sm:$0xff]
    %v489 = vld [vmem:[#allocation4 + $0x1a8] sm:$0xff]
    %v490 = vld [vmem:[#allocation4 + $0x1b0] sm:$0xff]
    %v491 = vld [vmem:[#allocation4 + $0x1b8] sm:$0xff]
    %v492 = vld [vmem:[#allocation4 + $0x1c0] sm:$0xff]
    %v493 = vld [vmem:[#allocation4 + $0x1c8] sm:$0xff]
    %v494 = vld [vmem:[#allocation4 + $0x1d0] sm:$0xff]
    %v495 = vld [vmem:[#allocation4 + $0x1d8] sm:$0xff]
    %v496 = vld [vmem:[#allocation4 + $0x1e0] sm:$0xff]
    %v497 = vld [vmem:[#allocation4 + $0x1e8] sm:$0xff]
    %v498 = vld [vmem:[#allocation4 + $0x1f0] sm:$0xff]
    %v499 = vld [vmem:[#allocation4 + $0x1f8] sm:$0xff]
    %v500 = vld [vmem:[#allocation8 + $0x7] sm:$0xf]
    %v502 = vlaneseq
    %v503 = vshrl.u32 %v502, 7
    %v504 = vsub.s32 0, %v503
    %v505 = vrot.slane %v500, %v504
    %v506 = vlaneseq
    %v507 = vshrl.u32 %v506, 7
    %v508 = vsub.s32 1, %v507
    %v509 = vrot.slane %v500, %v508
    %v510 = vlaneseq
    %v511 = vshrl.u32 %v510, 7
    %v512 = vsub.s32 2, %v511
    %v513 = vrot.slane %v500, %v512
    %v514 = vlaneseq
    %v515 = vshrl.u32 %v514, 7
    %v516 = vsub.s32 3, %v515
    %v517 = vrot.slane %v500, %v516
    %522 = vmatprep.subr.bf16.mxu0 %v437
    %523 = vmatpush1.bf16.msra.mxu0 %v436
    %524 = vmatprep.subr.bf16.mxu0 %v441
    %525 = vmatpush1.bf16.msra.mxu0 %v440
    %526 = vmatprep.subr.bf16.mxu0 %v445
    %527 = vmatpush1.bf16.msra.mxu0 %v444
    %528 = vmatprep.subr.bf16.mxu0 %v449
    %529 = vmatpush1.bf16.msra.mxu0 %v448
    %530 = vmatprep.subr.bf16.mxu0 %v453
    %531 = vmatpush1.bf16.msra.mxu0 %v452
    %532 = vmatprep.subr.bf16.mxu0 %v457
    %533 = vmatpush1.bf16.msra.mxu0 %v456
    %534 = vmatprep.subr.bf16.mxu0 %v461
    %535 = vmatpush1.bf16.msra.mxu0 %v460
    %536 = vmatprep.subr.bf16.mxu0 %v465
    %537 = vmatpush1.bf16.msra.mxu0 %v464
    %538 = vmatprep.subr.bf16.mxu0 %v469
    %539 = vmatpush1.bf16.msra.mxu0 %v468
    %540 = vmatprep.subr.bf16.mxu0 %v473
    %541 = vmatpush1.bf16.msra.mxu0 %v472
    %542 = vmatprep.subr.bf16.mxu0 %v477
    %543 = vmatpush1.bf16.msra.mxu0 %v476
    %544 = vmatprep.subr.bf16.mxu0 %v481
    %545 = vmatpush1.bf16.msra.mxu0 %v480
    %546 = vmatprep.subr.bf16.mxu0 %v485
    %547 = vmatpush1.bf16.msra.mxu0 %v484
    %548 = vmatprep.subr.bf16.mxu0 %v489
    %549 = vmatpush1.bf16.msra.mxu0 %v488
    %550 = vmatprep.subr.bf16.mxu0 %v493
    %551 = vmatpush1.bf16.msra.mxu0 %v492
    %552 = vmatprep.subr.bf16.mxu0 %v497
    %553 = vmatpush1.bf16.msra.mxu0 %v496
    %554 = vmatprep.mubr.bf16.mxu0 %v435
    %555 = vmatmul.mubr.bf16.gmra.mrb[0].mxu0 %v434
    %v556 = vpop.f32.mrb[0].mxu0
    %v557 = vadd.f32 %v505, %v556
    %v558 = vpop.f32.mrb[0].mxu0
    %v559 = vadd.f32 %v509, %v558
    %v560 = vpop.f32.mrb[0].mxu0
    %v561 = vpop.f32.mrb[0].mxu0
    %562 = vdwg.mxu0
    %563 = vmatprep.subr.bf16.mxu0 %v439
    %564 = vmatpush1.bf16.msra.mxu0 %v438
    %565 = vmatprep.subr.bf16.mxu0 %v443
    %566 = vmatpush1.bf16.msra.mxu0 %v442
    %567 = vmatprep.subr.bf16.mxu0 %v447
    %568 = vmatpush1.bf16.msra.mxu0 %v446
    %569 = vmatprep.subr.bf16.mxu0 %v451
    %570 = vmatpush1.bf16.msra.mxu0 %v450
    %571 = vmatprep.subr.bf16.mxu0 %v455
    %572 = vmatpush1.bf16.msra.mxu0 %v454
    %573 = vmatprep.subr.bf16.mxu0 %v459
    %574 = vmatpush1.bf16.msra.mxu0 %v458
    %575 = vmatprep.subr.bf16.mxu0 %v463
    %576 = vmatpush1.bf16.msra.mxu0 %v462
    %577 = vmatprep.subr.bf16.mxu0 %v467
    %578 = vmatpush1.bf16.msra.mxu0 %v466
    %579 = vmatprep.subr.bf16.mxu0 %v471
    %580 = vmatpush1.bf16.msra.mxu0 %v470
    %581 = vmatprep.subr.bf16.mxu0 %v475
    %582 = vmatpush1.bf16.msra.mxu0 %v474
    %583 = vmatprep.subr.bf16.mxu0 %v479
    %584 = vmatpush1.bf16.msra.mxu0 %v478
    %585 = vmatprep.subr.bf16.mxu0 %v483
    %586 = vmatpush1.bf16.msra.mxu0 %v482
    %587 = vmatprep.subr.bf16.mxu0 %v487
    %588 = vmatpush1.bf16.msra.mxu0 %v486
    %589 = vmatprep.subr.bf16.mxu0 %v491
    %590 = vmatpush1.bf16.msra.mxu0 %v490
    %591 = vmatprep.subr.bf16.mxu0 %v495
    %592 = vmatpush1.bf16.msra.mxu0 %v494
    %593 = vmatprep.subr.bf16.mxu0 %v499
    %594 = vmatpush1.bf16.msra.mxu0 %v498
    %595 = vmatprep.mubr.bf16.mxu0 %v435
    %596 = vmatmul.mubr.bf16.gmra.mrb[0].mxu0 %v434
    %v597 = vpop.f32.mrb[0].mxu0
    %v598 = vadd.f32 %v513, %v597
    %v599 = vpop.f32.mrb[0].mxu0
    %v600 = vadd.f32 %v517, %v599
    %v601 = vpop.f32.mrb[0].mxu0
    %v602 = vpop.f32.mrb[0].mxu0
    %603 = vdwg.mxu0
    %v604 = vld [vmem:[#allocation8 + $0xb] sm:$0xf]
    %v605 = vld [vmem:[#allocation8 + $0xf] sm:$0xf]
    %v606 = vrot.slane %v557, 4
    %v607 = vadd.f32 %v557, %v606
    %v608 = vrot.slane %v607, 2
    %v609 = vadd.f32 %v607, %v608
    %v610 = vrot.slane %v609, 1
    %v611 = vadd.f32 %v609, %v610
    %v612 = vrot.slane %v559, 4
    %v613 = vadd.f32 %v559, %v612
    %v614 = vrot.slane %v613, 2
    %v615 = vadd.f32 %v613, %v614
    %v616 = vrot.slane %v615, 1
    %v617 = vadd.f32 %v615, %v616
    %v618 = vrot.slane %v598, 4
    %v619 = vadd.f32 %v598, %v618
    %v620 = vrot.slane %v619, 2
    %v621 = vadd.f32 %v619, %v620
    %v622 = vrot.slane %v621, 1
    %v623 = vadd.f32 %v621, %v622
    %v624 = vrot.slane %v600, 4
    %v625 = vadd.f32 %v600, %v624
    %v626 = vrot.slane %v625, 2
    %v627 = vadd.f32 %v625, %v626
    %v628 = vrot.slane %v627, 1
    %v629 = vadd.f32 %v627, %v628
    %v630 = vmul.f32 %v611, %v331
    %v631 = vmul.f32 %v617, %v331
    %v632 = vmul.f32 %v623, %v331
    %v633 = vmul.f32 %v629, %v331
    %v634 = vmul.f32 %v557, %v557
    %v635 = vmul.f32 %v559, %v559
    %v636 = vmul.f32 %v598, %v598
    %v637 = vmul.f32 %v600, %v600
    %v638 = vrot.slane %v634, 4
    %v639 = vadd.f32 %v634, %v638
    %v640 = vrot.slane %v639, 2
    %v641 = vadd.f32 %v639, %v640
    %v642 = vrot.slane %v641, 1
    %v643 = vadd.f32 %v641, %v642
    %v644 = vrot.slane %v635, 4
    %v645 = vadd.f32 %v635, %v644
    %v646 = vrot.slane %v645, 2
    %v647 = vadd.f32 %v645, %v646
    %v648 = vrot.slane %v647, 1
    %v649 = vadd.f32 %v647, %v648
    %v650 = vrot.slane %v636, 4
    %v651 = vadd.f32 %v636, %v650
    %v652 = vrot.slane %v651, 2
    %v653 = vadd.f32 %v651, %v652
    %v654 = vrot.slane %v653, 1
    %v655 = vadd.f32 %v653, %v654
    %v656 = vrot.slane %v637, 4
    %v657 = vadd.f32 %v637, %v656
    %v658 = vrot.slane %v657, 2
    %v659 = vadd.f32 %v657, %v658
    %v660 = vrot.slane %v659, 1
    %v661 = vadd.f32 %v659, %v660
    %v662 = vmul.f32 %v643, %v331
    %v663 = vmul.f32 %v649, %v331
    %v664 = vmul.f32 %v655, %v331
    %v665 = vmul.f32 %v661, %v331
    %v666 = vmul.f32 %v630, %v630
    %v667 = vmul.f32 %v631, %v631
    %v668 = vmul.f32 %v632, %v632
    %v669 = vmul.f32 %v633, %v633
    %v670 = vsub.f32 %v662, %v666
    %v671 = vsub.f32 %v663, %v667
    %v672 = vsub.f32 %v664, %v668
    %v673 = vsub.f32 %v665, %v669
    %v674 = vadd.f32 %v670, 0.8
    %v675 = vadd.f32 %v671, 0.8
    %v676 = vadd.f32 %v672, 0.8
    %v677 = vadd.f32 %v673, 0.8
    %v678 = vrsqrt.pop %v674
    %v679 = vrsqrt.pop %v675
    %v680 = vrsqrt.pop %v676
    %v681 = vrsqrt.pop %v677
    %v686 = vcombine.low %v678, %v679
    %v687 = vcombine.low %v680, %v681
    %v689 = vunpack.c.l.s4 1966171168
    %v690 = vunpack.c.0.s8 %v689
    %v691 = vlaneseq
    %v692 = vshrl.u32 %v691, 7
    %v693 = vsub.s32 %v690, %v692
    %v694 = vrot.slane %v686, %v693
    %v696 = vunpack.c.l.s4 1966171168
    %v697 = vunpack.c.0.s8 %v696
    %v698 = vlaneseq
    %v699 = vshrl.u32 %v698, 7
    %v700 = vsub.s32 %v697, %v699
    %v701 = vrot.slane %v687, %v700
    %v702 = vcombine.low %v694, %v701
    %v704 = vunpack.c.l.s4 1966171168
    %v705 = vunpack.c.0.s8 %v704
    %v706 = vlaneseq
    %v707 = vshrl.u32 %v706, 7
    %v708 = vsub.s32 %v705, %v707
    %v709 = vrot.slane %v702, %v708
    %v711 = vmul.f32 %v604, %v709
    %v713 = vlaneseq
    %v714 = vshrl.u32 %v713, 7
    %v715 = vsub.s32 0, %v714
    %v716 = vrot.slane %v711, %v715
    %v717 = vlaneseq
    %v718 = vshrl.u32 %v717, 7
    %v719 = vsub.s32 1, %v718
    %v720 = vrot.slane %v711, %v719
    %v721 = vlaneseq
    %v722 = vshrl.u32 %v721, 7
    %v723 = vsub.s32 2, %v722
    %v724 = vrot.slane %v711, %v723
    %v725 = vlaneseq
    %v726 = vshrl.u32 %v725, 7
    %v727 = vsub.s32 3, %v726
    %v728 = vrot.slane %v711, %v727
    %v733 = vmul.f32 %v630, %v716
    %v734 = vmul.f32 %v631, %v720
    %v735 = vmul.f32 %v632, %v724
    %v736 = vmul.f32 %v633, %v728
    %v741 = vcombine.low %v733, %v734
    %v742 = vcombine.low %v735, %v736
    %v744 = vunpack.c.l.s4 1966171168
    %v745 = vunpack.c.0.s8 %v744
    %v746 = vlaneseq
    %v747 = vshrl.u32 %v746, 7
    %v748 = vsub.s32 %v745, %v747
    %v749 = vrot.slane %v741, %v748
    %v751 = vunpack.c.l.s4 1966171168
    %v752 = vunpack.c.0.s8 %v751
    %v753 = vlaneseq
    %v754 = vshrl.u32 %v753, 7
    %v755 = vsub.s32 %v752, %v754
    %v756 = vrot.slane %v742, %v755
    %v757 = vcombine.low %v749, %v756
    %v759 = vunpack.c.l.s4 1966171168
    %v760 = vunpack.c.0.s8 %v759
    %v761 = vlaneseq
    %v762 = vshrl.u32 %v761, 7
    %v763 = vsub.s32 %v760, %v762
    %v764 = vrot.slane %v757, %v763
    %v766 = vsub.f32 %v605, %v764
    %v767 = vmul.f32 %v557, %v716
    %v768 = vmul.f32 %v559, %v720
    %v769 = vmul.f32 %v598, %v724
    %v770 = vmul.f32 %v600, %v728
    %v772 = vlaneseq
    %v773 = vshrl.u32 %v772, 7
    %v774 = vsub.s32 0, %v773
    %v775 = vrot.slane %v766, %v774
    %v776 = vlaneseq
    %v777 = vshrl.u32 %v776, 7
    %v778 = vsub.s32 1, %v777
    %v779 = vrot.slane %v766, %v778
    %v780 = vlaneseq
    %v781 = vshrl.u32 %v780, 7
    %v782 = vsub.s32 2, %v781
    %v783 = vrot.slane %v766, %v782
    %v784 = vlaneseq
    %v785 = vshrl.u32 %v784, 7
    %v786 = vsub.s32 3, %v785
    %v787 = vrot.slane %v766, %v786
    %v792 = vadd.f32 %v767, %v775
    %v793 = vadd.f32 %v768, %v779
    %v794 = vadd.f32 %v769, %v783
    %v795 = vadd.f32 %v770, %v787
    %vm796 = vcmp.gt.f32.partialorder %v792, 0.0
    %vm797 = vcmp.gt.f32.partialorder %v793, 0.0
    %vm798 = vcmp.gt.f32.partialorder %v794, 0.0
    %vm799 = vcmp.gt.f32.partialorder %v795, 0.0
    %v800 = vmul.f32 %v792, 0.2
    %v801 = vmul.f32 %v793, 0.2
    %v802 = vmul.f32 %v794, 0.2
    %v803 = vmul.f32 %v795, 0.2
    %v804 = vsel %vm796, %v792, %v800
    %v805 = vsel %vm797, %v793, %v801
    %v806 = vsel %vm798, %v794, %v802
    %v807 = vsel %vm799, %v795, %v803
    %s808 = smul.u32 4, 64
    %s809 = smul.u32 %s808, 8
    %s810 = sshll.u32 %s809, 4
    %811 = dma.done %s111, %s810
    %v812 = vpack.c.bf16 %v804, %v804
    %v813 = vpack.c.bf16 %v805, %v805
    %v814 = vpack.c.bf16 %v806, %v806
    %v815 = vpack.c.bf16 %v807, %v807
    %v816 = vld [vmem:[#allocation5] sm:$0xff]
    %v817 = vld [vmem:[#allocation5 + $0x8] sm:$0xff]
    %v818 = vld [vmem:[#allocation5 + $0x10] sm:$0xff]
    %v819 = vld [vmem:[#allocation5 + $0x18] sm:$0xff]
    %v820 = vld [vmem:[#allocation5 + $0x20] sm:$0xff]
    %v821 = vld [vmem:[#allocation5 + $0x28] sm:$0xff]
    %v822 = vld [vmem:[#allocation5 + $0x30] sm:$0xff]
    %v823 = vld [vmem:[#allocation5 + $0x38] sm:$0xff]
    %v824 = vld [vmem:[#allocation5 + $0x40] sm:$0xff]
    %v825 = vld [vmem:[#allocation5 + $0x48] sm:$0xff]
    %v826 = vld [vmem:[#allocation5 + $0x50] sm:$0xff]
    %v827 = vld [vmem:[#allocation5 + $0x58] sm:$0xff]
    %v828 = vld [vmem:[#allocation5 + $0x60] sm:$0xff]
    %v829 = vld [vmem:[#allocation5 + $0x68] sm:$0xff]
    %v830 = vld [vmem:[#allocation5 + $0x70] sm:$0xff]
    %v831 = vld [vmem:[#allocation5 + $0x78] sm:$0xff]
    %v832 = vld [vmem:[#allocation5 + $0x80] sm:$0xff]
    %v833 = vld [vmem:[#allocation5 + $0x88] sm:$0xff]
    %v834 = vld [vmem:[#allocation5 + $0x90] sm:$0xff]
    %v835 = vld [vmem:[#allocation5 + $0x98] sm:$0xff]
    %v836 = vld [vmem:[#allocation5 + $0xa0] sm:$0xff]
    %v837 = vld [vmem:[#allocation5 + $0xa8] sm:$0xff]
    %v838 = vld [vmem:[#allocation5 + $0xb0] sm:$0xff]
    %v839 = vld [vmem:[#allocation5 + $0xb8] sm:$0xff]
    %v840 = vld [vmem:[#allocation5 + $0xc0] sm:$0xff]
    %v841 = vld [vmem:[#allocation5 + $0xc8] sm:$0xff]
    %v842 = vld [vmem:[#allocation5 + $0xd0] sm:$0xff]
    %v843 = vld [vmem:[#allocation5 + $0xd8] sm:$0xff]
    %v844 = vld [vmem:[#allocation5 + $0xe0] sm:$0xff]
    %v845 = vld [vmem:[#allocation5 + $0xe8] sm:$0xff]
    %v846 = vld [vmem:[#allocation5 + $0xf0] sm:$0xff]
    %v847 = vld [vmem:[#allocation5 + $0xf8] sm:$0xff]
    %v848 = vld [vmem:[#allocation5 + $0x100] sm:$0xff]
    %v849 = vld [vmem:[#allocation5 + $0x108] sm:$0xff]
    %v850 = vld [vmem:[#allocation5 + $0x110] sm:$0xff]
    %v851 = vld [vmem:[#allocation5 + $0x118] sm:$0xff]
    %v852 = vld [vmem:[#allocation5 + $0x120] sm:$0xff]
    %v853 = vld [vmem:[#allocation5 + $0x128] sm:$0xff]
    %v854 = vld [vmem:[#allocation5 + $0x130] sm:$0xff]
    %v855 = vld [vmem:[#allocation5 + $0x138] sm:$0xff]
    %v856 = vld [vmem:[#allocation5 + $0x140] sm:$0xff]
    %v857 = vld [vmem:[#allocation5 + $0x148] sm:$0xff]
    %v858 = vld [vmem:[#allocation5 + $0x150] sm:$0xff]
    %v859 = vld [vmem:[#allocation5 + $0x158] sm:$0xff]
    %v860 = vld [vmem:[#allocation5 + $0x160] sm:$0xff]
    %v861 = vld [vmem:[#allocation5 + $0x168] sm:$0xff]
    %v862 = vld [vmem:[#allocation5 + $0x170] sm:$0xff]
    %v863 = vld [vmem:[#allocation5 + $0x178] sm:$0xff]
    %v864 = vld [vmem:[#allocation5 + $0x180] sm:$0xff]
    %v865 = vld [vmem:[#allocation5 + $0x188] sm:$0xff]
    %v866 = vld [vmem:[#allocation5 + $0x190] sm:$0xff]
    %v867 = vld [vmem:[#allocation5 + $0x198] sm:$0xff]
    %v868 = vld [vmem:[#allocation5 + $0x1a0] sm:$0xff]
    %v869 = vld [vmem:[#allocation5 + $0x1a8] sm:$0xff]
    %v870 = vld [vmem:[#allocation5 + $0x1b0] sm:$0xff]
    %v871 = vld [vmem:[#allocation5 + $0x1b8] sm:$0xff]
    %v872 = vld [vmem:[#allocation5 + $0x1c0] sm:$0xff]
    %v873 = vld [vmem:[#allocation5 + $0x1c8] sm:$0xff]
    %v874 = vld [vmem:[#allocation5 + $0x1d0] sm:$0xff]
    %v875 = vld [vmem:[#allocation5 + $0x1d8] sm:$0xff]
    %v876 = vld [vmem:[#allocation5 + $0x1e0] sm:$0xff]
    %v877 = vld [vmem:[#allocation5 + $0x1e8] sm:$0xff]
    %v878 = vld [vmem:[#allocation5 + $0x1f0] sm:$0xff]
    %v879 = vld [vmem:[#allocation5 + $0x1f8] sm:$0xff]
    %v880 = vld [vmem:[#allocation5 + $0x200] sm:$0xff]
    %v881 = vld [vmem:[#allocation5 + $0x208] sm:$0xff]
    %v882 = vld [vmem:[#allocation5 + $0x210] sm:$0xff]
    %v883 = vld [vmem:[#allocation5 + $0x218] sm:$0xff]
    %v884 = vld [vmem:[#allocation5 + $0x220] sm:$0xff]
    %v885 = vld [vmem:[#allocation5 + $0x228] sm:$0xff]
    %v886 = vld [vmem:[#allocation5 + $0x230] sm:$0xff]
    %v887 = vld [vmem:[#allocation5 + $0x238] sm:$0xff]
    %v888 = vld [vmem:[#allocation5 + $0x240] sm:$0xff]
    %v889 = vld [vmem:[#allocation5 + $0x248] sm:$0xff]
    %v890 = vld [vmem:[#allocation5 + $0x250] sm:$0xff]
    %v891 = vld [vmem:[#allocation5 + $0x258] sm:$0xff]
    %v892 = vld [vmem:[#allocation5 + $0x260] sm:$0xff]
    %v893 = vld [vmem:[#allocation5 + $0x268] sm:$0xff]
    %v894 = vld [vmem:[#allocation5 + $0x270] sm:$0xff]
    %v895 = vld [vmem:[#allocation5 + $0x278] sm:$0xff]
    %v896 = vld [vmem:[#allocation5 + $0x280] sm:$0xff]
    %v897 = vld [vmem:[#allocation5 + $0x288] sm:$0xff]
    %v898 = vld [vmem:[#allocation5 + $0x290] sm:$0xff]
    %v899 = vld [vmem:[#allocation5 + $0x298] sm:$0xff]
    %v900 = vld [vmem:[#allocation5 + $0x2a0] sm:$0xff]
    %v901 = vld [vmem:[#allocation5 + $0x2a8] sm:$0xff]
    %v902 = vld [vmem:[#allocation5 + $0x2b0] sm:$0xff]
    %v903 = vld [vmem:[#allocation5 + $0x2b8] sm:$0xff]
    %v904 = vld [vmem:[#allocation5 + $0x2c0] sm:$0xff]
    %v905 = vld [vmem:[#allocation5 + $0x2c8] sm:$0xff]
    %v906 = vld [vmem:[#allocation5 + $0x2d0] sm:$0xff]
    %v907 = vld [vmem:[#allocation5 + $0x2d8] sm:$0xff]
    %v908 = vld [vmem:[#allocation5 + $0x2e0] sm:$0xff]
    %v909 = vld [vmem:[#allocation5 + $0x2e8] sm:$0xff]
    %v910 = vld [vmem:[#allocation5 + $0x2f0] sm:$0xff]
    %v911 = vld [vmem:[#allocation5 + $0x2f8] sm:$0xff]
    %v912 = vld [vmem:[#allocation5 + $0x300] sm:$0xff]
    %v913 = vld [vmem:[#allocation5 + $0x308] sm:$0xff]
    %v914 = vld [vmem:[#allocation5 + $0x310] sm:$0xff]
    %v915 = vld [vmem:[#allocation5 + $0x318] sm:$0xff]
    %v916 = vld [vmem:[#allocation5 + $0x320] sm:$0xff]
    %v917 = vld [vmem:[#allocation5 + $0x328] sm:$0xff]
    %v918 = vld [vmem:[#allocation5 + $0x330] sm:$0xff]
    %v919 = vld [vmem:[#allocation5 + $0x338] sm:$0xff]
    %v920 = vld [vmem:[#allocation5 + $0x340] sm:$0xff]
    %v921 = vld [vmem:[#allocation5 + $0x348] sm:$0xff]
    %v922 = vld [vmem:[#allocation5 + $0x350] sm:$0xff]
    %v923 = vld [vmem:[#allocation5 + $0x358] sm:$0xff]
    %v924 = vld [vmem:[#allocation5 + $0x360] sm:$0xff]
    %v925 = vld [vmem:[#allocation5 + $0x368] sm:$0xff]
    %v926 = vld [vmem:[#allocation5 + $0x370] sm:$0xff]
    %v927 = vld [vmem:[#allocation5 + $0x378] sm:$0xff]
    %v928 = vld [vmem:[#allocation5 + $0x380] sm:$0xff]
    %v929 = vld [vmem:[#allocation5 + $0x388] sm:$0xff]
    %v930 = vld [vmem:[#allocation5 + $0x390] sm:$0xff]
    %v931 = vld [vmem:[#allocation5 + $0x398] sm:$0xff]
    %v932 = vld [vmem:[#allocation5 + $0x3a0] sm:$0xff]
    %v933 = vld [vmem:[#allocation5 + $0x3a8] sm:$0xff]
    %v934 = vld [vmem:[#allocation5 + $0x3b0] sm:$0xff]
    %v935 = vld [vmem:[#allocation5 + $0x3b8] sm:$0xff]
    %v936 = vld [vmem:[#allocation5 + $0x3c0] sm:$0xff]
    %v937 = vld [vmem:[#allocation5 + $0x3c8] sm:$0xff]
    %v938 = vld [vmem:[#allocation5 + $0x3d0] sm:$0xff]
    %v939 = vld [vmem:[#allocation5 + $0x3d8] sm:$0xff]
    %v940 = vld [vmem:[#allocation5 + $0x3e0] sm:$0xff]
    %v941 = vld [vmem:[#allocation5 + $0x3e8] sm:$0xff]
    %v942 = vld [vmem:[#allocation5 + $0x3f0] sm:$0xff]
    %v943 = vld [vmem:[#allocation5 + $0x3f8] sm:$0xff]
    %v944 = vld [vmem:[#allocation5 + $0x400] sm:$0xff]
    %v945 = vld [vmem:[#allocation5 + $0x408] sm:$0xff]
    %v946 = vld [vmem:[#allocation5 + $0x410] sm:$0xff]
    %v947 = vld [vmem:[#allocation5 + $0x418] sm:$0xff]
    %v948 = vld [vmem:[#allocation5 + $0x420] sm:$0xff]
    %v949 = vld [vmem:[#allocation5 + $0x428] sm:$0xff]
    %v950 = vld [vmem:[#allocation5 + $0x430] sm:$0xff]
    %v951 = vld [vmem:[#allocation5 + $0x438] sm:$0xff]
    %v952 = vld [vmem:[#allocation5 + $0x440] sm:$0xff]
    %v953 = vld [vmem:[#allocation5 + $0x448] sm:$0xff]
    %v954 = vld [vmem:[#allocation5 + $0x450] sm:$0xff]
    %v955 = vld [vmem:[#allocation5 + $0x458] sm:$0xff]
    %v956 = vld [vmem:[#allocation5 + $0x460] sm:$0xff]
    %v957 = vld [vmem:[#allocation5 + $0x468] sm:$0xff]
    %v958 = vld [vmem:[#allocation5 + $0x470] sm:$0xff]
    %v959 = vld [vmem:[#allocation5 + $0x478] sm:$0xff]
    %v960 = vld [vmem:[#allocation5 + $0x480] sm:$0xff]
    %v961 = vld [vmem:[#allocation5 + $0x488] sm:$0xff]
    %v962 = vld [vmem:[#allocation5 + $0x490] sm:$0xff]
    %v963 = vld [vmem:[#allocation5 + $0x498] sm:$0xff]
    %v964 = vld [vmem:[#allocation5 + $0x4a0] sm:$0xff]
    %v965 = vld [vmem:[#allocation5 + $0x4a8] sm:$0xff]
    %v966 = vld [vmem:[#allocation5 + $0x4b0] sm:$0xff]
    %v967 = vld [vmem:[#allocation5 + $0x4b8] sm:$0xff]
    %v968 = vld [vmem:[#allocation5 + $0x4c0] sm:$0xff]
    %v969 = vld [vmem:[#allocation5 + $0x4c8] sm:$0xff]
    %v970 = vld [vmem:[#allocation5 + $0x4d0] sm:$0xff]
    %v971 = vld [vmem:[#allocation5 + $0x4d8] sm:$0xff]
    %v972 = vld [vmem:[#allocation5 + $0x4e0] sm:$0xff]
    %v973 = vld [vmem:[#allocation5 + $0x4e8] sm:$0xff]
    %v974 = vld [vmem:[#allocation5 + $0x4f0] sm:$0xff]
    %v975 = vld [vmem:[#allocation5 + $0x4f8] sm:$0xff]
    %v976 = vld [vmem:[#allocation5 + $0x500] sm:$0xff]
    %v977 = vld [vmem:[#allocation5 + $0x508] sm:$0xff]
    %v978 = vld [vmem:[#allocation5 + $0x510] sm:$0xff]
    %v979 = vld [vmem:[#allocation5 + $0x518] sm:$0xff]
    %v980 = vld [vmem:[#allocation5 + $0x520] sm:$0xff]
    %v981 = vld [vmem:[#allocation5 + $0x528] sm:$0xff]
    %v982 = vld [vmem:[#allocation5 + $0x530] sm:$0xff]
    %v983 = vld [vmem:[#allocation5 + $0x538] sm:$0xff]
    %v984 = vld [vmem:[#allocation5 + $0x540] sm:$0xff]
    %v985 = vld [vmem:[#allocation5 + $0x548] sm:$0xff]
    %v986 = vld [vmem:[#allocation5 + $0x550] sm:$0xff]
    %v987 = vld [vmem:[#allocation5 + $0x558] sm:$0xff]
    %v988 = vld [vmem:[#allocation5 + $0x560] sm:$0xff]
    %v989 = vld [vmem:[#allocation5 + $0x568] sm:$0xff]
    %v990 = vld [vmem:[#allocation5 + $0x570] sm:$0xff]
    %v991 = vld [vmem:[#allocation5 + $0x578] sm:$0xff]
    %v992 = vld [vmem:[#allocation5 + $0x580] sm:$0xff]
    %v993 = vld [vmem:[#allocation5 + $0x588] sm:$0xff]
    %v994 = vld [vmem:[#allocation5 + $0x590] sm:$0xff]
    %v995 = vld [vmem:[#allocation5 + $0x598] sm:$0xff]
    %v996 = vld [vmem:[#allocation5 + $0x5a0] sm:$0xff]
    %v997 = vld [vmem:[#allocation5 + $0x5a8] sm:$0xff]
    %v998 = vld [vmem:[#allocation5 + $0x5b0] sm:$0xff]
    %v999 = vld [vmem:[#allocation5 + $0x5b8] sm:$0xff]
    %v1000 = vld [vmem:[#allocation5 + $0x5c0] sm:$0xff]
    %v1001 = vld [vmem:[#allocation5 + $0x5c8] sm:$0xff]
    %v1002 = vld [vmem:[#allocation5 + $0x5d0] sm:$0xff]
    %v1003 = vld [vmem:[#allocation5 + $0x5d8] sm:$0xff]
    %v1004 = vld [vmem:[#allocation5 + $0x5e0] sm:$0xff]
    %v1005 = vld [vmem:[#allocation5 + $0x5e8] sm:$0xff]
    %v1006 = vld [vmem:[#allocation5 + $0x5f0] sm:$0xff]
    %v1007 = vld [vmem:[#allocation5 + $0x5f8] sm:$0xff]
    %v1008 = vld [vmem:[#allocation5 + $0x600] sm:$0xff]
    %v1009 = vld [vmem:[#allocation5 + $0x608] sm:$0xff]
    %v1010 = vld [vmem:[#allocation5 + $0x610] sm:$0xff]
    %v1011 = vld [vmem:[#allocation5 + $0x618] sm:$0xff]
    %v1012 = vld [vmem:[#allocation5 + $0x620] sm:$0xff]
    %v1013 = vld [vmem:[#allocation5 + $0x628] sm:$0xff]
    %v1014 = vld [vmem:[#allocation5 + $0x630] sm:$0xff]
    %v1015 = vld [vmem:[#allocation5 + $0x638] sm:$0xff]
    %v1016 = vld [vmem:[#allocation5 + $0x640] sm:$0xff]
    %v1017 = vld [vmem:[#allocation5 + $0x648] sm:$0xff]
    %v1018 = vld [vmem:[#allocation5 + $0x650] sm:$0xff]
    %v1019 = vld [vmem:[#allocation5 + $0x658] sm:$0xff]
    %v1020 = vld [vmem:[#allocation5 + $0x660] sm:$0xff]
    %v1021 = vld [vmem:[#allocation5 + $0x668] sm:$0xff]
    %v1022 = vld [vmem:[#allocation5 + $0x670] sm:$0xff]
    %v1023 = vld [vmem:[#allocation5 + $0x678] sm:$0xff]
    %v1024 = vld [vmem:[#allocation5 + $0x680] sm:$0xff]
    %v1025 = vld [vmem:[#allocation5 + $0x688] sm:$0xff]
    %v1026 = vld [vmem:[#allocation5 + $0x690] sm:$0xff]
    %v1027 = vld [vmem:[#allocation5 + $0x698] sm:$0xff]
    %v1028 = vld [vmem:[#allocation5 + $0x6a0] sm:$0xff]
    %v1029 = vld [vmem:[#allocation5 + $0x6a8] sm:$0xff]
    %v1030 = vld [vmem:[#allocation5 + $0x6b0] sm:$0xff]
    %v1031 = vld [vmem:[#allocation5 + $0x6b8] sm:$0xff]
    %v1032 = vld [vmem:[#allocation5 + $0x6c0] sm:$0xff]
    %v1033 = vld [vmem:[#allocation5 + $0x6c8] sm:$0xff]
    %v1034 = vld [vmem:[#allocation5 + $0x6d0] sm:$0xff]
    %v1035 = vld [vmem:[#allocation5 + $0x6d8] sm:$0xff]
    %v1036 = vld [vmem:[#allocation5 + $0x6e0] sm:$0xff]
    %v1037 = vld [vmem:[#allocation5 + $0x6e8] sm:$0xff]
    %v1038 = vld [vmem:[#allocation5 + $0x6f0] sm:$0xff]
    %v1039 = vld [vmem:[#allocation5 + $0x6f8] sm:$0xff]
    %v1040 = vld [vmem:[#allocation5 + $0x700] sm:$0xff]
    %v1041 = vld [vmem:[#allocation5 + $0x708] sm:$0xff]
    %v1042 = vld [vmem:[#allocation5 + $0x710] sm:$0xff]
    %v1043 = vld [vmem:[#allocation5 + $0x718] sm:$0xff]
    %v1044 = vld [vmem:[#allocation5 + $0x720] sm:$0xff]
    %v1045 = vld [vmem:[#allocation5 + $0x728] sm:$0xff]
    %v1046 = vld [vmem:[#allocation5 + $0x730] sm:$0xff]
    %v1047 = vld [vmem:[#allocation5 + $0x738] sm:$0xff]
    %v1048 = vld [vmem:[#allocation5 + $0x740] sm:$0xff]
    %v1049 = vld [vmem:[#allocation5 + $0x748] sm:$0xff]
    %v1050 = vld [vmem:[#allocation5 + $0x750] sm:$0xff]
    %v1051 = vld [vmem:[#allocation5 + $0x758] sm:$0xff]
    %v1052 = vld [vmem:[#allocation5 + $0x760] sm:$0xff]
    %v1053 = vld [vmem:[#allocation5 + $0x768] sm:$0xff]
    %v1054 = vld [vmem:[#allocation5 + $0x770] sm:$0xff]
    %v1055 = vld [vmem:[#allocation5 + $0x778] sm:$0xff]
    %v1056 = vld [vmem:[#allocation5 + $0x780] sm:$0xff]
    %v1057 = vld [vmem:[#allocation5 + $0x788] sm:$0xff]
    %v1058 = vld [vmem:[#allocation5 + $0x790] sm:$0xff]
    %v1059 = vld [vmem:[#allocation5 + $0x798] sm:$0xff]
    %v1060 = vld [vmem:[#allocation5 + $0x7a0] sm:$0xff]
    %v1061 = vld [vmem:[#allocation5 + $0x7a8] sm:$0xff]
    %v1062 = vld [vmem:[#allocation5 + $0x7b0] sm:$0xff]
    %v1063 = vld [vmem:[#allocation5 + $0x7b8] sm:$0xff]
    %v1064 = vld [vmem:[#allocation5 + $0x7c0] sm:$0xff]
    %v1065 = vld [vmem:[#allocation5 + $0x7c8] sm:$0xff]
    %v1066 = vld [vmem:[#allocation5 + $0x7d0] sm:$0xff]
    %v1067 = vld [vmem:[#allocation5 + $0x7d8] sm:$0xff]
    %v1068 = vld [vmem:[#allocation5 + $0x7e0] sm:$0xff]
    %v1069 = vld [vmem:[#allocation5 + $0x7e8] sm:$0xff]
    %v1070 = vld [vmem:[#allocation5 + $0x7f0] sm:$0xff]
    %v1071 = vld [vmem:[#allocation5 + $0x7f8] sm:$0xff]
    %v1072 = vld [vmem:[#allocation8 + $0x13] sm:$0xff]
    %v1074 = vlaneseq
    %v1075 = vshrl.u32 %v1074, 7
    %v1076 = vsub.s32 0, %v1075
    %v1077 = vrot.slane %v1072, %v1076
    %v1078 = vlaneseq
    %v1079 = vshrl.u32 %v1078, 7
    %v1080 = vsub.s32 1, %v1079
    %v1081 = vrot.slane %v1072, %v1080
    %v1082 = vlaneseq
    %v1083 = vshrl.u32 %v1082, 7
    %v1084 = vsub.s32 2, %v1083
    %v1085 = vrot.slane %v1072, %v1084
    %v1086 = vlaneseq
    %v1087 = vshrl.u32 %v1086, 7
    %v1088 = vsub.s32 3, %v1087
    %v1089 = vrot.slane %v1072, %v1088
    %v1090 = vlaneseq
    %v1091 = vshrl.u32 %v1090, 7
    %v1092 = vsub.s32 4, %v1091
    %v1093 = vrot.slane %v1072, %v1092
    %v1094 = vlaneseq
    %v1095 = vshrl.u32 %v1094, 7
    %v1096 = vsub.s32 5, %v1095
    %v1097 = vrot.slane %v1072, %v1096
    %v1098 = vlaneseq
    %v1099 = vshrl.u32 %v1098, 7
    %v1100 = vsub.s32 6, %v1099
    %v1101 = vrot.slane %v1072, %v1100
    %v1102 = vlaneseq
    %v1103 = vshrl.u32 %v1102, 7
    %v1104 = vsub.s32 7, %v1103
    %v1105 = vrot.slane %v1072, %v1104
    %1114 = vmatprep.subr.bf16.mxu0 %v817
    %1115 = vmatpush1.bf16.msra.mxu0 %v816
    %1116 = vmatprep.subr.bf16.mxu0 %v825
    %1117 = vmatpush1.bf16.msra.mxu0 %v824
    %1118 = vmatprep.subr.bf16.mxu0 %v833
    %1119 = vmatpush1.bf16.msra.mxu0 %v832
    %1120 = vmatprep.subr.bf16.mxu0 %v841
    %1121 = vmatpush1.bf16.msra.mxu0 %v840
    %1122 = vmatprep.subr.bf16.mxu0 %v849
    %1123 = vmatpush1.bf16.msra.mxu0 %v848
    %1124 = vmatprep.subr.bf16.mxu0 %v857
    %1125 = vmatpush1.bf16.msra.mxu0 %v856
    %1126 = vmatprep.subr.bf16.mxu0 %v865
    %1127 = vmatpush1.bf16.msra.mxu0 %v864
    %1128 = vmatprep.subr.bf16.mxu0 %v873
    %1129 = vmatpush1.bf16.msra.mxu0 %v872
    %1130 = vmatprep.subr.bf16.mxu0 %v881
    %1131 = vmatpush1.bf16.msra.mxu0 %v880
    %1132 = vmatprep.subr.bf16.mxu0 %v889
    %1133 = vmatpush1.bf16.msra.mxu0 %v888
    %1134 = vmatprep.subr.bf16.mxu0 %v897
    %1135 = vmatpush1.bf16.msra.mxu0 %v896
    %1136 = vmatprep.subr.bf16.mxu0 %v905
    %1137 = vmatpush1.bf16.msra.mxu0 %v904
    %1138 = vmatprep.subr.bf16.mxu0 %v913
    %1139 = vmatpush1.bf16.msra.mxu0 %v912
    %1140 = vmatprep.subr.bf16.mxu0 %v921
    %1141 = vmatpush1.bf16.msra.mxu0 %v920
    %1142 = vmatprep.subr.bf16.mxu0 %v929
    %1143 = vmatpush1.bf16.msra.mxu0 %v928
    %1144 = vmatprep.subr.bf16.mxu0 %v937
    %1145 = vmatpush1.bf16.msra.mxu0 %v936
    %1146 = vmatprep.mubr.bf16.mxu0 %v813
    %1147 = vmatmul.mubr.bf16.gmra.mrb[0].mxu0 %v812
    %v1148 = vpop.f32.mrb[0].mxu0
    %v1149 = vadd.f32 %v1077, %v1148
    %v1150 = vpop.f32.mrb[0].mxu0
    %v1151 = vadd.f32 %v1081, %v1150
    %v1152 = vpop.f32.mrb[0].mxu0
    %v1153 = vpop.f32.mrb[0].mxu0
    %1154 = vdwg.mxu0
    %1155 = vmatprep.subr.bf16.mxu0 %v945
    %1156 = vmatpush1.bf16.msra.mxu0 %v944
    %1157 = vmatprep.subr.bf16.mxu0 %v953
    %1158 = vmatpush1.bf16.msra.mxu0 %v952
    %1159 = vmatprep.subr.bf16.mxu0 %v961
    %1160 = vmatpush1.bf16.msra.mxu0 %v960
    %1161 = vmatprep.subr.bf16.mxu0 %v969
    %1162 = vmatpush1.bf16.msra.mxu0 %v968
    %1163 = vmatprep.subr.bf16.mxu0 %v977
    %1164 = vmatpush1.bf16.msra.mxu0 %v976
    %1165 = vmatprep.subr.bf16.mxu0 %v985
    %1166 = vmatpush1.bf16.msra.mxu0 %v984
    %1167 = vmatprep.subr.bf16.mxu0 %v993
    %1168 = vmatpush1.bf16.msra.mxu0 %v992
    %1169 = vmatprep.subr.bf16.mxu0 %v1001
    %1170 = vmatpush1.bf16.msra.mxu0 %v1000
    %1171 = vmatprep.subr.bf16.mxu0 %v1009
    %1172 = vmatpush1.bf16.msra.mxu0 %v1008
    %1173 = vmatprep.subr.bf16.mxu0 %v1017
    %1174 = vmatpush1.bf16.msra.mxu0 %v1016
    %1175 = vmatprep.subr.bf16.mxu0 %v1025
    %1176 = vmatpush1.bf16.msra.mxu0 %v1024
    %1177 = vmatprep.subr.bf16.mxu0 %v1033
    %1178 = vmatpush1.bf16.msra.mxu0 %v1032
    %1179 = vmatprep.subr.bf16.mxu0 %v1041
    %1180 = vmatpush1.bf16.msra.mxu0 %v1040
    %1181 = vmatprep.subr.bf16.mxu0 %v1049
    %1182 = vmatpush1.bf16.msra.mxu0 %v1048
    %1183 = vmatprep.subr.bf16.mxu0 %v1057
    %1184 = vmatpush1.bf16.msra.mxu0 %v1056
    %1185 = vmatprep.subr.bf16.mxu0 %v1065
    %1186 = vmatpush1.bf16.msra.mxu0 %v1064
    %1187 = vmatprep.mubr.bf16.mxu0 %v815
    %1188 = vmatmul.mubr.bf16.gmra.mrb[0].mxu0 %v814
    %v1189 = vpop.f32.mrb[0].mxu0
    %v1190 = vadd.f32 %v1149, %v1189
    %v1191 = vpop.f32.mrb[0].mxu0
    %v1192 = vadd.f32 %v1151, %v1191
    %v1193 = vpop.f32.mrb[0].mxu0
    %v1194 = vpop.f32.mrb[0].mxu0
    %1195 = vdwg.mxu0
    %1196 = vmatprep.subr.bf16.mxu0 %v819
    %1197 = vmatpush1.bf16.msra.mxu0 %v818
    %1198 = vmatprep.subr.bf16.mxu0 %v827
    %1199 = vmatpush1.bf16.msra.mxu0 %v826
    %1200 = vmatprep.subr.bf16.mxu0 %v835
    %1201 = vmatpush1.bf16.msra.mxu0 %v834
    %1202 = vmatprep.subr.bf16.mxu0 %v843
    %1203 = vmatpush1.bf16.msra.mxu0 %v842
    %1204 = vmatprep.subr.bf16.mxu0 %v851
    %1205 = vmatpush1.bf16.msra.mxu0 %v850
    %1206 = vmatprep.subr.bf16.mxu0 %v859
    %1207 = vmatpush1.bf16.msra.mxu0 %v858
    %1208 = vmatprep.subr.bf16.mxu0 %v867
    %1209 = vmatpush1.bf16.msra.mxu0 %v866
    %1210 = vmatprep.subr.bf16.mxu0 %v875
    %1211 = vmatpush1.bf16.msra.mxu0 %v874
    %1212 = vmatprep.subr.bf16.mxu0 %v883
    %1213 = vmatpush1.bf16.msra.mxu0 %v882
    %1214 = vmatprep.subr.bf16.mxu0 %v891
    %1215 = vmatpush1.bf16.msra.mxu0 %v890
    %1216 = vmatprep.subr.bf16.mxu0 %v899
    %1217 = vmatpush1.bf16.msra.mxu0 %v898
    %1218 = vmatprep.subr.bf16.mxu0 %v907
    %1219 = vmatpush1.bf16.msra.mxu0 %v906
    %1220 = vmatprep.subr.bf16.mxu0 %v915
    %1221 = vmatpush1.bf16.msra.mxu0 %v914
    %1222 = vmatprep.subr.bf16.mxu0 %v923
    %1223 = vmatpush1.bf16.msra.mxu0 %v922
    %1224 = vmatprep.subr.bf16.mxu0 %v931
    %1225 = vmatpush1.bf16.msra.mxu0 %v930
    %1226 = vmatprep.subr.bf16.mxu0 %v939
    %1227 = vmatpush1.bf16.msra.mxu0 %v938
    %1228 = vmatprep.mubr.bf16.mxu0 %v813
    %1229 = vmatmul.mubr.bf16.gmra.mrb[0].mxu0 %v812
    %v1230 = vpop.f32.mrb[0].mxu0
    %v1231 = vadd.f32 %v1085, %v1230
    %v1232 = vpop.f32.mrb[0].mxu0
    %v1233 = vadd.f32 %v1089, %v1232
    %v1234 = vpop.f32.mrb[0].mxu0
    %v1235 = vpop.f32.mrb[0].mxu0
    %1236 = vdwg.mxu0
    %1237 = vmatprep.subr.bf16.mxu0 %v947
    %1238 = vmatpush1.bf16.msra.mxu0 %v946
    %1239 = vmatprep.subr.bf16.mxu0 %v955
    %1240 = vmatpush1.bf16.msra.mxu0 %v954
    %1241 = vmatprep.subr.bf16.mxu0 %v963
    %1242 = vmatpush1.bf16.msra.mxu0 %v962
    %1243 = vmatprep.subr.bf16.mxu0 %v971
    %1244 = vmatpush1.bf16.msra.mxu0 %v970
    %1245 = vmatprep.subr.bf16.mxu0 %v979
    %1246 = vmatpush1.bf16.msra.mxu0 %v978
    %1247 = vmatprep.subr.bf16.mxu0 %v987
    %1248 = vmatpush1.bf16.msra.mxu0 %v986
    %1249 = vmatprep.subr.bf16.mxu0 %v995
    %1250 = vmatpush1.bf16.msra.mxu0 %v994
    %1251 = vmatprep.subr.bf16.mxu0 %v1003
    %1252 = vmatpush1.bf16.msra.mxu0 %v1002
    %1253 = vmatprep.subr.bf16.mxu0 %v1011
    %1254 = vmatpush1.bf16.msra.mxu0 %v1010
    %1255 = vmatprep.subr.bf16.mxu0 %v1019
    %1256 = vmatpush1.bf16.msra.mxu0 %v1018
    %1257 = vmatprep.subr.bf16.mxu0 %v1027
    %1258 = vmatpush1.bf16.msra.mxu0 %v1026
    %1259 = vmatprep.subr.bf16.mxu0 %v1035
    %1260 = vmatpush1.bf16.msra.mxu0 %v1034
    %1261 = vmatprep.subr.bf16.mxu0 %v1043
    %1262 = vmatpush1.bf16.msra.mxu0 %v1042
    %1263 = vmatprep.subr.bf16.mxu0 %v1051
    %1264 = vmatpush1.bf16.msra.mxu0 %v1050
    %1265 = vmatprep.subr.bf16.mxu0 %v1059
    %1266 = vmatpush1.bf16.msra.mxu0 %v1058
    %1267 = vmatprep.subr.bf16.mxu0 %v1067
    %1268 = vmatpush1.bf16.msra.mxu0 %v1066
    %1269 = vmatprep.mubr.bf16.mxu0 %v815
    %1270 = vmatmul.mubr.bf16.gmra.mrb[0].mxu0 %v814
    %v1271 = vpop.f32.mrb[0].mxu0
    %v1272 = vadd.f32 %v1231, %v1271
    %v1273 = vpop.f32.mrb[0].mxu0
    %v1274 = vadd.f32 %v1233, %v1273
    %v1275 = vpop.f32.mrb[0].mxu0
    %v1276 = vpop.f32.mrb[0].mxu0
    %1277 = vdwg.mxu0
    %1278 = vmatprep.subr.bf16.mxu0 %v821
    %1279 = vmatpush1.bf16.msra.mxu0 %v820
    %1280 = vmatprep.subr.bf16.mxu0 %v829
    %1281 = vmatpush1.bf16.msra.mxu0 %v828
    %1282 = vmatprep.subr.bf16.mxu0 %v837
    %1283 = vmatpush1.bf16.msra.mxu0 %v836
    %1284 = vmatprep.subr.bf16.mxu0 %v845
    %1285 = vmatpush1.bf16.msra.mxu0 %v844
    %1286 = vmatprep.subr.bf16.mxu0 %v853
    %1287 = vmatpush1.bf16.msra.mxu0 %v852
    %1288 = vmatprep.subr.bf16.mxu0 %v861
    %1289 = vmatpush1.bf16.msra.mxu0 %v860
    %1290 = vmatprep.subr.bf16.mxu0 %v869
    %1291 = vmatpush1.bf16.msra.mxu0 %v868
    %1292 = vmatprep.subr.bf16.mxu0 %v877
    %1293 = vmatpush1.bf16.msra.mxu0 %v876
    %1294 = vmatprep.subr.bf16.mxu0 %v885
    %1295 = vmatpush1.bf16.msra.mxu0 %v884
    %1296 = vmatprep.subr.bf16.mxu0 %v893
    %1297 = vmatpush1.bf16.msra.mxu0 %v892
    %1298 = vmatprep.subr.bf16.mxu0 %v901
    %1299 = vmatpush1.bf16.msra.mxu0 %v900
    %1300 = vmatprep.subr.bf16.mxu0 %v909
    %1301 = vmatpush1.bf16.msra.mxu0 %v908
    %1302 = vmatprep.subr.bf16.mxu0 %v917
    %1303 = vmatpush1.bf16.msra.mxu0 %v916
    %1304 = vmatprep.subr.bf16.mxu0 %v925
    %1305 = vmatpush1.bf16.msra.mxu0 %v924
    %1306 = vmatprep.subr.bf16.mxu0 %v933
    %1307 = vmatpush1.bf16.msra.mxu0 %v932
    %1308 = vmatprep.subr.bf16.mxu0 %v941
    %1309 = vmatpush1.bf16.msra.mxu0 %v940
    %1310 = vmatprep.mubr.bf16.mxu0 %v813
    %1311 = vmatmul.mubr.bf16.gmra.mrb[0].mxu0 %v812
    %v1312 = vpop.f32.mrb[0].mxu0
    %v1313 = vadd.f32 %v1093, %v1312
    %v1314 = vpop.f32.mrb[0].mxu0
    %v1315 = vadd.f32 %v1097, %v1314
    %v1316 = vpop.f32.mrb[0].mxu0
    %v1317 = vpop.f32.mrb[0].mxu0
    %1318 = vdwg.mxu0
    %1319 = vmatprep.subr.bf16.mxu0 %v949
    %1320 = vmatpush1.bf16.msra.mxu0 %v948
    %1321 = vmatprep.subr.bf16.mxu0 %v957
    %1322 = vmatpush1.bf16.msra.mxu0 %v956
    %1323 = vmatprep.subr.bf16.mxu0 %v965
    %1324 = vmatpush1.bf16.msra.mxu0 %v964
    %1325 = vmatprep.subr.bf16.mxu0 %v973
    %1326 = vmatpush1.bf16.msra.mxu0 %v972
    %1327 = vmatprep.subr.bf16.mxu0 %v981
    %1328 = vmatpush1.bf16.msra.mxu0 %v980
    %1329 = vmatprep.subr.bf16.mxu0 %v989
    %1330 = vmatpush1.bf16.msra.mxu0 %v988
    %1331 = vmatprep.subr.bf16.mxu0 %v997
    %1332 = vmatpush1.bf16.msra.mxu0 %v996
    %1333 = vmatprep.subr.bf16.mxu0 %v1005
    %1334 = vmatpush1.bf16.msra.mxu0 %v1004
    %1335 = vmatprep.subr.bf16.mxu0 %v1013
    %1336 = vmatpush1.bf16.msra.mxu0 %v1012
    %1337 = vmatprep.subr.bf16.mxu0 %v1021
    %1338 = vmatpush1.bf16.msra.mxu0 %v1020
    %1339 = vmatprep.subr.bf16.mxu0 %v1029
    %1340 = vmatpush1.bf16.msra.mxu0 %v1028
    %1341 = vmatprep.subr.bf16.mxu0 %v1037
    %1342 = vmatpush1.bf16.msra.mxu0 %v1036
    %1343 = vmatprep.subr.bf16.mxu0 %v1045
    %1344 = vmatpush1.bf16.msra.mxu0 %v1044
    %1345 = vmatprep.subr.bf16.mxu0 %v1053
    %1346 = vmatpush1.bf16.msra.mxu0 %v1052
    %1347 = vmatprep.subr.bf16.mxu0 %v1061
    %1348 = vmatpush1.bf16.msra.mxu0 %v1060
    %1349 = vmatprep.subr.bf16.mxu0 %v1069
    %1350 = vmatpush1.bf16.msra.mxu0 %v1068
    %1351 = vmatprep.mubr.bf16.mxu0 %v815
    %1352 = vmatmul.mubr.bf16.gmra.mrb[0].mxu0 %v814
    %v1353 = vpop.f32.mrb[0].mxu0
    %v1354 = vadd.f32 %v1313, %v1353
    %v1355 = vpop.f32.mrb[0].mxu0
    %v1356 = vadd.f32 %v1315, %v1355
    %v1357 = vpop.f32.mrb[0].mxu0
    %v1358 = vpop.f32.mrb[0].mxu0
    %1359 = vdwg.mxu0
    %1360 = vmatprep.subr.bf16.mxu0 %v823
    %1361 = vmatpush1.bf16.msra.mxu0 %v822
    %1362 = vmatprep.subr.bf16.mxu0 %v831
    %1363 = vmatpush1.bf16.msra.mxu0 %v830
    %1364 = vmatprep.subr.bf16.mxu0 %v839
    %1365 = vmatpush1.bf16.msra.mxu0 %v838
    %1366 = vmatprep.subr.bf16.mxu0 %v847
    %1367 = vmatpush1.bf16.msra.mxu0 %v846
    %1368 = vmatprep.subr.bf16.mxu0 %v855
    %1369 = vmatpush1.bf16.msra.mxu0 %v854
    %1370 = vmatprep.subr.bf16.mxu0 %v863
    %1371 = vmatpush1.bf16.msra.mxu0 %v862
    %1372 = vmatprep.subr.bf16.mxu0 %v871
    %1373 = vmatpush1.bf16.msra.mxu0 %v870
    %1374 = vmatprep.subr.bf16.mxu0 %v879
    %1375 = vmatpush1.bf16.msra.mxu0 %v878
    %1376 = vmatprep.subr.bf16.mxu0 %v887
    %1377 = vmatpush1.bf16.msra.mxu0 %v886
    %1378 = vmatprep.subr.bf16.mxu0 %v895
    %1379 = vmatpush1.bf16.msra.mxu0 %v894
    %1380 = vmatprep.subr.bf16.mxu0 %v903
    %1381 = vmatpush1.bf16.msra.mxu0 %v902
    %1382 = vmatprep.subr.bf16.mxu0 %v911
    %1383 = vmatpush1.bf16.msra.mxu0 %v910
    %1384 = vmatprep.subr.bf16.mxu0 %v919
    %1385 = vmatpush1.bf16.msra.mxu0 %v918
    %1386 = vmatprep.subr.bf16.mxu0 %v927
    %1387 = vmatpush1.bf16.msra.mxu0 %v926
    %1388 = vmatprep.subr.bf16.mxu0 %v935
    %1389 = vmatpush1.bf16.msra.mxu0 %v934
    %1390 = vmatprep.subr.bf16.mxu0 %v943
    %1391 = vmatpush1.bf16.msra.mxu0 %v942
    %1392 = vmatprep.mubr.bf16.mxu0 %v813
    %1393 = vmatmul.mubr.bf16.gmra.mrb[0].mxu0 %v812
    %v1394 = vpop.f32.mrb[0].mxu0
    %v1395 = vadd.f32 %v1101, %v1394
    %v1396 = vpop.f32.mrb[0].mxu0
    %v1397 = vadd.f32 %v1105, %v1396
    %v1398 = vpop.f32.mrb[0].mxu0
    %v1399 = vpop.f32.mrb[0].mxu0
    %1400 = vdwg.mxu0
    %1401 = vmatprep.subr.bf16.mxu0 %v951
    %1402 = vmatpush1.bf16.msra.mxu0 %v950
    %1403 = vmatprep.subr.bf16.mxu0 %v959
    %1404 = vmatpush1.bf16.msra.mxu0 %v958
    %1405 = vmatprep.subr.bf16.mxu0 %v967
    %1406 = vmatpush1.bf16.msra.mxu0 %v966
    %1407 = vmatprep.subr.bf16.mxu0 %v975
    %1408 = vmatpush1.bf16.msra.mxu0 %v974
    %1409 = vmatprep.subr.bf16.mxu0 %v983
    %1410 = vmatpush1.bf16.msra.mxu0 %v982
    %1411 = vmatprep.subr.bf16.mxu0 %v991
    %1412 = vmatpush1.bf16.msra.mxu0 %v990
    %1413 = vmatprep.subr.bf16.mxu0 %v999
    %1414 = vmatpush1.bf16.msra.mxu0 %v998
    %1415 = vmatprep.subr.bf16.mxu0 %v1007
    %1416 = vmatpush1.bf16.msra.mxu0 %v1006
    %1417 = vmatprep.subr.bf16.mxu0 %v1015
    %1418 = vmatpush1.bf16.msra.mxu0 %v1014
    %1419 = vmatprep.subr.bf16.mxu0 %v1023
    %1420 = vmatpush1.bf16.msra.mxu0 %v1022
    %1421 = vmatprep.subr.bf16.mxu0 %v1031
    %1422 = vmatpush1.bf16.msra.mxu0 %v1030
    %1423 = vmatprep.subr.bf16.mxu0 %v1039
    %1424 = vmatpush1.bf16.msra.mxu0 %v1038
    %1425 = vmatprep.subr.bf16.mxu0 %v1047
    %1426 = vmatpush1.bf16.msra.mxu0 %v1046
    %1427 = vmatprep.subr.bf16.mxu0 %v1055
    %1428 = vmatpush1.bf16.msra.mxu0 %v1054
    %1429 = vmatprep.subr.bf16.mxu0 %v1063
    %1430 = vmatpush1.bf16.msra.mxu0 %v1062
    %1431 = vmatprep.subr.bf16.mxu0 %v1071
    %1432 = vmatpush1.bf16.msra.mxu0 %v1070
    %1433 = vmatprep.mubr.bf16.mxu0 %v815
    %1434 = vmatmul.mubr.bf16.gmra.mrb[0].mxu0 %v814
    %v1435 = vpop.f32.mrb[0].mxu0
    %v1436 = vadd.f32 %v1395, %v1435
    %v1437 = vpop.f32.mrb[0].mxu0
    %v1438 = vadd.f32 %v1397, %v1437
    %v1439 = vpop.f32.mrb[0].mxu0
    %v1440 = vpop.f32.mrb[0].mxu0
    %1441 = vdwg.mxu0
    %v1442 = vld [vmem:[#allocation8 + $0x1b] sm:$0xff]
    %v1443 = vld [vmem:[#allocation8 + $0x23] sm:$0xff]
    %v1444 = vrot.slane %v1190, 4
    %v1445 = vadd.f32 %v1190, %v1444
    %v1446 = vrot.slane %v1445, 2
    %v1447 = vadd.f32 %v1445, %v1446
    %v1448 = vrot.slane %v1447, 1
    %v1449 = vadd.f32 %v1447, %v1448
    %v1450 = vrot.slane %v1192, 4
    %v1451 = vadd.f32 %v1192, %v1450
    %v1452 = vrot.slane %v1451, 2
    %v1453 = vadd.f32 %v1451, %v1452
    %v1454 = vrot.slane %v1453, 1
    %v1455 = vadd.f32 %v1453, %v1454
    %v1456 = vrot.slane %v1272, 4
    %v1457 = vadd.f32 %v1272, %v1456
    %v1458 = vrot.slane %v1457, 2
    %v1459 = vadd.f32 %v1457, %v1458
    %v1460 = vrot.slane %v1459, 1
    %v1461 = vadd.f32 %v1459, %v1460
    %v1462 = vrot.slane %v1274, 4
    %v1463 = vadd.f32 %v1274, %v1462
    %v1464 = vrot.slane %v1463, 2
    %v1465 = vadd.f32 %v1463, %v1464
    %v1466 = vrot.slane %v1465, 1
    %v1467 = vadd.f32 %v1465, %v1466
    %v1468 = vrot.slane %v1354, 4
    %v1469 = vadd.f32 %v1354, %v1468
    %v1470 = vrot.slane %v1469, 2
    %v1471 = vadd.f32 %v1469, %v1470
    %v1472 = vrot.slane %v1471, 1
    %v1473 = vadd.f32 %v1471, %v1472
    %v1474 = vrot.slane %v1356, 4
    %v1475 = vadd.f32 %v1356, %v1474
    %v1476 = vrot.slane %v1475, 2
    %v1477 = vadd.f32 %v1475, %v1476
    %v1478 = vrot.slane %v1477, 1
    %v1479 = vadd.f32 %v1477, %v1478
    %v1480 = vrot.slane %v1436, 4
    %v1481 = vadd.f32 %v1436, %v1480
    %v1482 = vrot.slane %v1481, 2
    %v1483 = vadd.f32 %v1481, %v1482
    %v1484 = vrot.slane %v1483, 1
    %v1485 = vadd.f32 %v1483, %v1484
    %v1486 = vrot.slane %v1438, 4
    %v1487 = vadd.f32 %v1438, %v1486
    %v1488 = vrot.slane %v1487, 2
    %v1489 = vadd.f32 %v1487, %v1488
    %v1490 = vrot.slane %v1489, 1
    %v1491 = vadd.f32 %v1489, %v1490
    %v1492 = vmul.f32 %v1449, %v331
    %v1493 = vmul.f32 %v1455, %v331
    %v1494 = vmul.f32 %v1461, %v331
    %v1495 = vmul.f32 %v1467, %v331
    %v1496 = vmul.f32 %v1473, %v331
    %v1497 = vmul.f32 %v1479, %v331
    %v1498 = vmul.f32 %v1485, %v331
    %v1499 = vmul.f32 %v1491, %v331
    %v1500 = vmul.f32 %v1190, %v1190
    %v1501 = vmul.f32 %v1192, %v1192
    %v1502 = vmul.f32 %v1272, %v1272
    %v1503 = vmul.f32 %v1274, %v1274
    %v1504 = vmul.f32 %v1354, %v1354
    %v1505 = vmul.f32 %v1356, %v1356
    %v1506 = vmul.f32 %v1436, %v1436
    %v1507 = vmul.f32 %v1438, %v1438
    %v1508 = vrot.slane %v1500, 4
    %v1509 = vadd.f32 %v1500, %v1508
    %v1510 = vrot.slane %v1509, 2
    %v1511 = vadd.f32 %v1509, %v1510
    %v1512 = vrot.slane %v1511, 1
    %v1513 = vadd.f32 %v1511, %v1512
    %v1514 = vrot.slane %v1501, 4
    %v1515 = vadd.f32 %v1501, %v1514
    %v1516 = vrot.slane %v1515, 2
    %v1517 = vadd.f32 %v1515, %v1516
    %v1518 = vrot.slane %v1517, 1
    %v1519 = vadd.f32 %v1517, %v1518
    %v1520 = vrot.slane %v1502, 4
    %v1521 = vadd.f32 %v1502, %v1520
    %v1522 = vrot.slane %v1521, 2
    %v1523 = vadd.f32 %v1521, %v1522
    %v1524 = vrot.slane %v1523, 1
    %v1525 = vadd.f32 %v1523, %v1524
    %v1526 = vrot.slane %v1503, 4
    %v1527 = vadd.f32 %v1503, %v1526
    %v1528 = vrot.slane %v1527, 2
    %v1529 = vadd.f32 %v1527, %v1528
    %v1530 = vrot.slane %v1529, 1
    %v1531 = vadd.f32 %v1529, %v1530
    %v1532 = vrot.slane %v1504, 4
    %v1533 = vadd.f32 %v1504, %v1532
    %v1534 = vrot.slane %v1533, 2
    %v1535 = vadd.f32 %v1533, %v1534
    %v1536 = vrot.slane %v1535, 1
    %v1537 = vadd.f32 %v1535, %v1536
    %v1538 = vrot.slane %v1505, 4
    %v1539 = vadd.f32 %v1505, %v1538
    %v1540 = vrot.slane %v1539, 2
    %v1541 = vadd.f32 %v1539, %v1540
    %v1542 = vrot.slane %v1541, 1
    %v1543 = vadd.f32 %v1541, %v1542
    %v1544 = vrot.slane %v1506, 4
    %v1545 = vadd.f32 %v1506, %v1544
    %v1546 = vrot.slane %v1545, 2
    %v1547 = vadd.f32 %v1545, %v1546
    %v1548 = vrot.slane %v1547, 1
    %v1549 = vadd.f32 %v1547, %v1548
    %v1550 = vrot.slane %v1507, 4
    %v1551 = vadd.f32 %v1507, %v1550
    %v1552 = vrot.slane %v1551, 2
    %v1553 = vadd.f32 %v1551, %v1552
    %v1554 = vrot.slane %v1553, 1
    %v1555 = vadd.f32 %v1553, %v1554
    %v1556 = vmul.f32 %v1513, %v331
    %v1557 = vmul.f32 %v1519, %v331
    %v1558 = vmul.f32 %v1525, %v331
    %v1559 = vmul.f32 %v1531, %v331
    %v1560 = vmul.f32 %v1537, %v331
    %v1561 = vmul.f32 %v1543, %v331
    %v1562 = vmul.f32 %v1549, %v331
    %v1563 = vmul.f32 %v1555, %v331
    %v1564 = vmul.f32 %v1492, %v1492
    %v1565 = vmul.f32 %v1493, %v1493
    %v1566 = vmul.f32 %v1494, %v1494
    %v1567 = vmul.f32 %v1495, %v1495
    %v1568 = vmul.f32 %v1496, %v1496
    %v1569 = vmul.f32 %v1497, %v1497
    %v1570 = vmul.f32 %v1498, %v1498
    %v1571 = vmul.f32 %v1499, %v1499
    %v1572 = vsub.f32 %v1556, %v1564
    %v1573 = vsub.f32 %v1557, %v1565
    %v1574 = vsub.f32 %v1558, %v1566
    %v1575 = vsub.f32 %v1559, %v1567
    %v1576 = vsub.f32 %v1560, %v1568
    %v1577 = vsub.f32 %v1561, %v1569
    %v1578 = vsub.f32 %v1562, %v1570
    %v1579 = vsub.f32 %v1563, %v1571
    %v1580 = vadd.f32 %v1572, 0.8
    %v1581 = vadd.f32 %v1573, 0.8
    %v1582 = vadd.f32 %v1574, 0.8
    %v1583 = vadd.f32 %v1575, 0.8
    %v1584 = vadd.f32 %v1576, 0.8
    %v1585 = vadd.f32 %v1577, 0.8
    %v1586 = vadd.f32 %v1578, 0.8
    %v1587 = vadd.f32 %v1579, 0.8
    %v1588 = vrsqrt.pop %v1580
    %v1589 = vrsqrt.pop %v1581
    %v1590 = vrsqrt.pop %v1582
    %v1591 = vrsqrt.pop %v1583
    %v1592 = vrsqrt.pop %v1584
    %v1593 = vrsqrt.pop %v1585
    %v1594 = vrsqrt.pop %v1586
    %v1595 = vrsqrt.pop %v1587
    %v1604 = vcombine.low %v1588, %v1589
    %v1605 = vcombine.low %v1590, %v1591
    %v1606 = vcombine.low %v1592, %v1593
    %v1607 = vcombine.low %v1594, %v1595
    %v1609 = vunpack.c.l.s4 1966171168
    %v1610 = vunpack.c.0.s8 %v1609
    %v1611 = vlaneseq
    %v1612 = vshrl.u32 %v1611, 7
    %v1613 = vsub.s32 %v1610, %v1612
    %v1614 = vrot.slane %v1604, %v1613
    %v1616 = vunpack.c.l.s4 1966171168
    %v1617 = vunpack.c.0.s8 %v1616
    %v1618 = vlaneseq
    %v1619 = vshrl.u32 %v1618, 7
    %v1620 = vsub.s32 %v1617, %v1619
    %v1621 = vrot.slane %v1605, %v1620
    %v1623 = vunpack.c.l.s4 1966171168
    %v1624 = vunpack.c.0.s8 %v1623
    %v1625 = vlaneseq
    %v1626 = vshrl.u32 %v1625, 7
    %v1627 = vsub.s32 %v1624, %v1626
    %v1628 = vrot.slane %v1606, %v1627
    %v1630 = vunpack.c.l.s4 1966171168
    %v1631 = vunpack.c.0.s8 %v1630
    %v1632 = vlaneseq
    %v1633 = vshrl.u32 %v1632, 7
    %v1634 = vsub.s32 %v1631, %v1633
    %v1635 = vrot.slane %v1607, %v1634
    %v1636 = vcombine.low %v1614, %v1621
    %v1637 = vcombine.low %v1628, %v1635
    %v1639 = vunpack.c.l.s4 1966171168
    %v1640 = vunpack.c.0.s8 %v1639
    %v1641 = vlaneseq
    %v1642 = vshrl.u32 %v1641, 7
    %v1643 = vsub.s32 %v1640, %v1642
    %v1644 = vrot.slane %v1636, %v1643
    %v1646 = vunpack.c.l.s4 1966171168
    %v1647 = vunpack.c.0.s8 %v1646
    %v1648 = vlaneseq
    %v1649 = vshrl.u32 %v1648, 7
    %v1650 = vsub.s32 %v1647, %v1649
    %v1651 = vrot.slane %v1637, %v1650
    %v1652 = vcombine.low %v1644, %v1651
    %v1654 = vmul.f32 %v1442, %v1652
    %v1656 = vlaneseq
    %v1657 = vshrl.u32 %v1656, 7
    %v1658 = vsub.s32 0, %v1657
    %v1659 = vrot.slane %v1654, %v1658
    %v1660 = vlaneseq
    %v1661 = vshrl.u32 %v1660, 7
    %v1662 = vsub.s32 1, %v1661
    %v1663 = vrot.slane %v1654, %v1662
    %v1664 = vlaneseq
    %v1665 = vshrl.u32 %v1664, 7
    %v1666 = vsub.s32 2, %v1665
    %v1667 = vrot.slane %v1654, %v1666
    %v1668 = vlaneseq
    %v1669 = vshrl.u32 %v1668, 7
    %v1670 = vsub.s32 3, %v1669
    %v1671 = vrot.slane %v1654, %v1670
    %v1672 = vlaneseq
    %v1673 = vshrl.u32 %v1672, 7
    %v1674 = vsub.s32 4, %v1673
    %v1675 = vrot.slane %v1654, %v1674
    %v1676 = vlaneseq
    %v1677 = vshrl.u32 %v1676, 7
    %v1678 = vsub.s32 5, %v1677
    %v1679 = vrot.slane %v1654, %v1678
    %v1680 = vlaneseq
    %v1681 = vshrl.u32 %v1680, 7
    %v1682 = vsub.s32 6, %v1681
    %v1683 = vrot.slane %v1654, %v1682
    %v1684 = vlaneseq
    %v1685 = vshrl.u32 %v1684, 7
    %v1686 = vsub.s32 7, %v1685
    %v1687 = vrot.slane %v1654, %v1686
    %v1696 = vmul.f32 %v1492, %v1659
    %v1697 = vmul.f32 %v1493, %v1663
    %v1698 = vmul.f32 %v1494, %v1667
    %v1699 = vmul.f32 %v1495, %v1671
    %v1700 = vmul.f32 %v1496, %v1675
    %v1701 = vmul.f32 %v1497, %v1679
    %v1702 = vmul.f32 %v1498, %v1683
    %v1703 = vmul.f32 %v1499, %v1687
    %v1712 = vcombine.low %v1696, %v1697
    %v1713 = vcombine.low %v1698, %v1699
    %v1714 = vcombine.low %v1700, %v1701
    %v1715 = vcombine.low %v1702, %v1703
    %v1717 = vunpack.c.l.s4 1966171168
    %v1718 = vunpack.c.0.s8 %v1717
    %v1719 = vlaneseq
    %v1720 = vshrl.u32 %v1719, 7
    %v1721 = vsub.s32 %v1718, %v1720
    %v1722 = vrot.slane %v1712, %v1721
    %v1724 = vunpack.c.l.s4 1966171168
    %v1725 = vunpack.c.0.s8 %v1724
    %v1726 = vlaneseq
    %v1727 = vshrl.u32 %v1726, 7
    %v1728 = vsub.s32 %v1725, %v1727
    %v1729 = vrot.slane %v1713, %v1728
    %v1731 = vunpack.c.l.s4 1966171168
    %v1732 = vunpack.c.0.s8 %v1731
    %v1733 = vlaneseq
    %v1734 = vshrl.u32 %v1733, 7
    %v1735 = vsub.s32 %v1732, %v1734
    %v1736 = vrot.slane %v1714, %v1735
    %v1738 = vunpack.c.l.s4 1966171168
    %v1739 = vunpack.c.0.s8 %v1738
    %v1740 = vlaneseq
    %v1741 = vshrl.u32 %v1740, 7
    %v1742 = vsub.s32 %v1739, %v1741
    %v1743 = vrot.slane %v1715, %v1742
    %v1744 = vcombine.low %v1722, %v1729
    %v1745 = vcombine.low %v1736, %v1743
    %v1747 = vunpack.c.l.s4 1966171168
    %v1748 = vunpack.c.0.s8 %v1747
    %v1749 = vlaneseq
    %v1750 = vshrl.u32 %v1749, 7
    %v1751 = vsub.s32 %v1748, %v1750
    %v1752 = vrot.slane %v1744, %v1751
    %v1754 = vunpack.c.l.s4 1966171168
    %v1755 = vunpack.c.0.s8 %v1754
    %v1756 = vlaneseq
    %v1757 = vshrl.u32 %v1756, 7
    %v1758 = vsub.s32 %v1755, %v1757
    %v1759 = vrot.slane %v1745, %v1758
    %v1760 = vcombine.low %v1752, %v1759
    %v1762 = vsub.f32 %v1443, %v1760
    %v1763 = vmul.f32 %v1190, %v1659
    %v1764 = vmul.f32 %v1192, %v1663
    %v1765 = vmul.f32 %v1272, %v1667
    %v1766 = vmul.f32 %v1274, %v1671
    %v1767 = vmul.f32 %v1354, %v1675
    %v1768 = vmul.f32 %v1356, %v1679
    %v1769 = vmul.f32 %v1436, %v1683
    %v1770 = vmul.f32 %v1438, %v1687
    %v1772 = vlaneseq
    %v1773 = vshrl.u32 %v1772, 7
    %v1774 = vsub.s32 0, %v1773
    %v1775 = vrot.slane %v1762, %v1774
    %v1776 = vlaneseq
    %v1777 = vshrl.u32 %v1776, 7
    %v1778 = vsub.s32 1, %v1777
    %v1779 = vrot.slane %v1762, %v1778
    %v1780 = vlaneseq
    %v1781 = vshrl.u32 %v1780, 7
    %v1782 = vsub.s32 2, %v1781
    %v1783 = vrot.slane %v1762, %v1782
    %v1784 = vlaneseq
    %v1785 = vshrl.u32 %v1784, 7
    %v1786 = vsub.s32 3, %v1785
    %v1787 = vrot.slane %v1762, %v1786
    %v1788 = vlaneseq
    %v1789 = vshrl.u32 %v1788, 7
    %v1790 = vsub.s32 4, %v1789
    %v1791 = vrot.slane %v1762, %v1790
    %v1792 = vlaneseq
    %v1793 = vshrl.u32 %v1792, 7
    %v1794 = vsub.s32 5, %v1793
    %v1795 = vrot.slane %v1762, %v1794
    %v1796 = vlaneseq
    %v1797 = vshrl.u32 %v1796, 7
    %v1798 = vsub.s32 6, %v1797
    %v1799 = vrot.slane %v1762, %v1798
    %v1800 = vlaneseq
    %v1801 = vshrl.u32 %v1800, 7
    %v1802 = vsub.s32 7, %v1801
    %v1803 = vrot.slane %v1762, %v1802
    %v1812 = vadd.f32 %v1763, %v1775
    %v1813 = vadd.f32 %v1764, %v1779
    %v1814 = vadd.f32 %v1765, %v1783
    %v1815 = vadd.f32 %v1766, %v1787
    %v1816 = vadd.f32 %v1767, %v1791
    %v1817 = vadd.f32 %v1768, %v1795
    %v1818 = vadd.f32 %v1769, %v1799
    %v1819 = vadd.f32 %v1770, %v1803
    %vm1820 = vcmp.gt.f32.partialorder %v1812, 0.0
    %vm1821 = vcmp.gt.f32.partialorder %v1813, 0.0
    %vm1822 = vcmp.gt.f32.partialorder %v1814, 0.0
    %vm1823 = vcmp.gt.f32.partialorder %v1815, 0.0
    %vm1824 = vcmp.gt.f32.partialorder %v1816, 0.0
    %vm1825 = vcmp.gt.f32.partialorder %v1817, 0.0
    %vm1826 = vcmp.gt.f32.partialorder %v1818, 0.0
    %vm1827 = vcmp.gt.f32.partialorder %v1819, 0.0
    %v1828 = vmul.f32 %v1812, 0.2
    %v1829 = vmul.f32 %v1813, 0.2
    %v1830 = vmul.f32 %v1814, 0.2
    %v1831 = vmul.f32 %v1815, 0.2
    %v1832 = vmul.f32 %v1816, 0.2
    %v1833 = vmul.f32 %v1817, 0.2
    %v1834 = vmul.f32 %v1818, 0.2
    %v1835 = vmul.f32 %v1819, 0.2
    %v1836 = vsel %vm1820, %v1812, %v1828
    %v1837 = vsel %vm1821, %v1813, %v1829
    %v1838 = vsel %vm1822, %v1814, %v1830
    %v1839 = vsel %vm1823, %v1815, %v1831
    %v1840 = vsel %vm1824, %v1816, %v1832
    %v1841 = vsel %vm1825, %v1817, %v1833
    %v1842 = vsel %vm1826, %v1818, %v1834
    %v1843 = vsel %vm1827, %v1819, %v1835
    %s1844 = smul.u32 4, 128
    %s1845 = smul.u32 %s1844, 7
    %s1846 = sshll.u32 %s1845, 4
    %1847 = dma.done %s146, %s1846
    %v1848 = vpack.c.bf16 %v1836, %v1836
    %v1849 = vpack.c.bf16 %v1837, %v1837
    %v1850 = vpack.c.bf16 %v1838, %v1838
    %v1851 = vpack.c.bf16 %v1839, %v1839
    %v1852 = vpack.c.bf16 %v1840, %v1840
    %v1853 = vpack.c.bf16 %v1841, %v1841
    %v1854 = vpack.c.bf16 %v1842, %v1842
    %v1855 = vpack.c.bf16 %v1843, %v1843
    %v1856 = vld [vmem:[#allocation6] sm:$0xff]
    %v1857 = vld [vmem:[#allocation6 + $0x8] sm:$0xff]
    %v1858 = vld [vmem:[#allocation6 + $0x10] sm:$0xff]
    %v1859 = vld [vmem:[#allocation6 + $0x18] sm:$0xff]
    %v1860 = vld [vmem:[#allocation6 + $0x20] sm:$0xff]
    %v1861 = vld [vmem:[#allocation6 + $0x28] sm:$0xff]
    %v1862 = vld [vmem:[#allocation6 + $0x30] sm:$0xff]
    %v1863 = vld [vmem:[#allocation6 + $0x38] sm:$0xff]
    %v1864 = vld [vmem:[#allocation6 + $0x40] sm:$0xff]
    %v1865 = vld [vmem:[#allocation6 + $0x48] sm:$0xff]
    %v1866 = vld [vmem:[#allocation6 + $0x50] sm:$0xff]
    %v1867 = vld [vmem:[#allocation6 + $0x58] sm:$0xff]
    %v1868 = vld [vmem:[#allocation6 + $0x60] sm:$0xff]
    %v1869 = vld [vmem:[#allocation6 + $0x68] sm:$0xff]
    %v1870 = vld [vmem:[#allocation6 + $0x70] sm:$0xff]
    %v1871 = vld [vmem:[#allocation6 + $0x78] sm:$0xff]
    %v1872 = vld [vmem:[#allocation6 + $0x80] sm:$0xff]
    %v1873 = vld [vmem:[#allocation6 + $0x88] sm:$0xff]
    %v1874 = vld [vmem:[#allocation6 + $0x90] sm:$0xff]
    %v1875 = vld [vmem:[#allocation6 + $0x98] sm:$0xff]
    %v1876 = vld [vmem:[#allocation6 + $0xa0] sm:$0xff]
    %v1877 = vld [vmem:[#allocation6 + $0xa8] sm:$0xff]
    %v1878 = vld [vmem:[#allocation6 + $0xb0] sm:$0xff]
    %v1879 = vld [vmem:[#allocation6 + $0xb8] sm:$0xff]
    %v1880 = vld [vmem:[#allocation6 + $0xc0] sm:$0xff]
    %v1881 = vld [vmem:[#allocation6 + $0xc8] sm:$0xff]
    %v1882 = vld [vmem:[#allocation6 + $0xd0] sm:$0xff]
    %v1883 = vld [vmem:[#allocation6 + $0xd8] sm:$0xff]
    %v1884 = vld [vmem:[#allocation6 + $0xe0] sm:$0xff]
    %v1885 = vld [vmem:[#allocation6 + $0xe8] sm:$0xff]
    %v1886 = vld [vmem:[#allocation6 + $0xf0] sm:$0xff]
    %v1887 = vld [vmem:[#allocation6 + $0xf8] sm:$0xff]
    %v1888 = vld [vmem:[#allocation6 + $0x100] sm:$0xff]
    %v1889 = vld [vmem:[#allocation6 + $0x108] sm:$0xff]
    %v1890 = vld [vmem:[#allocation6 + $0x110] sm:$0xff]
    %v1891 = vld [vmem:[#allocation6 + $0x118] sm:$0xff]
    %v1892 = vld [vmem:[#allocation6 + $0x120] sm:$0xff]
    %v1893 = vld [vmem:[#allocation6 + $0x128] sm:$0xff]
    %v1894 = vld [vmem:[#allocation6 + $0x130] sm:$0xff]
    %v1895 = vld [vmem:[#allocation6 + $0x138] sm:$0xff]
    %v1896 = vld [vmem:[#allocation6 + $0x140] sm:$0xff]
    %v1897 = vld [vmem:[#allocation6 + $0x148] sm:$0xff]
    %v1898 = vld [vmem:[#allocation6 + $0x150] sm:$0xff]
    %v1899 = vld [vmem:[#allocation6 + $0x158] sm:$0xff]
    %v1900 = vld [vmem:[#allocation6 + $0x160] sm:$0xff]
    %v1901 = vld [vmem:[#allocation6 + $0x168] sm:$0xff]
    %v1902 = vld [vmem:[#allocation6 + $0x170] sm:$0xff]
    %v1903 = vld [vmem:[#allocation6 + $0x178] sm:$0xff]
    %v1904 = vld [vmem:[#allocation6 + $0x180] sm:$0xff]
    %v1905 = vld [vmem:[#allocation6 + $0x188] sm:$0xff]
    %v1906 = vld [vmem:[#allocation6 + $0x190] sm:$0xff]
    %v1907 = vld [vmem:[#allocation6 + $0x198] sm:$0xff]
    %v1908 = vld [vmem:[#allocation6 + $0x1a0] sm:$0xff]
    %v1909 = vld [vmem:[#allocation6 + $0x1a8] sm:$0xff]
    %v1910 = vld [vmem:[#allocation6 + $0x1b0] sm:$0xff]
    %v1911 = vld [vmem:[#allocation6 + $0x1b8] sm:$0xff]
    %v1912 = vld [vmem:[#allocation6 + $0x1c0] sm:$0xff]
    %v1913 = vld [vmem:[#allocation6 + $0x1c8] sm:$0xff]
    %v1914 = vld [vmem:[#allocation6 + $0x1d0] sm:$0xff]
    %v1915 = vld [vmem:[#allocation6 + $0x1d8] sm:$0xff]
    %v1916 = vld [vmem:[#allocation6 + $0x1e0] sm:$0xff]
    %v1917 = vld [vmem:[#allocation6 + $0x1e8] sm:$0xff]
    %v1918 = vld [vmem:[#allocation6 + $0x1f0] sm:$0xff]
    %v1919 = vld [vmem:[#allocation6 + $0x1f8] sm:$0xff]
    %v1920 = vld [vmem:[#allocation6 + $0x200] sm:$0xff]
    %v1921 = vld [vmem:[#allocation6 + $0x208] sm:$0xff]
    %v1922 = vld [vmem:[#allocation6 + $0x210] sm:$0xff]
    %v1923 = vld [vmem:[#allocation6 + $0x218] sm:$0xff]
    %v1924 = vld [vmem:[#allocation6 + $0x220] sm:$0xff]
    %v1925 = vld [vmem:[#allocation6 + $0x228] sm:$0xff]
    %v1926 = vld [vmem:[#allocation6 + $0x230] sm:$0xff]
    %v1927 = vld [vmem:[#allocation6 + $0x238] sm:$0xff]
    %v1928 = vld [vmem:[#allocation6 + $0x240] sm:$0xff]
    %v1929 = vld [vmem:[#allocation6 + $0x248] sm:$0xff]
    %v1930 = vld [vmem:[#allocation6 + $0x250] sm:$0xff]
    %v1931 = vld [vmem:[#allocation6 + $0x258] sm:$0xff]
    %v1932 = vld [vmem:[#allocation6 + $0x260] sm:$0xff]
    %v1933 = vld [vmem:[#allocation6 + $0x268] sm:$0xff]
    %v1934 = vld [vmem:[#allocation6 + $0x270] sm:$0xff]
    %v1935 = vld [vmem:[#allocation6 + $0x278] sm:$0xff]
    %v1936 = vld [vmem:[#allocation6 + $0x280] sm:$0xff]
    %v1937 = vld [vmem:[#allocation6 + $0x288] sm:$0xff]
    %v1938 = vld [vmem:[#allocation6 + $0x290] sm:$0xff]
    %v1939 = vld [vmem:[#allocation6 + $0x298] sm:$0xff]
    %v1940 = vld [vmem:[#allocation6 + $0x2a0] sm:$0xff]
    %v1941 = vld [vmem:[#allocation6 + $0x2a8] sm:$0xff]
    %v1942 = vld [vmem:[#allocation6 + $0x2b0] sm:$0xff]
    %v1943 = vld [vmem:[#allocation6 + $0x2b8] sm:$0xff]
    %v1944 = vld [vmem:[#allocation6 + $0x2c0] sm:$0xff]
    %v1945 = vld [vmem:[#allocation6 + $0x2c8] sm:$0xff]
    %v1946 = vld [vmem:[#allocation6 + $0x2d0] sm:$0xff]
    %v1947 = vld [vmem:[#allocation6 + $0x2d8] sm:$0xff]
    %v1948 = vld [vmem:[#allocation6 + $0x2e0] sm:$0xff]
    %v1949 = vld [vmem:[#allocation6 + $0x2e8] sm:$0xff]
    %v1950 = vld [vmem:[#allocation6 + $0x2f0] sm:$0xff]
    %v1951 = vld [vmem:[#allocation6 + $0x2f8] sm:$0xff]
    %v1952 = vld [vmem:[#allocation6 + $0x300] sm:$0xff]
    %v1953 = vld [vmem:[#allocation6 + $0x308] sm:$0xff]
    %v1954 = vld [vmem:[#allocation6 + $0x310] sm:$0xff]
    %v1955 = vld [vmem:[#allocation6 + $0x318] sm:$0xff]
    %v1956 = vld [vmem:[#allocation6 + $0x320] sm:$0xff]
    %v1957 = vld [vmem:[#allocation6 + $0x328] sm:$0xff]
    %v1958 = vld [vmem:[#allocation6 + $0x330] sm:$0xff]
    %v1959 = vld [vmem:[#allocation6 + $0x338] sm:$0xff]
    %v1960 = vld [vmem:[#allocation6 + $0x340] sm:$0xff]
    %v1961 = vld [vmem:[#allocation6 + $0x348] sm:$0xff]
    %v1962 = vld [vmem:[#allocation6 + $0x350] sm:$0xff]
    %v1963 = vld [vmem:[#allocation6 + $0x358] sm:$0xff]
    %v1964 = vld [vmem:[#allocation6 + $0x360] sm:$0xff]
    %v1965 = vld [vmem:[#allocation6 + $0x368] sm:$0xff]
    %v1966 = vld [vmem:[#allocation6 + $0x370] sm:$0xff]
    %v1967 = vld [vmem:[#allocation6 + $0x378] sm:$0xff]
    %v1968 = vld [vmem:[#allocation6 + $0x380] sm:$0xff]
    %v1969 = vld [vmem:[#allocation6 + $0x388] sm:$0xff]
    %v1970 = vld [vmem:[#allocation6 + $0x390] sm:$0xff]
    %v1971 = vld [vmem:[#allocation6 + $0x398] sm:$0xff]
    %v1972 = vld [vmem:[#allocation6 + $0x3a0] sm:$0xff]
    %v1973 = vld [vmem:[#allocation6 + $0x3a8] sm:$0xff]
    %v1974 = vld [vmem:[#allocation6 + $0x3b0] sm:$0xff]
    %v1975 = vld [vmem:[#allocation6 + $0x3b8] sm:$0xff]
    %v1976 = vld [vmem:[#allocation6 + $0x3c0] sm:$0xff]
    %v1977 = vld [vmem:[#allocation6 + $0x3c8] sm:$0xff]
    %v1978 = vld [vmem:[#allocation6 + $0x3d0] sm:$0xff]
    %v1979 = vld [vmem:[#allocation6 + $0x3d8] sm:$0xff]
    %v1980 = vld [vmem:[#allocation6 + $0x3e0] sm:$0xff]
    %v1981 = vld [vmem:[#allocation6 + $0x3e8] sm:$0xff]
    %v1982 = vld [vmem:[#allocation6 + $0x3f0] sm:$0xff]
    %v1983 = vld [vmem:[#allocation6 + $0x3f8] sm:$0xff]
    %v1984 = vld [vmem:[#allocation6 + $0x400] sm:$0xff]
    %v1985 = vld [vmem:[#allocation6 + $0x408] sm:$0xff]
    %v1986 = vld [vmem:[#allocation6 + $0x410] sm:$0xff]
    %v1987 = vld [vmem:[#allocation6 + $0x418] sm:$0xff]
    %v1988 = vld [vmem:[#allocation6 + $0x420] sm:$0xff]
    %v1989 = vld [vmem:[#allocation6 + $0x428] sm:$0xff]
    %v1990 = vld [vmem:[#allocation6 + $0x430] sm:$0xff]
    %v1991 = vld [vmem:[#allocation6 + $0x438] sm:$0xff]
    %v1992 = vld [vmem:[#allocation6 + $0x440] sm:$0xff]
    %v1993 = vld [vmem:[#allocation6 + $0x448] sm:$0xff]
    %v1994 = vld [vmem:[#allocation6 + $0x450] sm:$0xff]
    %v1995 = vld [vmem:[#allocation6 + $0x458] sm:$0xff]
    %v1996 = vld [vmem:[#allocation6 + $0x460] sm:$0xff]
    %v1997 = vld [vmem:[#allocation6 + $0x468] sm:$0xff]
    %v1998 = vld [vmem:[#allocation6 + $0x470] sm:$0xff]
    %v1999 = vld [vmem:[#allocation6 + $0x478] sm:$0xff]
    %v2000 = vld [vmem:[#allocation6 + $0x480] sm:$0xff]
    %v2001 = vld [vmem:[#allocation6 + $0x488] sm:$0xff]
    %v2002 = vld [vmem:[#allocation6 + $0x490] sm:$0xff]
    %v2003 = vld [vmem:[#allocation6 + $0x498] sm:$0xff]
    %v2004 = vld [vmem:[#allocation6 + $0x4a0] sm:$0xff]
    %v2005 = vld [vmem:[#allocation6 + $0x4a8] sm:$0xff]
    %v2006 = vld [vmem:[#allocation6 + $0x4b0] sm:$0xff]
    %v2007 = vld [vmem:[#allocation6 + $0x4b8] sm:$0xff]
    %v2008 = vld [vmem:[#allocation6 + $0x4c0] sm:$0xff]
    %v2009 = vld [vmem:[#allocation6 + $0x4c8] sm:$0xff]
    %v2010 = vld [vmem:[#allocation6 + $0x4d0] sm:$0xff]
    %v2011 = vld [vmem:[#allocation6 + $0x4d8] sm:$0xff]
    %v2012 = vld [vmem:[#allocation6 + $0x4e0] sm:$0xff]
    %v2013 = vld [vmem:[#allocation6 + $0x4e8] sm:$0xff]
    %v2014 = vld [vmem:[#allocation6 + $0x4f0] sm:$0xff]
    %v2015 = vld [vmem:[#allocation6 + $0x4f8] sm:$0xff]
    %v2016 = vld [vmem:[#allocation6 + $0x500] sm:$0xff]
    %v2017 = vld [vmem:[#allocation6 + $0x508] sm:$0xff]
    %v2018 = vld [vmem:[#allocation6 + $0x510] sm:$0xff]
    %v2019 = vld [vmem:[#allocation6 + $0x518] sm:$0xff]
    %v2020 = vld [vmem:[#allocation6 + $0x520] sm:$0xff]
    %v2021 = vld [vmem:[#allocation6 + $0x528] sm:$0xff]
    %v2022 = vld [vmem:[#allocation6 + $0x530] sm:$0xff]
    %v2023 = vld [vmem:[#allocation6 + $0x538] sm:$0xff]
    %v2024 = vld [vmem:[#allocation6 + $0x540] sm:$0xff]
    %v2025 = vld [vmem:[#allocation6 + $0x548] sm:$0xff]
    %v2026 = vld [vmem:[#allocation6 + $0x550] sm:$0xff]
    %v2027 = vld [vmem:[#allocation6 + $0x558] sm:$0xff]
    %v2028 = vld [vmem:[#allocation6 + $0x560] sm:$0xff]
    %v2029 = vld [vmem:[#allocation6 + $0x568] sm:$0xff]
    %v2030 = vld [vmem:[#allocation6 + $0x570] sm:$0xff]
    %v2031 = vld [vmem:[#allocation6 + $0x578] sm:$0xff]
    %v2032 = vld [vmem:[#allocation6 + $0x580] sm:$0xff]
    %v2033 = vld [vmem:[#allocation6 + $0x588] sm:$0xff]
    %v2034 = vld [vmem:[#allocation6 + $0x590] sm:$0xff]
    %v2035 = vld [vmem:[#allocation6 + $0x598] sm:$0xff]
    %v2036 = vld [vmem:[#allocation6 + $0x5a0] sm:$0xff]
    %v2037 = vld [vmem:[#allocation6 + $0x5a8] sm:$0xff]
    %v2038 = vld [vmem:[#allocation6 + $0x5b0] sm:$0xff]
    %v2039 = vld [vmem:[#allocation6 + $0x5b8] sm:$0xff]
    %v2040 = vld [vmem:[#allocation6 + $0x5c0] sm:$0xff]
    %v2041 = vld [vmem:[#allocation6 + $0x5c8] sm:$0xff]
    %v2042 = vld [vmem:[#allocation6 + $0x5d0] sm:$0xff]
    %v2043 = vld [vmem:[#allocation6 + $0x5d8] sm:$0xff]
    %v2044 = vld [vmem:[#allocation6 + $0x5e0] sm:$0xff]
    %v2045 = vld [vmem:[#allocation6 + $0x5e8] sm:$0xff]
    %v2046 = vld [vmem:[#allocation6 + $0x5f0] sm:$0xff]
    %v2047 = vld [vmem:[#allocation6 + $0x5f8] sm:$0xff]
    %v2048 = vld [vmem:[#allocation6 + $0x600] sm:$0xff]
    %v2049 = vld [vmem:[#allocation6 + $0x608] sm:$0xff]
    %v2050 = vld [vmem:[#allocation6 + $0x610] sm:$0xff]
    %v2051 = vld [vmem:[#allocation6 + $0x618] sm:$0xff]
    %v2052 = vld [vmem:[#allocation6 + $0x620] sm:$0xff]
    %v2053 = vld [vmem:[#allocation6 + $0x628] sm:$0xff]
    %v2054 = vld [vmem:[#allocation6 + $0x630] sm:$0xff]
    %v2055 = vld [vmem:[#allocation6 + $0x638] sm:$0xff]
    %v2056 = vld [vmem:[#allocation6 + $0x640] sm:$0xff]
    %v2057 = vld [vmem:[#allocation6 + $0x648] sm:$0xff]
    %v2058 = vld [vmem:[#allocation6 + $0x650] sm:$0xff]
    %v2059 = vld [vmem:[#allocation6 + $0x658] sm:$0xff]
    %v2060 = vld [vmem:[#allocation6 + $0x660] sm:$0xff]
    %v2061 = vld [vmem:[#allocation6 + $0x668] sm:$0xff]
    %v2062 = vld [vmem:[#allocation6 + $0x670] sm:$0xff]
    %v2063 = vld [vmem:[#allocation6 + $0x678] sm:$0xff]
    %v2064 = vld [vmem:[#allocation6 + $0x680] sm:$0xff]
    %v2065 = vld [vmem:[#allocation6 + $0x688] sm:$0xff]
    %v2066 = vld [vmem:[#allocation6 + $0x690] sm:$0xff]
    %v2067 = vld [vmem:[#allocation6 + $0x698] sm:$0xff]
    %v2068 = vld [vmem:[#allocation6 + $0x6a0] sm:$0xff]
    %v2069 = vld [vmem:[#allocation6 + $0x6a8] sm:$0xff]
    %v2070 = vld [vmem:[#allocation6 + $0x6b0] sm:$0xff]
    %v2071 = vld [vmem:[#allocation6 + $0x6b8] sm:$0xff]
    %v2072 = vld [vmem:[#allocation6 + $0x6c0] sm:$0xff]
    %v2073 = vld [vmem:[#allocation6 + $0x6c8] sm:$0xff]
    %v2074 = vld [vmem:[#allocation6 + $0x6d0] sm:$0xff]
    %v2075 = vld [vmem:[#allocation6 + $0x6d8] sm:$0xff]
    %v2076 = vld [vmem:[#allocation6 + $0x6e0] sm:$0xff]
    %v2077 = vld [vmem:[#allocation6 + $0x6e8] sm:$0xff]
    %v2078 = vld [vmem:[#allocation6 + $0x6f0] sm:$0xff]
    %v2079 = vld [vmem:[#allocation6 + $0x6f8] sm:$0xff]
    %v2080 = vld [vmem:[#allocation6 + $0x700] sm:$0xff]
    %v2081 = vld [vmem:[#allocation6 + $0x708] sm:$0xff]
    %v2082 = vld [vmem:[#allocation6 + $0x710] sm:$0xff]
    %v2083 = vld [vmem:[#allocation6 + $0x718] sm:$0xff]
    %v2084 = vld [vmem:[#allocation6 + $0x720] sm:$0xff]
    %v2085 = vld [vmem:[#allocation6 + $0x728] sm:$0xff]
    %v2086 = vld [vmem:[#allocation6 + $0x730] sm:$0xff]
    %v2087 = vld [vmem:[#allocation6 + $0x738] sm:$0xff]
    %v2088 = vld [vmem:[#allocation6 + $0x740] sm:$0xff]
    %v2089 = vld [vmem:[#allocation6 + $0x748] sm:$0xff]
    %v2090 = vld [vmem:[#allocation6 + $0x750] sm:$0xff]
    %v2091 = vld [vmem:[#allocation6 + $0x758] sm:$0xff]
    %v2092 = vld [vmem:[#allocation6 + $0x760] sm:$0xff]
    %v2093 = vld [vmem:[#allocation6 + $0x768] sm:$0xff]
    %v2094 = vld [vmem:[#allocation6 + $0x770] sm:$0xff]
    %v2095 = vld [vmem:[#allocation6 + $0x778] sm:$0xff]
    %v2096 = vld [vmem:[#allocation6 + $0x780] sm:$0xff]
    %v2097 = vld [vmem:[#allocation6 + $0x788] sm:$0xff]
    %v2098 = vld [vmem:[#allocation6 + $0x790] sm:$0xff]
    %v2099 = vld [vmem:[#allocation6 + $0x798] sm:$0xff]
    %v2100 = vld [vmem:[#allocation6 + $0x7a0] sm:$0xff]
    %v2101 = vld [vmem:[#allocation6 + $0x7a8] sm:$0xff]
    %v2102 = vld [vmem:[#allocation6 + $0x7b0] sm:$0xff]
    %v2103 = vld [vmem:[#allocation6 + $0x7b8] sm:$0xff]
    %v2104 = vld [vmem:[#allocation6 + $0x7c0] sm:$0xff]
    %v2105 = vld [vmem:[#allocation6 + $0x7c8] sm:$0xff]
    %v2106 = vld [vmem:[#allocation6 + $0x7d0] sm:$0xff]
    %v2107 = vld [vmem:[#allocation6 + $0x7d8] sm:$0xff]
    %v2108 = vld [vmem:[#allocation6 + $0x7e0] sm:$0xff]
    %v2109 = vld [vmem:[#allocation6 + $0x7e8] sm:$0xff]
    %v2110 = vld [vmem:[#allocation6 + $0x7f0] sm:$0xff]
    %v2111 = vld [vmem:[#allocation6 + $0x7f8] sm:$0xff]
    %v2112 = vld [vmem:[#allocation6 + $0x800] sm:$0xff]
    %v2113 = vld [vmem:[#allocation6 + $0x808] sm:$0xff]
    %v2114 = vld [vmem:[#allocation6 + $0x810] sm:$0xff]
    %v2115 = vld [vmem:[#allocation6 + $0x818] sm:$0xff]
    %v2116 = vld [vmem:[#allocation6 + $0x820] sm:$0xff]
    %v2117 = vld [vmem:[#allocation6 + $0x828] sm:$0xff]
    %v2118 = vld [vmem:[#allocation6 + $0x830] sm:$0xff]
    %v2119 = vld [vmem:[#allocation6 + $0x838] sm:$0xff]
    %v2120 = vld [vmem:[#allocation6 + $0x840] sm:$0xff]
    %v2121 = vld [vmem:[#allocation6 + $0x848] sm:$0xff]
    %v2122 = vld [vmem:[#allocation6 + $0x850] sm:$0xff]
    %v2123 = vld [vmem:[#allocation6 + $0x858] sm:$0xff]
    %v2124 = vld [vmem:[#allocation6 + $0x860] sm:$0xff]
    %v2125 = vld [vmem:[#allocation6 + $0x868] sm:$0xff]
    %v2126 = vld [vmem:[#allocation6 + $0x870] sm:$0xff]
    %v2127 = vld [vmem:[#allocation6 + $0x878] sm:$0xff]
    %v2128 = vld [vmem:[#allocation6 + $0x880] sm:$0xff]
    %v2129 = vld [vmem:[#allocation6 + $0x888] sm:$0xff]
    %v2130 = vld [vmem:[#allocation6 + $0x890] sm:$0xff]
    %v2131 = vld [vmem:[#allocation6 + $0x898] sm:$0xff]
    %v2132 = vld [vmem:[#allocation6 + $0x8a0] sm:$0xff]
    %v2133 = vld [vmem:[#allocation6 + $0x8a8] sm:$0xff]
    %v2134 = vld [vmem:[#allocation6 + $0x8b0] sm:$0xff]
    %v2135 = vld [vmem:[#allocation6 + $0x8b8] sm:$0xff]
    %v2136 = vld [vmem:[#allocation6 + $0x8c0] sm:$0xff]
    %v2137 = vld [vmem:[#allocation6 + $0x8c8] sm:$0xff]
    %v2138 = vld [vmem:[#allocation6 + $0x8d0] sm:$0xff]
    %v2139 = vld [vmem:[#allocation6 + $0x8d8] sm:$0xff]
    %v2140 = vld [vmem:[#allocation6 + $0x8e0] sm:$0xff]
    %v2141 = vld [vmem:[#allocation6 + $0x8e8] sm:$0xff]
    %v2142 = vld [vmem:[#allocation6 + $0x8f0] sm:$0xff]
    %v2143 = vld [vmem:[#allocation6 + $0x8f8] sm:$0xff]
    %v2144 = vld [vmem:[#allocation6 + $0x900] sm:$0xff]
    %v2145 = vld [vmem:[#allocation6 + $0x908] sm:$0xff]
    %v2146 = vld [vmem:[#allocation6 + $0x910] sm:$0xff]
    %v2147 = vld [vmem:[#allocation6 + $0x918] sm:$0xff]
    %v2148 = vld [vmem:[#allocation6 + $0x920] sm:$0xff]
    %v2149 = vld [vmem:[#allocation6 + $0x928] sm:$0xff]
    %v2150 = vld [vmem:[#allocation6 + $0x930] sm:$0xff]
    %v2151 = vld [vmem:[#allocation6 + $0x938] sm:$0xff]
    %v2152 = vld [vmem:[#allocation6 + $0x940] sm:$0xff]
    %v2153 = vld [vmem:[#allocation6 + $0x948] sm:$0xff]
    %v2154 = vld [vmem:[#allocation6 + $0x950] sm:$0xff]
    %v2155 = vld [vmem:[#allocation6 + $0x958] sm:$0xff]
    %v2156 = vld [vmem:[#allocation6 + $0x960] sm:$0xff]
    %v2157 = vld [vmem:[#allocation6 + $0x968] sm:$0xff]
    %v2158 = vld [vmem:[#allocation6 + $0x970] sm:$0xff]
    %v2159 = vld [vmem:[#allocation6 + $0x978] sm:$0xff]
    %v2160 = vld [vmem:[#allocation6 + $0x980] sm:$0xff]
    %v2161 = vld [vmem:[#allocation6 + $0x988] sm:$0xff]
    %v2162 = vld [vmem:[#allocation6 + $0x990] sm:$0xff]
    %v2163 = vld [vmem:[#allocation6 + $0x998] sm:$0xff]
    %v2164 = vld [vmem:[#allocation6 + $0x9a0] sm:$0xff]
    %v2165 = vld [vmem:[#allocation6 + $0x9a8] sm:$0xff]
    %v2166 = vld [vmem:[#allocation6 + $0x9b0] sm:$0xff]
    %v2167 = vld [vmem:[#allocation6 + $0x9b8] sm:$0xff]
    %v2168 = vld [vmem:[#allocation6 + $0x9c0] sm:$0xff]
    %v2169 = vld [vmem:[#allocation6 + $0x9c8] sm:$0xff]
    %v2170 = vld [vmem:[#allocation6 + $0x9d0] sm:$0xff]
    %v2171 = vld [vmem:[#allocation6 + $0x9d8] sm:$0xff]
    %v2172 = vld [vmem:[#allocation6 + $0x9e0] sm:$0xff]
    %v2173 = vld [vmem:[#allocation6 + $0x9e8] sm:$0xff]
    %v2174 = vld [vmem:[#allocation6 + $0x9f0] sm:$0xff]
    %v2175 = vld [vmem:[#allocation6 + $0x9f8] sm:$0xff]
    %v2176 = vld [vmem:[#allocation6 + $0xa00] sm:$0xff]
    %v2177 = vld [vmem:[#allocation6 + $0xa08] sm:$0xff]
    %v2178 = vld [vmem:[#allocation6 + $0xa10] sm:$0xff]
    %v2179 = vld [vmem:[#allocation6 + $0xa18] sm:$0xff]
    %v2180 = vld [vmem:[#allocation6 + $0xa20] sm:$0xff]
    %v2181 = vld [vmem:[#allocation6 + $0xa28] sm:$0xff]
    %v2182 = vld [vmem:[#allocation6 + $0xa30] sm:$0xff]
    %v2183 = vld [vmem:[#allocation6 + $0xa38] sm:$0xff]
    %v2184 = vld [vmem:[#allocation6 + $0xa40] sm:$0xff]
    %v2185 = vld [vmem:[#allocation6 + $0xa48] sm:$0xff]
    %v2186 = vld [vmem:[#allocation6 + $0xa50] sm:$0xff]
    %v2187 = vld [vmem:[#allocation6 + $0xa58] sm:$0xff]
    %v2188 = vld [vmem:[#allocation6 + $0xa60] sm:$0xff]
    %v2189 = vld [vmem:[#allocation6 + $0xa68] sm:$0xff]
    %v2190 = vld [vmem:[#allocation6 + $0xa70] sm:$0xff]
    %v2191 = vld [vmem:[#allocation6 + $0xa78] sm:$0xff]
    %v2192 = vld [vmem:[#allocation6 + $0xa80] sm:$0xff]
    %v2193 = vld [vmem:[#allocation6 + $0xa88] sm:$0xff]
    %v2194 = vld [vmem:[#allocation6 + $0xa90] sm:$0xff]
    %v2195 = vld [vmem:[#allocation6 + $0xa98] sm:$0xff]
    %v2196 = vld [vmem:[#allocation6 + $0xaa0] sm:$0xff]
    %v2197 = vld [vmem:[#allocation6 + $0xaa8] sm:$0xff]
    %v2198 = vld [vmem:[#allocation6 + $0xab0] sm:$0xff]
    %v2199 = vld [vmem:[#allocation6 + $0xab8] sm:$0xff]
    %v2200 = vld [vmem:[#allocation6 + $0xac0] sm:$0xff]
    %v2201 = vld [vmem:[#allocation6 + $0xac8] sm:$0xff]
    %v2202 = vld [vmem:[#allocation6 + $0xad0] sm:$0xff]
    %v2203 = vld [vmem:[#allocation6 + $0xad8] sm:$0xff]
    %v2204 = vld [vmem:[#allocation6 + $0xae0] sm:$0xff]
    %v2205 = vld [vmem:[#allocation6 + $0xae8] sm:$0xff]
    %v2206 = vld [vmem:[#allocation6 + $0xaf0] sm:$0xff]
    %v2207 = vld [vmem:[#allocation6 + $0xaf8] sm:$0xff]
    %v2208 = vld [vmem:[#allocation6 + $0xb00] sm:$0xff]
    %v2209 = vld [vmem:[#allocation6 + $0xb08] sm:$0xff]
    %v2210 = vld [vmem:[#allocation6 + $0xb10] sm:$0xff]
    %v2211 = vld [vmem:[#allocation6 + $0xb18] sm:$0xff]
    %v2212 = vld [vmem:[#allocation6 + $0xb20] sm:$0xff]
    %v2213 = vld [vmem:[#allocation6 + $0xb28] sm:$0xff]
    %v2214 = vld [vmem:[#allocation6 + $0xb30] sm:$0xff]
    %v2215 = vld [vmem:[#allocation6 + $0xb38] sm:$0xff]
    %v2216 = vld [vmem:[#allocation6 + $0xb40] sm:$0xff]
    %v2217 = vld [vmem:[#allocation6 + $0xb48] sm:$0xff]
    %v2218 = vld [vmem:[#allocation6 + $0xb50] sm:$0xff]
    %v2219 = vld [vmem:[#allocation6 + $0xb58] sm:$0xff]
    %v2220 = vld [vmem:[#allocation6 + $0xb60] sm:$0xff]
    %v2221 = vld [vmem:[#allocation6 + $0xb68] sm:$0xff]
    %v2222 = vld [vmem:[#allocation6 + $0xb70] sm:$0xff]
    %v2223 = vld [vmem:[#allocation6 + $0xb78] sm:$0xff]
    %v2224 = vld [vmem:[#allocation6 + $0xb80] sm:$0xff]
    %v2225 = vld [vmem:[#allocation6 + $0xb88] sm:$0xff]
    %v2226 = vld [vmem:[#allocation6 + $0xb90] sm:$0xff]
    %v2227 = vld [vmem:[#allocation6 + $0xb98] sm:$0xff]
    %v2228 = vld [vmem:[#allocation6 + $0xba0] sm:$0xff]
    %v2229 = vld [vmem:[#allocation6 + $0xba8] sm:$0xff]
    %v2230 = vld [vmem:[#allocation6 + $0xbb0] sm:$0xff]
    %v2231 = vld [vmem:[#allocation6 + $0xbb8] sm:$0xff]
    %v2232 = vld [vmem:[#allocation6 + $0xbc0] sm:$0xff]
    %v2233 = vld [vmem:[#allocation6 + $0xbc8] sm:$0xff]
    %v2234 = vld [vmem:[#allocation6 + $0xbd0] sm:$0xff]
    %v2235 = vld [vmem:[#allocation6 + $0xbd8] sm:$0xff]
    %v2236 = vld [vmem:[#allocation6 + $0xbe0] sm:$0xff]
    %v2237 = vld [vmem:[#allocation6 + $0xbe8] sm:$0xff]
    %v2238 = vld [vmem:[#allocation6 + $0xbf0] sm:$0xff]
    %v2239 = vld [vmem:[#allocation6 + $0xbf8] sm:$0xff]
    %v2240 = vld [vmem:[#allocation6 + $0xc00] sm:$0xff]
    %v2241 = vld [vmem:[#allocation6 + $0xc08] sm:$0xff]
    %v2242 = vld [vmem:[#allocation6 + $0xc10] sm:$0xff]
    %v2243 = vld [vmem:[#allocation6 + $0xc18] sm:$0xff]
    %v2244 = vld [vmem:[#allocation6 + $0xc20] sm:$0xff]
    %v2245 = vld [vmem:[#allocation6 + $0xc28] sm:$0xff]
    %v2246 = vld [vmem:[#allocation6 + $0xc30] sm:$0xff]
    %v2247 = vld [vmem:[#allocation6 + $0xc38] sm:$0xff]
    %v2248 = vld [vmem:[#allocation6 + $0xc40] sm:$0xff]
    %v2249 = vld [vmem:[#allocation6 + $0xc48] sm:$0xff]
    %v2250 = vld [vmem:[#allocation6 + $0xc50] sm:$0xff]
    %v2251 = vld [vmem:[#allocation6 + $0xc58] sm:$0xff]
    %v2252 = vld [vmem:[#allocation6 + $0xc60] sm:$0xff]
    %v2253 = vld [vmem:[#allocation6 + $0xc68] sm:$0xff]
    %v2254 = vld [vmem:[#allocation6 + $0xc70] sm:$0xff]
    %v2255 = vld [vmem:[#allocation6 + $0xc78] sm:$0xff]
    %v2256 = vld [vmem:[#allocation6 + $0xc80] sm:$0xff]
    %v2257 = vld [vmem:[#allocation6 + $0xc88] sm:$0xff]
    %v2258 = vld [vmem:[#allocation6 + $0xc90] sm:$0xff]
    %v2259 = vld [vmem:[#allocation6 + $0xc98] sm:$0xff]
    %v2260 = vld [vmem:[#allocation6 + $0xca0] sm:$0xff]
    %v2261 = vld [vmem:[#allocation6 + $0xca8] sm:$0xff]
    %v2262 = vld [vmem:[#allocation6 + $0xcb0] sm:$0xff]
    %v2263 = vld [vmem:[#allocation6 + $0xcb8] sm:$0xff]
    %v2264 = vld [vmem:[#allocation6 + $0xcc0] sm:$0xff]
    %v2265 = vld [vmem:[#allocation6 + $0xcc8] sm:$0xff]
    %v2266 = vld [vmem:[#allocation6 + $0xcd0] sm:$0xff]
    %v2267 = vld [vmem:[#allocation6 + $0xcd8] sm:$0xff]
    %v2268 = vld [vmem:[#allocation6 + $0xce0] sm:$0xff]
    %v2269 = vld [vmem:[#allocation6 + $0xce8] sm:$0xff]
    %v2270 = vld [vmem:[#allocation6 + $0xcf0] sm:$0xff]
    %v2271 = vld [vmem:[#allocation6 + $0xcf8] sm:$0xff]
    %v2272 = vld [vmem:[#allocation6 + $0xd00] sm:$0xff]
    %v2273 = vld [vmem:[#allocation6 + $0xd08] sm:$0xff]
    %v2274 = vld [vmem:[#allocation6 + $0xd10] sm:$0xff]
    %v2275 = vld [vmem:[#allocation6 + $0xd18] sm:$0xff]
    %v2276 = vld [vmem:[#allocation6 + $0xd20] sm:$0xff]
    %v2277 = vld [vmem:[#allocation6 + $0xd28] sm:$0xff]
    %v2278 = vld [vmem:[#allocation6 + $0xd30] sm:$0xff]
    %v2279 = vld [vmem:[#allocation6 + $0xd38] sm:$0xff]
    %v2280 = vld [vmem:[#allocation6 + $0xd40] sm:$0xff]
    %v2281 = vld [vmem:[#allocation6 + $0xd48] sm:$0xff]
    %v2282 = vld [vmem:[#allocation6 + $0xd50] sm:$0xff]
    %v2283 = vld [vmem:[#allocation6 + $0xd58] sm:$0xff]
    %v2284 = vld [vmem:[#allocation6 + $0xd60] sm:$0xff]
    %v2285 = vld [vmem:[#allocation6 + $0xd68] sm:$0xff]
    %v2286 = vld [vmem:[#allocation6 + $0xd70] sm:$0xff]
    %v2287 = vld [vmem:[#allocation6 + $0xd78] sm:$0xff]
    %v2288 = vld [vmem:[#allocation6 + $0xd80] sm:$0xff]
    %v2289 = vld [vmem:[#allocation6 + $0xd88] sm:$0xff]
    %v2290 = vld [vmem:[#allocation6 + $0xd90] sm:$0xff]
    %v2291 = vld [vmem:[#allocation6 + $0xd98] sm:$0xff]
    %v2292 = vld [vmem:[#allocation6 + $0xda0] sm:$0xff]
    %v2293 = vld [vmem:[#allocation6 + $0xda8] sm:$0xff]
    %v2294 = vld [vmem:[#allocation6 + $0xdb0] sm:$0xff]
    %v2295 = vld [vmem:[#allocation6 + $0xdb8] sm:$0xff]
    %v2296 = vld [vmem:[#allocation6 + $0xdc0] sm:$0xff]
    %v2297 = vld [vmem:[#allocation6 + $0xdc8] sm:$0xff]
    %v2298 = vld [vmem:[#allocation6 + $0xdd0] sm:$0xff]
    %v2299 = vld [vmem:[#allocation6 + $0xdd8] sm:$0xff]
    %v2300 = vld [vmem:[#allocation6 + $0xde0] sm:$0xff]
    %v2301 = vld [vmem:[#allocation6 + $0xde8] sm:$0xff]
    %v2302 = vld [vmem:[#allocation6 + $0xdf0] sm:$0xff]
    %v2303 = vld [vmem:[#allocation6 + $0xdf8] sm:$0xff]
    %v2304 = vld [vmem:[#allocation8 + $0x2b] sm:$0xff]
    %v2306 = vlaneseq
    %v2307 = vshrl.u32 %v2306, 7
    %v2308 = vsub.s32 0, %v2307
    %v2309 = vrot.slane %v2304, %v2308
    %v2310 = vlaneseq
    %v2311 = vshrl.u32 %v2310, 7
    %v2312 = vsub.s32 1, %v2311
    %v2313 = vrot.slane %v2304, %v2312
    %v2314 = vlaneseq
    %v2315 = vshrl.u32 %v2314, 7
    %v2316 = vsub.s32 2, %v2315
    %v2317 = vrot.slane %v2304, %v2316
    %v2318 = vlaneseq
    %v2319 = vshrl.u32 %v2318, 7
    %v2320 = vsub.s32 3, %v2319
    %v2321 = vrot.slane %v2304, %v2320
    %v2322 = vlaneseq
    %v2323 = vshrl.u32 %v2322, 7
    %v2324 = vsub.s32 4, %v2323
    %v2325 = vrot.slane %v2304, %v2324
    %v2326 = vlaneseq
    %v2327 = vshrl.u32 %v2326, 7
    %v2328 = vsub.s32 5, %v2327
    %v2329 = vrot.slane %v2304, %v2328
    %v2330 = vlaneseq
    %v2331 = vshrl.u32 %v2330, 7
    %v2332 = vsub.s32 6, %v2331
    %v2333 = vrot.slane %v2304, %v2332
    %2341 = vmatprep.subr.bf16.mxu0 %v1857
    %2342 = vmatpush1.bf16.msra.mxu0 %v1856
    %2343 = vmatprep.subr.bf16.mxu0 %v1864
    %2344 = vmatpush1.bf16.msra.mxu0 %v1863
    %2345 = vmatprep.subr.bf16.mxu0 %v1871
    %2346 = vmatpush1.bf16.msra.mxu0 %v1870
    %2347 = vmatprep.subr.bf16.mxu0 %v1878
    %2348 = vmatpush1.bf16.msra.mxu0 %v1877
    %2349 = vmatprep.subr.bf16.mxu0 %v1885
    %2350 = vmatpush1.bf16.msra.mxu0 %v1884
    %2351 = vmatprep.subr.bf16.mxu0 %v1892
    %2352 = vmatpush1.bf16.msra.mxu0 %v1891
    %2353 = vmatprep.subr.bf16.mxu0 %v1899
    %2354 = vmatpush1.bf16.msra.mxu0 %v1898
    %2355 = vmatprep.subr.bf16.mxu0 %v1906
    %2356 = vmatpush1.bf16.msra.mxu0 %v1905
    %2357 = vmatprep.subr.bf16.mxu0 %v1913
    %2358 = vmatpush1.bf16.msra.mxu0 %v1912
    %2359 = vmatprep.subr.bf16.mxu0 %v1920
    %2360 = vmatpush1.bf16.msra.mxu0 %v1919
    %2361 = vmatprep.subr.bf16.mxu0 %v1927
    %2362 = vmatpush1.bf16.msra.mxu0 %v1926
    %2363 = vmatprep.subr.bf16.mxu0 %v1934
    %2364 = vmatpush1.bf16.msra.mxu0 %v1933
    %2365 = vmatprep.subr.bf16.mxu0 %v1941
    %2366 = vmatpush1.bf16.msra.mxu0 %v1940
    %2367 = vmatprep.subr.bf16.mxu0 %v1948
    %2368 = vmatpush1.bf16.msra.mxu0 %v1947
    %2369 = vmatprep.subr.bf16.mxu0 %v1955
    %2370 = vmatpush1.bf16.msra.mxu0 %v1954
    %2371 = vmatprep.subr.bf16.mxu0 %v1962
    %2372 = vmatpush1.bf16.msra.mxu0 %v1961
    %2373 = vmatprep.mubr.bf16.mxu0 %v1849
    %2374 = vmatmul.mubr.bf16.gmra.mrb[0].mxu0 %v1848
    %v2375 = vpop.f32.mrb[0].mxu0
    %v2376 = vadd.f32 %v2309, %v2375
    %v2377 = vpop.f32.mrb[0].mxu0
    %v2378 = vadd.f32 %v2313, %v2377
    %v2379 = vpop.f32.mrb[0].mxu0
    %v2380 = vpop.f32.mrb[0].mxu0
    %2381 = vdwg.mxu0
    %2382 = vmatprep.subr.bf16.mxu0 %v1969
    %2383 = vmatpush1.bf16.msra.mxu0 %v1968
    %2384 = vmatprep.subr.bf16.mxu0 %v1976
    %2385 = vmatpush1.bf16.msra.mxu0 %v1975
    %2386 = vmatprep.subr.bf16.mxu0 %v1983
    %2387 = vmatpush1.bf16.msra.mxu0 %v1982
    %2388 = vmatprep.subr.bf16.mxu0 %v1990
    %2389 = vmatpush1.bf16.msra.mxu0 %v1989
    %2390 = vmatprep.subr.bf16.mxu0 %v1997
    %2391 = vmatpush1.bf16.msra.mxu0 %v1996
    %2392 = vmatprep.subr.bf16.mxu0 %v2004
    %2393 = vmatpush1.bf16.msra.mxu0 %v2003
    %2394 = vmatprep.subr.bf16.mxu0 %v2011
    %2395 = vmatpush1.bf16.msra.mxu0 %v2010
    %2396 = vmatprep.subr.bf16.mxu0 %v2018
    %2397 = vmatpush1.bf16.msra.mxu0 %v2017
    %2398 = vmatprep.subr.bf16.mxu0 %v2025
    %2399 = vmatpush1.bf16.msra.mxu0 %v2024
    %2400 = vmatprep.subr.bf16.mxu0 %v2032
    %2401 = vmatpush1.bf16.msra.mxu0 %v2031
    %2402 = vmatprep.subr.bf16.mxu0 %v2039
    %2403 = vmatpush1.bf16.msra.mxu0 %v2038
    %2404 = vmatprep.subr.bf16.mxu0 %v2046
    %2405 = vmatpush1.bf16.msra.mxu0 %v2045
    %2406 = vmatprep.subr.bf16.mxu0 %v2053
    %2407 = vmatpush1.bf16.msra.mxu0 %v2052
    %2408 = vmatprep.subr.bf16.mxu0 %v2060
    %2409 = vmatpush1.bf16.msra.mxu0 %v2059
    %2410 = vmatprep.subr.bf16.mxu0 %v2067
    %2411 = vmatpush1.bf16.msra.mxu0 %v2066
    %2412 = vmatprep.subr.bf16.mxu0 %v2074
    %2413 = vmatpush1.bf16.msra.mxu0 %v2073
    %2414 = vmatprep.mubr.bf16.mxu0 %v1851
    %2415 = vmatmul.mubr.bf16.gmra.mrb[0].mxu0 %v1850
    %v2416 = vpop.f32.mrb[0].mxu0
    %v2417 = vadd.f32 %v2376, %v2416
    %v2418 = vpop.f32.mrb[0].mxu0
    %v2419 = vadd.f32 %v2378, %v2418
    %v2420 = vpop.f32.mrb[0].mxu0
    %v2421 = vpop.f32.mrb[0].mxu0
    %2422 = vdwg.mxu0
    %2423 = vmatprep.subr.bf16.mxu0 %v2081
    %2424 = vmatpush1.bf16.msra.mxu0 %v2080
    %2425 = vmatprep.subr.bf16.mxu0 %v2088
    %2426 = vmatpush1.bf16.msra.mxu0 %v2087
    %2427 = vmatprep.subr.bf16.mxu0 %v2095
    %2428 = vmatpush1.bf16.msra.mxu0 %v2094
    %2429 = vmatprep.subr.bf16.mxu0 %v2102
    %2430 = vmatpush1.bf16.msra.mxu0 %v2101
    %2431 = vmatprep.subr.bf16.mxu0 %v2109
    %2432 = vmatpush1.bf16.msra.mxu0 %v2108
    %2433 = vmatprep.subr.bf16.mxu0 %v2116
    %2434 = vmatpush1.bf16.msra.mxu0 %v2115
    %2435 = vmatprep.subr.bf16.mxu0 %v2123
    %2436 = vmatpush1.bf16.msra.mxu0 %v2122
    %2437 = vmatprep.subr.bf16.mxu0 %v2130
    %2438 = vmatpush1.bf16.msra.mxu0 %v2129
    %2439 = vmatprep.subr.bf16.mxu0 %v2137
    %2440 = vmatpush1.bf16.msra.mxu0 %v2136
    %2441 = vmatprep.subr.bf16.mxu0 %v2144
    %2442 = vmatpush1.bf16.msra.mxu0 %v2143
    %2443 = vmatprep.subr.bf16.mxu0 %v2151
    %2444 = vmatpush1.bf16.msra.mxu0 %v2150
    %2445 = vmatprep.subr.bf16.mxu0 %v2158
    %2446 = vmatpush1.bf16.msra.mxu0 %v2157
    %2447 = vmatprep.subr.bf16.mxu0 %v2165
    %2448 = vmatpush1.bf16.msra.mxu0 %v2164
    %2449 = vmatprep.subr.bf16.mxu0 %v2172
    %2450 = vmatpush1.bf16.msra.mxu0 %v2171
    %2451 = vmatprep.subr.bf16.mxu0 %v2179
    %2452 = vmatpush1.bf16.msra.mxu0 %v2178
    %2453 = vmatprep.subr.bf16.mxu0 %v2186
    %2454 = vmatpush1.bf16.msra.mxu0 %v2185
    %2455 = vmatprep.mubr.bf16.mxu0 %v1853
    %2456 = vmatmul.mubr.bf16.gmra.mrb[0].mxu0 %v1852
    %v2457 = vpop.f32.mrb[0].mxu0
    %v2458 = vadd.f32 %v2417, %v2457
    %v2459 = vpop.f32.mrb[0].mxu0
    %v2460 = vadd.f32 %v2419, %v2459
    %v2461 = vpop.f32.mrb[0].mxu0
    %v2462 = vpop.f32.mrb[0].mxu0
    %2463 = vdwg.mxu0
    %2464 = vmatprep.subr.bf16.mxu0 %v2193
    %2465 = vmatpush1.bf16.msra.mxu0 %v2192
    %2466 = vmatprep.subr.bf16.mxu0 %v2200
    %2467 = vmatpush1.bf16.msra.mxu0 %v2199
    %2468 = vmatprep.subr.bf16.mxu0 %v2207
    %2469 = vmatpush1.bf16.msra.mxu0 %v2206
    %2470 = vmatprep.subr.bf16.mxu0 %v2214
    %2471 = vmatpush1.bf16.msra.mxu0 %v2213
    %2472 = vmatprep.subr.bf16.mxu0 %v2221
    %2473 = vmatpush1.bf16.msra.mxu0 %v2220
    %2474 = vmatprep.subr.bf16.mxu0 %v2228
    %2475 = vmatpush1.bf16.msra.mxu0 %v2227
    %2476 = vmatprep.subr.bf16.mxu0 %v2235
    %2477 = vmatpush1.bf16.msra.mxu0 %v2234
    %2478 = vmatprep.subr.bf16.mxu0 %v2242
    %2479 = vmatpush1.bf16.msra.mxu0 %v2241
    %2480 = vmatprep.subr.bf16.mxu0 %v2249
    %2481 = vmatpush1.bf16.msra.mxu0 %v2248
    %2482 = vmatprep.subr.bf16.mxu0 %v2256
    %2483 = vmatpush1.bf16.msra.mxu0 %v2255
    %2484 = vmatprep.subr.bf16.mxu0 %v2263
    %2485 = vmatpush1.bf16.msra.mxu0 %v2262
    %2486 = vmatprep.subr.bf16.mxu0 %v2270
    %2487 = vmatpush1.bf16.msra.mxu0 %v2269
    %2488 = vmatprep.subr.bf16.mxu0 %v2277
    %2489 = vmatpush1.bf16.msra.mxu0 %v2276
    %2490 = vmatprep.subr.bf16.mxu0 %v2284
    %2491 = vmatpush1.bf16.msra.mxu0 %v2283
    %2492 = vmatprep.subr.bf16.mxu0 %v2291
    %2493 = vmatpush1.bf16.msra.mxu0 %v2290
    %2494 = vmatprep.subr.bf16.mxu0 %v2298
    %2495 = vmatpush1.bf16.msra.mxu0 %v2297
    %2496 = vmatprep.mubr.bf16.mxu0 %v1855
    %2497 = vmatmul.mubr.bf16.gmra.mrb[0].mxu0 %v1854
    %v2498 = vpop.f32.mrb[0].mxu0
    %v2499 = vadd.f32 %v2458, %v2498
    %v2500 = vpop.f32.mrb[0].mxu0
    %v2501 = vadd.f32 %v2460, %v2500
    %v2502 = vpop.f32.mrb[0].mxu0
    %v2503 = vpop.f32.mrb[0].mxu0
    %2504 = vdwg.mxu0
    %2505 = vmatprep.subr.bf16.mxu0 %v1859
    %2506 = vmatpush1.bf16.msra.mxu0 %v1858
    %2507 = vmatprep.subr.bf16.mxu0 %v1866
    %2508 = vmatpush1.bf16.msra.mxu0 %v1865
    %2509 = vmatprep.subr.bf16.mxu0 %v1873
    %2510 = vmatpush1.bf16.msra.mxu0 %v1872
    %2511 = vmatprep.subr.bf16.mxu0 %v1880
    %2512 = vmatpush1.bf16.msra.mxu0 %v1879
    %2513 = vmatprep.subr.bf16.mxu0 %v1887
    %2514 = vmatpush1.bf16.msra.mxu0 %v1886
    %2515 = vmatprep.subr.bf16.mxu0 %v1894
    %2516 = vmatpush1.bf16.msra.mxu0 %v1893
    %2517 = vmatprep.subr.bf16.mxu0 %v1901
    %2518 = vmatpush1.bf16.msra.mxu0 %v1900
    %2519 = vmatprep.subr.bf16.mxu0 %v1908
    %2520 = vmatpush1.bf16.msra.mxu0 %v1907
    %2521 = vmatprep.subr.bf16.mxu0 %v1915
    %2522 = vmatpush1.bf16.msra.mxu0 %v1914
    %2523 = vmatprep.subr.bf16.mxu0 %v1922
    %2524 = vmatpush1.bf16.msra.mxu0 %v1921
    %2525 = vmatprep.subr.bf16.mxu0 %v1929
    %2526 = vmatpush1.bf16.msra.mxu0 %v1928
    %2527 = vmatprep.subr.bf16.mxu0 %v1936
    %2528 = vmatpush1.bf16.msra.mxu0 %v1935
    %2529 = vmatprep.subr.bf16.mxu0 %v1943
    %2530 = vmatpush1.bf16.msra.mxu0 %v1942
    %2531 = vmatprep.subr.bf16.mxu0 %v1950
    %2532 = vmatpush1.bf16.msra.mxu0 %v1949
    %2533 = vmatprep.subr.bf16.mxu0 %v1957
    %2534 = vmatpush1.bf16.msra.mxu0 %v1956
    %2535 = vmatprep.subr.bf16.mxu0 %v1964
    %2536 = vmatpush1.bf16.msra.mxu0 %v1963
    %2537 = vmatprep.mubr.bf16.mxu0 %v1849
    %2538 = vmatmul.mubr.bf16.gmra.mrb[0].mxu0 %v1848
    %v2539 = vpop.f32.mrb[0].mxu0
    %v2540 = vadd.f32 %v2317, %v2539
    %v2541 = vpop.f32.mrb[0].mxu0
    %v2542 = vadd.f32 %v2321, %v2541
    %v2543 = vpop.f32.mrb[0].mxu0
    %v2544 = vpop.f32.mrb[0].mxu0
    %2545 = vdwg.mxu0
    %2546 = vmatprep.subr.bf16.mxu0 %v1971
    %2547 = vmatpush1.bf16.msra.mxu0 %v1970
    %2548 = vmatprep.subr.bf16.mxu0 %v1978
    %2549 = vmatpush1.bf16.msra.mxu0 %v1977
    %2550 = vmatprep.subr.bf16.mxu0 %v1985
    %2551 = vmatpush1.bf16.msra.mxu0 %v1984
    %2552 = vmatprep.subr.bf16.mxu0 %v1992
    %2553 = vmatpush1.bf16.msra.mxu0 %v1991
    %2554 = vmatprep.subr.bf16.mxu0 %v1999
    %2555 = vmatpush1.bf16.msra.mxu0 %v1998
    %2556 = vmatprep.subr.bf16.mxu0 %v2006
    %2557 = vmatpush1.bf16.msra.mxu0 %v2005
    %2558 = vmatprep.subr.bf16.mxu0 %v2013
    %2559 = vmatpush1.bf16.msra.mxu0 %v2012
    %2560 = vmatprep.subr.bf16.mxu0 %v2020
    %2561 = vmatpush1.bf16.msra.mxu0 %v2019
    %2562 = vmatprep.subr.bf16.mxu0 %v2027
    %2563 = vmatpush1.bf16.msra.mxu0 %v2026
    %2564 = vmatprep.subr.bf16.mxu0 %v2034
    %2565 = vmatpush1.bf16.msra.mxu0 %v2033
    %2566 = vmatprep.subr.bf16.mxu0 %v2041
    %2567 = vmatpush1.bf16.msra.mxu0 %v2040
    %2568 = vmatprep.subr.bf16.mxu0 %v2048
    %2569 = vmatpush1.bf16.msra.mxu0 %v2047
    %2570 = vmatprep.subr.bf16.mxu0 %v2055
    %2571 = vmatpush1.bf16.msra.mxu0 %v2054
    %2572 = vmatprep.subr.bf16.mxu0 %v2062
    %2573 = vmatpush1.bf16.msra.mxu0 %v2061
    %2574 = vmatprep.subr.bf16.mxu0 %v2069
    %2575 = vmatpush1.bf16.msra.mxu0 %v2068
    %2576 = vmatprep.subr.bf16.mxu0 %v2076
    %2577 = vmatpush1.bf16.msra.mxu0 %v2075
    %2578 = vmatprep.mubr.bf16.mxu0 %v1851
    %2579 = vmatmul.mubr.bf16.gmra.mrb[0].mxu0 %v1850
    %v2580 = vpop.f32.mrb[0].mxu0
    %v2581 = vadd.f32 %v2540, %v2580
    %v2582 = vpop.f32.mrb[0].mxu0
    %v2583 = vadd.f32 %v2542, %v2582
    %v2584 = vpop.f32.mrb[0].mxu0
    %v2585 = vpop.f32.mrb[0].mxu0
    %2586 = vdwg.mxu0
    %2587 = vmatprep.subr.bf16.mxu0 %v2083
    %2588 = vmatpush1.bf16.msra.mxu0 %v2082
    %2589 = vmatprep.subr.bf16.mxu0 %v2090
    %2590 = vmatpush1.bf16.msra.mxu0 %v2089
    %2591 = vmatprep.subr.bf16.mxu0 %v2097
    %2592 = vmatpush1.bf16.msra.mxu0 %v2096
    %2593 = vmatprep.subr.bf16.mxu0 %v2104
    %2594 = vmatpush1.bf16.msra.mxu0 %v2103
    %2595 = vmatprep.subr.bf16.mxu0 %v2111
    %2596 = vmatpush1.bf16.msra.mxu0 %v2110
    %2597 = vmatprep.subr.bf16.mxu0 %v2118
    %2598 = vmatpush1.bf16.msra.mxu0 %v2117
    %2599 = vmatprep.subr.bf16.mxu0 %v2125
    %2600 = vmatpush1.bf16.msra.mxu0 %v2124
    %2601 = vmatprep.subr.bf16.mxu0 %v2132
    %2602 = vmatpush1.bf16.msra.mxu0 %v2131
    %2603 = vmatprep.subr.bf16.mxu0 %v2139
    %2604 = vmatpush1.bf16.msra.mxu0 %v2138
    %2605 = vmatprep.subr.bf16.mxu0 %v2146
    %2606 = vmatpush1.bf16.msra.mxu0 %v2145
    %2607 = vmatprep.subr.bf16.mxu0 %v2153
    %2608 = vmatpush1.bf16.msra.mxu0 %v2152
    %2609 = vmatprep.subr.bf16.mxu0 %v2160
    %2610 = vmatpush1.bf16.msra.mxu0 %v2159
    %2611 = vmatprep.subr.bf16.mxu0 %v2167
    %2612 = vmatpush1.bf16.msra.mxu0 %v2166
    %2613 = vmatprep.subr.bf16.mxu0 %v2174
    %2614 = vmatpush1.bf16.msra.mxu0 %v2173
    %2615 = vmatprep.subr.bf16.mxu0 %v2181
    %2616 = vmatpush1.bf16.msra.mxu0 %v2180
    %2617 = vmatprep.subr.bf16.mxu0 %v2188
    %2618 = vmatpush1.bf16.msra.mxu0 %v2187
    %2619 = vmatprep.mubr.bf16.mxu0 %v1853
    %2620 = vmatmul.mubr.bf16.gmra.mrb[0].mxu0 %v1852
    %v2621 = vpop.f32.mrb[0].mxu0
    %v2622 = vadd.f32 %v2581, %v2621
    %v2623 = vpop.f32.mrb[0].mxu0
    %v2624 = vadd.f32 %v2583, %v2623
    %v2625 = vpop.f32.mrb[0].mxu0
    %v2626 = vpop.f32.mrb[0].mxu0
    %2627 = vdwg.mxu0
    %2628 = vmatprep.subr.bf16.mxu0 %v2195
    %2629 = vmatpush1.bf16.msra.mxu0 %v2194
    %2630 = vmatprep.subr.bf16.mxu0 %v2202
    %2631 = vmatpush1.bf16.msra.mxu0 %v2201
    %2632 = vmatprep.subr.bf16.mxu0 %v2209
    %2633 = vmatpush1.bf16.msra.mxu0 %v2208
    %2634 = vmatprep.subr.bf16.mxu0 %v2216
    %2635 = vmatpush1.bf16.msra.mxu0 %v2215
    %2636 = vmatprep.subr.bf16.mxu0 %v2223
    %2637 = vmatpush1.bf16.msra.mxu0 %v2222
    %2638 = vmatprep.subr.bf16.mxu0 %v2230
    %2639 = vmatpush1.bf16.msra.mxu0 %v2229
    %2640 = vmatprep.subr.bf16.mxu0 %v2237
    %2641 = vmatpush1.bf16.msra.mxu0 %v2236
    %2642 = vmatprep.subr.bf16.mxu0 %v2244
    %2643 = vmatpush1.bf16.msra.mxu0 %v2243
    %2644 = vmatprep.subr.bf16.mxu0 %v2251
    %2645 = vmatpush1.bf16.msra.mxu0 %v2250
    %2646 = vmatprep.subr.bf16.mxu0 %v2258
    %2647 = vmatpush1.bf16.msra.mxu0 %v2257
    %2648 = vmatprep.subr.bf16.mxu0 %v2265
    %2649 = vmatpush1.bf16.msra.mxu0 %v2264
    %2650 = vmatprep.subr.bf16.mxu0 %v2272
    %2651 = vmatpush1.bf16.msra.mxu0 %v2271
    %2652 = vmatprep.subr.bf16.mxu0 %v2279
    %2653 = vmatpush1.bf16.msra.mxu0 %v2278
    %2654 = vmatprep.subr.bf16.mxu0 %v2286
    %2655 = vmatpush1.bf16.msra.mxu0 %v2285
    %2656 = vmatprep.subr.bf16.mxu0 %v2293
    %2657 = vmatpush1.bf16.msra.mxu0 %v2292
    %2658 = vmatprep.subr.bf16.mxu0 %v2300
    %2659 = vmatpush1.bf16.msra.mxu0 %v2299
    %2660 = vmatprep.mubr.bf16.mxu0 %v1855
    %2661 = vmatmul.mubr.bf16.gmra.mrb[0].mxu0 %v1854
    %v2662 = vpop.f32.mrb[0].mxu0
    %v2663 = vadd.f32 %v2622, %v2662
    %v2664 = vpop.f32.mrb[0].mxu0
    %v2665 = vadd.f32 %v2624, %v2664
    %v2666 = vpop.f32.mrb[0].mxu0
    %v2667 = vpop.f32.mrb[0].mxu0
    %2668 = vdwg.mxu0
    %2669 = vmatprep.subr.bf16.mxu0 %v1861
    %2670 = vmatpush1.bf16.msra.mxu0 %v1860
    %2671 = vmatprep.subr.bf16.mxu0 %v1868
    %2672 = vmatpush1.bf16.msra.mxu0 %v1867
    %2673 = vmatprep.subr.bf16.mxu0 %v1875
    %2674 = vmatpush1.bf16.msra.mxu0 %v1874
    %2675 = vmatprep.subr.bf16.mxu0 %v1882
    %2676 = vmatpush1.bf16.msra.mxu0 %v1881
    %2677 = vmatprep.subr.bf16.mxu0 %v1889
    %2678 = vmatpush1.bf16.msra.mxu0 %v1888
    %2679 = vmatprep.subr.bf16.mxu0 %v1896
    %2680 = vmatpush1.bf16.msra.mxu0 %v1895
    %2681 = vmatprep.subr.bf16.mxu0 %v1903
    %2682 = vmatpush1.bf16.msra.mxu0 %v1902
    %2683 = vmatprep.subr.bf16.mxu0 %v1910
    %2684 = vmatpush1.bf16.msra.mxu0 %v1909
    %2685 = vmatprep.subr.bf16.mxu0 %v1917
    %2686 = vmatpush1.bf16.msra.mxu0 %v1916
    %2687 = vmatprep.subr.bf16.mxu0 %v1924
    %2688 = vmatpush1.bf16.msra.mxu0 %v1923
    %2689 = vmatprep.subr.bf16.mxu0 %v1931
    %2690 = vmatpush1.bf16.msra.mxu0 %v1930
    %2691 = vmatprep.subr.bf16.mxu0 %v1938
    %2692 = vmatpush1.bf16.msra.mxu0 %v1937
    %2693 = vmatprep.subr.bf16.mxu0 %v1945
    %2694 = vmatpush1.bf16.msra.mxu0 %v1944
    %2695 = vmatprep.subr.bf16.mxu0 %v1952
    %2696 = vmatpush1.bf16.msra.mxu0 %v1951
    %2697 = vmatprep.subr.bf16.mxu0 %v1959
    %2698 = vmatpush1.bf16.msra.mxu0 %v1958
    %2699 = vmatprep.subr.bf16.mxu0 %v1966
    %2700 = vmatpush1.bf16.msra.mxu0 %v1965
    %2701 = vmatprep.mubr.bf16.mxu0 %v1849
    %2702 = vmatmul.mubr.bf16.gmra.mrb[0].mxu0 %v1848
    %v2703 = vpop.f32.mrb[0].mxu0
    %v2704 = vadd.f32 %v2325, %v2703
    %v2705 = vpop.f32.mrb[0].mxu0
    %v2706 = vadd.f32 %v2329, %v2705
    %v2707 = vpop.f32.mrb[0].mxu0
    %v2708 = vpop.f32.mrb[0].mxu0
    %2709 = vdwg.mxu0
    %2710 = vmatprep.subr.bf16.mxu0 %v1973
    %2711 = vmatpush1.bf16.msra.mxu0 %v1972
    %2712 = vmatprep.subr.bf16.mxu0 %v1980
    %2713 = vmatpush1.bf16.msra.mxu0 %v1979
    %2714 = vmatprep.subr.bf16.mxu0 %v1987
    %2715 = vmatpush1.bf16.msra.mxu0 %v1986
    %2716 = vmatprep.subr.bf16.mxu0 %v1994
    %2717 = vmatpush1.bf16.msra.mxu0 %v1993
    %2718 = vmatprep.subr.bf16.mxu0 %v2001
    %2719 = vmatpush1.bf16.msra.mxu0 %v2000
    %2720 = vmatprep.subr.bf16.mxu0 %v2008
    %2721 = vmatpush1.bf16.msra.mxu0 %v2007
    %2722 = vmatprep.subr.bf16.mxu0 %v2015
    %2723 = vmatpush1.bf16.msra.mxu0 %v2014
    %2724 = vmatprep.subr.bf16.mxu0 %v2022
    %2725 = vmatpush1.bf16.msra.mxu0 %v2021
    %2726 = vmatprep.subr.bf16.mxu0 %v2029
    %2727 = vmatpush1.bf16.msra.mxu0 %v2028
    %2728 = vmatprep.subr.bf16.mxu0 %v2036
    %2729 = vmatpush1.bf16.msra.mxu0 %v2035
    %2730 = vmatprep.subr.bf16.mxu0 %v2043
    %2731 = vmatpush1.bf16.msra.mxu0 %v2042
    %2732 = vmatprep.subr.bf16.mxu0 %v2050
    %2733 = vmatpush1.bf16.msra.mxu0 %v2049
    %2734 = vmatprep.subr.bf16.mxu0 %v2057
    %2735 = vmatpush1.bf16.msra.mxu0 %v2056
    %2736 = vmatprep.subr.bf16.mxu0 %v2064
    %2737 = vmatpush1.bf16.msra.mxu0 %v2063
    %2738 = vmatprep.subr.bf16.mxu0 %v2071
    %2739 = vmatpush1.bf16.msra.mxu0 %v2070
    %2740 = vmatprep.subr.bf16.mxu0 %v2078
    %2741 = vmatpush1.bf16.msra.mxu0 %v2077
    %2742 = vmatprep.mubr.bf16.mxu0 %v1851
    %2743 = vmatmul.mubr.bf16.gmra.mrb[0].mxu0 %v1850
    %v2744 = vpop.f32.mrb[0].mxu0
    %v2745 = vadd.f32 %v2704, %v2744
    %v2746 = vpop.f32.mrb[0].mxu0
    %v2747 = vadd.f32 %v2706, %v2746
    %v2748 = vpop.f32.mrb[0].mxu0
    %v2749 = vpop.f32.mrb[0].mxu0
    %2750 = vdwg.mxu0
    %2751 = vmatprep.subr.bf16.mxu0 %v2085
    %2752 = vmatpush1.bf16.msra.mxu0 %v2084
    %2753 = vmatprep.subr.bf16.mxu0 %v2092
    %2754 = vmatpush1.bf16.msra.mxu0 %v2091
    %2755 = vmatprep.subr.bf16.mxu0 %v2099
    %2756 = vmatpush1.bf16.msra.mxu0 %v2098
    %2757 = vmatprep.subr.bf16.mxu0 %v2106
    %2758 = vmatpush1.bf16.msra.mxu0 %v2105
    %2759 = vmatprep.subr.bf16.mxu0 %v2113
    %2760 = vmatpush1.bf16.msra.mxu0 %v2112
    %2761 = vmatprep.subr.bf16.mxu0 %v2120
    %2762 = vmatpush1.bf16.msra.mxu0 %v2119
    %2763 = vmatprep.subr.bf16.mxu0 %v2127
    %2764 = vmatpush1.bf16.msra.mxu0 %v2126
    %2765 = vmatprep.subr.bf16.mxu0 %v2134
    %2766 = vmatpush1.bf16.msra.mxu0 %v2133
    %2767 = vmatprep.subr.bf16.mxu0 %v2141
    %2768 = vmatpush1.bf16.msra.mxu0 %v2140
    %2769 = vmatprep.subr.bf16.mxu0 %v2148
    %2770 = vmatpush1.bf16.msra.mxu0 %v2147
    %2771 = vmatprep.subr.bf16.mxu0 %v2155
    %2772 = vmatpush1.bf16.msra.mxu0 %v2154
    %2773 = vmatprep.subr.bf16.mxu0 %v2162
    %2774 = vmatpush1.bf16.msra.mxu0 %v2161
    %2775 = vmatprep.subr.bf16.mxu0 %v2169
    %2776 = vmatpush1.bf16.msra.mxu0 %v2168
    %2777 = vmatprep.subr.bf16.mxu0 %v2176
    %2778 = vmatpush1.bf16.msra.mxu0 %v2175
    %2779 = vmatprep.subr.bf16.mxu0 %v2183
    %2780 = vmatpush1.bf16.msra.mxu0 %v2182
    %2781 = vmatprep.subr.bf16.mxu0 %v2190
    %2782 = vmatpush1.bf16.msra.mxu0 %v2189
    %2783 = vmatprep.mubr.bf16.mxu0 %v1853
    %2784 = vmatmul.mubr.bf16.gmra.mrb[0].mxu0 %v1852
    %v2785 = vpop.f32.mrb[0].mxu0
    %v2786 = vadd.f32 %v2745, %v2785
    %v2787 = vpop.f32.mrb[0].mxu0
    %v2788 = vadd.f32 %v2747, %v2787
    %v2789 = vpop.f32.mrb[0].mxu0
    %v2790 = vpop.f32.mrb[0].mxu0
    %2791 = vdwg.mxu0
    %2792 = vmatprep.subr.bf16.mxu0 %v2197
    %2793 = vmatpush1.bf16.msra.mxu0 %v2196
    %2794 = vmatprep.subr.bf16.mxu0 %v2204
    %2795 = vmatpush1.bf16.msra.mxu0 %v2203
    %2796 = vmatprep.subr.bf16.mxu0 %v2211
    %2797 = vmatpush1.bf16.msra.mxu0 %v2210
    %2798 = vmatprep.subr.bf16.mxu0 %v2218
    %2799 = vmatpush1.bf16.msra.mxu0 %v2217
    %2800 = vmatprep.subr.bf16.mxu0 %v2225
    %2801 = vmatpush1.bf16.msra.mxu0 %v2224
    %2802 = vmatprep.subr.bf16.mxu0 %v2232
    %2803 = vmatpush1.bf16.msra.mxu0 %v2231
    %2804 = vmatprep.subr.bf16.mxu0 %v2239
    %2805 = vmatpush1.bf16.msra.mxu0 %v2238
    %2806 = vmatprep.subr.bf16.mxu0 %v2246
    %2807 = vmatpush1.bf16.msra.mxu0 %v2245
    %2808 = vmatprep.subr.bf16.mxu0 %v2253
    %2809 = vmatpush1.bf16.msra.mxu0 %v2252
    %2810 = vmatprep.subr.bf16.mxu0 %v2260
    %2811 = vmatpush1.bf16.msra.mxu0 %v2259
    %2812 = vmatprep.subr.bf16.mxu0 %v2267
    %2813 = vmatpush1.bf16.msra.mxu0 %v2266
    %2814 = vmatprep.subr.bf16.mxu0 %v2274
    %2815 = vmatpush1.bf16.msra.mxu0 %v2273
    %2816 = vmatprep.subr.bf16.mxu0 %v2281
    %2817 = vmatpush1.bf16.msra.mxu0 %v2280
    %2818 = vmatprep.subr.bf16.mxu0 %v2288
    %2819 = vmatpush1.bf16.msra.mxu0 %v2287
    %2820 = vmatprep.subr.bf16.mxu0 %v2295
    %2821 = vmatpush1.bf16.msra.mxu0 %v2294
    %2822 = vmatprep.subr.bf16.mxu0 %v2302
    %2823 = vmatpush1.bf16.msra.mxu0 %v2301
    %2824 = vmatprep.mubr.bf16.mxu0 %v1855
    %2825 = vmatmul.mubr.bf16.gmra.mrb[0].mxu0 %v1854
    %v2826 = vpop.f32.mrb[0].mxu0
    %v2827 = vadd.f32 %v2786, %v2826
    %v2828 = vpop.f32.mrb[0].mxu0
    %v2829 = vadd.f32 %v2788, %v2828
    %v2830 = vpop.f32.mrb[0].mxu0
    %v2831 = vpop.f32.mrb[0].mxu0
    %2832 = vdwg.mxu0
    %2833 = vmatprep.subr.bf16.mxu0 0
    %2834 = vmatpush1.bf16.msra.mxu0 %v1862
    %2835 = vmatprep.subr.bf16.mxu0 0
    %2836 = vmatpush1.bf16.msra.mxu0 %v1869
    %2837 = vmatprep.subr.bf16.mxu0 0
    %2838 = vmatpush1.bf16.msra.mxu0 %v1876
    %2839 = vmatprep.subr.bf16.mxu0 0
    %2840 = vmatpush1.bf16.msra.mxu0 %v1883
    %2841 = vmatprep.subr.bf16.mxu0 0
    %2842 = vmatpush1.bf16.msra.mxu0 %v1890
    %2843 = vmatprep.subr.bf16.mxu0 0
    %2844 = vmatpush1.bf16.msra.mxu0 %v1897
    %2845 = vmatprep.subr.bf16.mxu0 0
    %2846 = vmatpush1.bf16.msra.mxu0 %v1904
    %2847 = vmatprep.subr.bf16.mxu0 0
    %2848 = vmatpush1.bf16.msra.mxu0 %v1911
    %2849 = vmatprep.subr.bf16.mxu0 0
    %2850 = vmatpush1.bf16.msra.mxu0 %v1918
    %2851 = vmatprep.subr.bf16.mxu0 0
    %2852 = vmatpush1.bf16.msra.mxu0 %v1925
    %2853 = vmatprep.subr.bf16.mxu0 0
    %2854 = vmatpush1.bf16.msra.mxu0 %v1932
    %2855 = vmatprep.subr.bf16.mxu0 0
    %2856 = vmatpush1.bf16.msra.mxu0 %v1939
    %2857 = vmatprep.subr.bf16.mxu0 0
    %2858 = vmatpush1.bf16.msra.mxu0 %v1946
    %2859 = vmatprep.subr.bf16.mxu0 0
    %2860 = vmatpush1.bf16.msra.mxu0 %v1953
    %2861 = vmatprep.subr.bf16.mxu0 0
    %2862 = vmatpush1.bf16.msra.mxu0 %v1960
    %2863 = vmatprep.subr.bf16.mxu0 0
    %2864 = vmatpush1.bf16.msra.mxu0 %v1967
    %2865 = vmatprep.mubr.bf16.mxu0 %v1849
    %2866 = vmatmul.mubr.bf16.gmra.mrb[0].mxu0 %v1848
    %v2867 = vpop.f32.mrb[0].mxu0
    %v2868 = vadd.f32 %v2333, %v2867
    %v2869 = vpop.f32.mrb[0].mxu0
    %v2870 = vpop.f32.mrb[0].mxu0
    %v2871 = vpop.f32.mrb[0].mxu0
    %2872 = vdwg.mxu0
    %2873 = vmatprep.subr.bf16.mxu0 0
    %2874 = vmatpush1.bf16.msra.mxu0 %v1974
    %2875 = vmatprep.subr.bf16.mxu0 0
    %2876 = vmatpush1.bf16.msra.mxu0 %v1981
    %2877 = vmatprep.subr.bf16.mxu0 0
    %2878 = vmatpush1.bf16.msra.mxu0 %v1988
    %2879 = vmatprep.subr.bf16.mxu0 0
    %2880 = vmatpush1.bf16.msra.mxu0 %v1995
    %2881 = vmatprep.subr.bf16.mxu0 0
    %2882 = vmatpush1.bf16.msra.mxu0 %v2002
    %2883 = vmatprep.subr.bf16.mxu0 0
    %2884 = vmatpush1.bf16.msra.mxu0 %v2009
    %2885 = vmatprep.subr.bf16.mxu0 0
    %2886 = vmatpush1.bf16.msra.mxu0 %v2016
    %2887 = vmatprep.subr.bf16.mxu0 0
    %2888 = vmatpush1.bf16.msra.mxu0 %v2023
    %2889 = vmatprep.subr.bf16.mxu0 0
    %2890 = vmatpush1.bf16.msra.mxu0 %v2030
    %2891 = vmatprep.subr.bf16.mxu0 0
    %2892 = vmatpush1.bf16.msra.mxu0 %v2037
    %2893 = vmatprep.subr.bf16.mxu0 0
    %2894 = vmatpush1.bf16.msra.mxu0 %v2044
    %2895 = vmatprep.subr.bf16.mxu0 0
    %2896 = vmatpush1.bf16.msra.mxu0 %v2051
    %2897 = vmatprep.subr.bf16.mxu0 0
    %2898 = vmatpush1.bf16.msra.mxu0 %v2058
    %2899 = vmatprep.subr.bf16.mxu0 0
    %2900 = vmatpush1.bf16.msra.mxu0 %v2065
    %2901 = vmatprep.subr.bf16.mxu0 0
    %2902 = vmatpush1.bf16.msra.mxu0 %v2072
    %2903 = vmatprep.subr.bf16.mxu0 0
    %2904 = vmatpush1.bf16.msra.mxu0 %v2079
    %2905 = vmatprep.mubr.bf16.mxu0 %v1851
    %2906 = vmatmul.mubr.bf16.gmra.mrb[0].mxu0 %v1850
    %v2907 = vpop.f32.mrb[0].mxu0
    %v2908 = vadd.f32 %v2868, %v2907
    %v2909 = vpop.f32.mrb[0].mxu0
    %v2910 = vpop.f32.mrb[0].mxu0
    %v2911 = vpop.f32.mrb[0].mxu0
    %2912 = vdwg.mxu0
    %2913 = vmatprep.subr.bf16.mxu0 0
    %2914 = vmatpush1.bf16.msra.mxu0 %v2086
    %2915 = vmatprep.subr.bf16.mxu0 0
    %2916 = vmatpush1.bf16.msra.mxu0 %v2093
    %2917 = vmatprep.subr.bf16.mxu0 0
    %2918 = vmatpush1.bf16.msra.mxu0 %v2100
    %2919 = vmatprep.subr.bf16.mxu0 0
    %2920 = vmatpush1.bf16.msra.mxu0 %v2107
    %2921 = vmatprep.subr.bf16.mxu0 0
    %2922 = vmatpush1.bf16.msra.mxu0 %v2114
    %2923 = vmatprep.subr.bf16.mxu0 0
    %2924 = vmatpush1.bf16.msra.mxu0 %v2121
    %2925 = vmatprep.subr.bf16.mxu0 0
    %2926 = vmatpush1.bf16.msra.mxu0 %v2128
    %2927 = vmatprep.subr.bf16.mxu0 0
    %2928 = vmatpush1.bf16.msra.mxu0 %v2135
    %2929 = vmatprep.subr.bf16.mxu0 0
    %2930 = vmatpush1.bf16.msra.mxu0 %v2142
    %2931 = vmatprep.subr.bf16.mxu0 0
    %2932 = vmatpush1.bf16.msra.mxu0 %v2149
    %2933 = vmatprep.subr.bf16.mxu0 0
    %2934 = vmatpush1.bf16.msra.mxu0 %v2156
    %2935 = vmatprep.subr.bf16.mxu0 0
    %2936 = vmatpush1.bf16.msra.mxu0 %v2163
    %2937 = vmatprep.subr.bf16.mxu0 0
    %2938 = vmatpush1.bf16.msra.mxu0 %v2170
    %2939 = vmatprep.subr.bf16.mxu0 0
    %2940 = vmatpush1.bf16.msra.mxu0 %v2177
    %2941 = vmatprep.subr.bf16.mxu0 0
    %2942 = vmatpush1.bf16.msra.mxu0 %v2184
    %2943 = vmatprep.subr.bf16.mxu0 0
    %2944 = vmatpush1.bf16.msra.mxu0 %v2191
    %2945 = vmatprep.mubr.bf16.mxu0 %v1853
    %2946 = vmatmul.mubr.bf16.gmra.mrb[0].mxu0 %v1852
    %v2947 = vpop.f32.mrb[0].mxu0
    %v2948 = vadd.f32 %v2908, %v2947
    %v2949 = vpop.f32.mrb[0].mxu0
    %v2950 = vpop.f32.mrb[0].mxu0
    %v2951 = vpop.f32.mrb[0].mxu0
    %2952 = vdwg.mxu0
    %2953 = vmatprep.subr.bf16.mxu0 0
    %2954 = vmatpush1.bf16.msra.mxu0 %v2198
    %2955 = vmatprep.subr.bf16.mxu0 0
    %2956 = vmatpush1.bf16.msra.mxu0 %v2205
    %2957 = vmatprep.subr.bf16.mxu0 0
    %2958 = vmatpush1.bf16.msra.mxu0 %v2212
    %2959 = vmatprep.subr.bf16.mxu0 0
    %2960 = vmatpush1.bf16.msra.mxu0 %v2219
    %2961 = vmatprep.subr.bf16.mxu0 0
    %2962 = vmatpush1.bf16.msra.mxu0 %v2226
    %2963 = vmatprep.subr.bf16.mxu0 0
    %2964 = vmatpush1.bf16.msra.mxu0 %v2233
    %2965 = vmatprep.subr.bf16.mxu0 0
    %2966 = vmatpush1.bf16.msra.mxu0 %v2240
    %2967 = vmatprep.subr.bf16.mxu0 0
    %2968 = vmatpush1.bf16.msra.mxu0 %v2247
    %2969 = vmatprep.subr.bf16.mxu0 0
    %2970 = vmatpush1.bf16.msra.mxu0 %v2254
    %2971 = vmatprep.subr.bf16.mxu0 0
    %2972 = vmatpush1.bf16.msra.mxu0 %v2261
    %2973 = vmatprep.subr.bf16.mxu0 0
    %2974 = vmatpush1.bf16.msra.mxu0 %v2268
    %2975 = vmatprep.subr.bf16.mxu0 0
    %2976 = vmatpush1.bf16.msra.mxu0 %v2275
    %2977 = vmatprep.subr.bf16.mxu0 0
    %2978 = vmatpush1.bf16.msra.mxu0 %v2282
    %2979 = vmatprep.subr.bf16.mxu0 0
    %2980 = vmatpush1.bf16.msra.mxu0 %v2289
    %2981 = vmatprep.subr.bf16.mxu0 0
    %2982 = vmatpush1.bf16.msra.mxu0 %v2296
    %2983 = vmatprep.subr.bf16.mxu0 0
    %2984 = vmatpush1.bf16.msra.mxu0 %v2303
    %2985 = vmatprep.mubr.bf16.mxu0 %v1855
    %2986 = vmatmul.mubr.bf16.gmra.mrb[0].mxu0 %v1854
    %v2987 = vpop.f32.mrb[0].mxu0
    %v2988 = vadd.f32 %v2948, %v2987
    %v2989 = vpop.f32.mrb[0].mxu0
    %v2990 = vpop.f32.mrb[0].mxu0
    %v2991 = vpop.f32.mrb[0].mxu0
    %2992 = vdwg.mxu0
    %v2993 = vtanh.pop %v2499
    %v2994 = vtanh.pop %v2501
    %v2995 = vtanh.pop %v2663
    %v2996 = vtanh.pop %v2665
    %v2997 = vtanh.pop %v2827
    %v2998 = vtanh.pop %v2829
    %v2999 = vtanh.pop %v2988
    %3000 = vst [vmem:[%s7] sm:$0xff] %v2993
    %3001 = vst [vmem:[%s7 + $0x8] sm:$0xff] %v2994
    %3002 = vst [vmem:[%s7 + $0x10] sm:$0xff] %v2995
    %3003 = vst [vmem:[%s7 + $0x18] sm:$0xff] %v2996
    %3004 = vst [vmem:[%s7 + $0x20] sm:$0xff] %v2997
    %3005 = vst [vmem:[%s7 + $0x28] sm:$0xff] %v2998
    %vm3006 = vcmask 130048
    %3007 = vst.msk [vmem:[%s7 + $0x30] sm:$0xff] %vm3006, %v2999
    // Predicated region
    $region18: #{generator_forward.1} parent=1 // pred_check
      _
    $region19: #{generator_forward.1} parent=1 // pred_check_branch
      %3009 = sbr.rel (0) target = $region21
    $region20: #{generator_forward.1} parent=1 // pred_region
      _
    $region21: #{generator_forward.1} parent=1 // pred_fallthru
      _
    // Predicated region
    $region22: #{generator_forward.1} parent=1 // pred_check
      _
    $region23: #{generator_forward.1} parent=1 // pred_check_branch
      %3011 = sbr.rel (0) target = $region25
    $region24: #{generator_forward.1} parent=1 // pred_region
      _
    $region25: #{generator_forward.1} parent=1 // pred_fallthru
      _
    %3012 = vsyncpa [#allocation9], 1
  %3013 = vsyncmov [#allocation7]
  %s3014 = vpop.sfrf %3013
  %p3015 = scmp.eq.s32.totalorder %s3014, 0
  %p3016 = pneg %p3015
  %3018 = shalt.err (%p3016)
  %s3019 = scalar_lea.sflag [#allocation7], 1
  %3020 = vsyncmov %s3019
  %s3021 = vpop.sfrf %3020
  %p3022 = scmp.eq.s32.totalorder %s3021, 0
  %p3023 = pneg %p3022
  %3025 = shalt.err (%p3023)
  %s3026 = scalar_lea.sflag [#allocation7], 2
  %3027 = vsyncmov %s3026
  %s3028 = vpop.sfrf %3027
  %p3029 = scmp.eq.s32.totalorder %s3028, 0
  %p3030 = pneg %p3029
  %3032 = shalt.err (%p3030)
  %s3033 = scalar_lea.sflag [#allocation7], 3
  %3034 = vsyncmov %s3033
  %s3035 = vpop.sfrf %3034
  %p3036 = scmp.eq.s32.totalorder %s3035, 0
  %p3037 = pneg %p3036
  %3039 = shalt.err (%p3037)
  %s3040 = scalar_lea.sflag [#allocation7], 4
  %3041 = vsyncmov %s3040
  %s3042 = vpop.sfrf %3041
  %p3043 = scmp.eq.s32.totalorder %s3042, 0
  %p3044 = pneg %p3043
  %3046 = shalt.err (%p3044)

</llo_original>
